<compile_context>
chip_gen: v6e
topology: v6e:2x2x1
jax: 0.10.0
libtpu: 0.0.40
codegen_flags: <defaults>
</compile_context>

<pallas_src>
import functools

import jax
import jax.numpy as jnp
import numpy as np
from jax.experimental import pallas as pl
from jax.experimental.pallas import tpu as pltpu


# ---------------------------------------------------------------------------
# Fused kernel: one batch element per grid step.
# ---------------------------------------------------------------------------
def _se_bottleneck_kernel(
    x_ref, res_ref,
    w1_ref, s1_ref, b1_ref,
    w2_ref, s2_ref, b2_ref,
    w3_ref, s3_ref, b3_ref,
    sew1_ref, seb1_ref, sew2_ref, seb2_ref,
    *rest, H, W, stride, project_residual):
  if project_residual:
    wd_ref, sd_ref, bd_ref, o_ref, pad_ref = rest
  else:
    o_ref, pad_ref = rest

  Cmid = w1_ref.shape[-1]
  Ho = (H - 1) // stride + 1
  Wo = (W - 1) // stride + 1
  hw = Ho * Wo

  # --- conv1 (1x1) + bn1 + relu; result lands in a zero-padded VMEM plane ---
  y1 = jnp.dot(x_ref[...], w1_ref[...], preferred_element_type=jnp.float32)
  y1 = jnp.maximum(y1 * s1_ref[...] + b1_ref[...], 0.0)
  pad_ref[...] = jnp.zeros_like(pad_ref)
  pad_ref[1:H + 1, 1:W + 1, :] = y1.reshape(H, W, Cmid)

  # --- conv2 (3x3, pad=1, stride) + bn2 + relu: 9 shifted MXU matmuls, ---
  # --- no im2col HBM round trip.                                       ---
  acc = jnp.zeros((hw, Cmid), jnp.float32)
  for dh in range(3):
    for dw in range(3):
      if stride == 1:
        win = pad_ref[dh:dh + Ho, dw:dw + Wo, :]
      else:
        win = pad_ref[pl.ds(dh, Ho, stride), pl.ds(dw, Wo, stride), :]
      acc = acc + jnp.dot(win.reshape(hw, Cmid).astype(jnp.bfloat16),
                          w2_ref[dh * 3 + dw],
                          preferred_element_type=jnp.float32)
  y2 = jnp.maximum(acc * s2_ref[...] + b2_ref[...], 0.0)

  # --- conv3 (1x1) + bn3 (fused; conv3 output never leaves VMEM) ---
  y3 = jnp.dot(y2.astype(jnp.bfloat16), w3_ref[...],
               preferred_element_type=jnp.float32)
  y3 = y3 * s3_ref[...] + b3_ref[...]

  # --- SE: global average pool as a ones-matmul on the MXU, then the two ---
  # --- tiny FCs (f32 accumulation, f32 epilogue).                        ---
  pooled = jnp.dot(jnp.full((1, hw), 1.0 / hw, jnp.float32), y3,
                   preferred_element_type=jnp.float32)
  h = jnp.dot(pooled.astype(jnp.bfloat16), sew1_ref[...],
              preferred_element_type=jnp.float32)
  h = jnp.maximum(h + seb1_ref[...], 0.0)
  g = jnp.dot(h.astype(jnp.bfloat16), sew2_ref[...],
              preferred_element_type=jnp.float32)
  g = jax.nn.sigmoid(g + seb2_ref[...])

  # --- residual branch (downsample 1x1 conv + bn fused in-kernel) ---
  if project_residual:
    r = jnp.dot(res_ref[...], wd_ref[...], preferred_element_type=jnp.float32)
    r = r * sd_ref[...] + bd_ref[...]
  else:
    r = res_ref[...].astype(jnp.float32)

  o_ref[...] = jnp.maximum(y3 * g + r, 0.0).astype(o_ref.dtype)


# ---------------------------------------------------------------------------
# Wrapper
# ---------------------------------------------------------------------------
def se_bottleneck_forward(x, p, stride=1):
  """x: (N, H, W, Cin) float32. Returns (N, Ho, Wo, out_planes) float32."""
  N, H, W, Cin = x.shape
  Cmid = p["w1"].shape[1]
  Cout = p["w3"].shape[1]
  Ho = (H - 1) // stride + 1
  Wo = (W - 1) // stride + 1
  project = (stride != 1) or (Cin != Cout)

  x_b = x.astype(jnp.bfloat16).reshape(N, H * W, Cin)
  if project:
    xs = x[:, ::stride, ::stride, :][:, :Ho, :Wo, :]
    res = xs.astype(jnp.bfloat16).reshape(N, Ho * Wo, Cin)
  else:
    res = x.astype(jnp.float32).reshape(N, H * W, Cout)

  row = lambda v: v.reshape(1, -1).astype(jnp.float32)
  bf = lambda v: v.astype(jnp.bfloat16)

  inputs = [
      x_b, res,
      bf(p["w1"]), row(p["bn1_scale"]), row(p["bn1_shift"]),
      bf(p["w2"]), row(p["bn2_scale"]), row(p["bn2_shift"]),
      bf(p["w3"]), row(p["bn3_scale"]), row(p["bn3_shift"]),
      bf(p["se_w1"]), row(p["se_b1"]), bf(p["se_w2"]), row(p["se_b2"]),
  ]
  if project:
    inputs += [bf(p["wd"]), row(p["bnd_scale"]), row(p["bnd_shift"])]

  def batch_spec(a):
    return pl.BlockSpec((pl.Squeezed(),) + a.shape[1:], lambda n: (n, 0, 0))

  def full_spec(a):
    nd = a.ndim
    return pl.BlockSpec(a.shape, lambda n, _nd=nd: (0,) * _nd)

  in_specs = [batch_spec(x_b), batch_spec(res)]
  in_specs += [full_spec(a) for a in inputs[2:]]

  kern = functools.partial(_se_bottleneck_kernel, H=H, W=W, stride=stride,
                           project_residual=project)
  out = pl.pallas_call(
      kern,
      out_shape=jax.ShapeDtypeStruct((N, Ho * Wo, Cout), jnp.float32),
      grid=(N,),
      in_specs=in_specs,
      out_specs=pl.BlockSpec((pl.Squeezed(), Ho * Wo, Cout),
                             lambda n: (n, 0, 0)),
      scratch_shapes=[pltpu.VMEM((H + 2, W + 2, Cmid), jnp.float32)],
      compiler_params=pltpu.CompilerParams(
          dimension_semantics=("parallel",)),
  )(*inputs)
  return out.reshape(N, Ho, Wo, Cout)


# ---------------------------------------------------------------------------
# Pure-JAX reference (same bf16 matmul-operand quantization, f32 accumulation)
# ---------------------------------------------------------------------------
def ref_forward(x, p, stride=1):
  dn = ("NHWC", "HWIO", "NHWC")
  bf = lambda t: t.astype(jnp.bfloat16)

  def conv1x1(inp, wmat, s):
    w = wmat.reshape(1, 1, *wmat.shape)
    return jax.lax.conv_general_dilated(
        bf(inp), bf(w), (s, s), "VALID", dimension_numbers=dn,
        preferred_element_type=jnp.float32)

  def conv3x3(inp, w_hwio, s):
    return jax.lax.conv_general_dilated(
        bf(inp), bf(w_hwio), (s, s), ((1, 1), (1, 1)), dimension_numbers=dn,
        preferred_element_type=jnp.float32)

  bn = lambda t, s, b: t * s + b
  out = jax.nn.relu(bn(conv1x1(x, p["w1"], 1), p["bn1_scale"], p["bn1_shift"]))
  out = jax.nn.relu(bn(conv3x3(out, p["w2_hwio"], stride),
                       p["bn2_scale"], p["bn2_shift"]))
  out = bn(conv1x1(out, p["w3"], 1), p["bn3_scale"], p["bn3_shift"])
  pooled = jnp.mean(out, axis=(1, 2), keepdims=True)
  h = jax.nn.relu(jnp.einsum("nijc,cr->nijr", bf(pooled), bf(p["se_w1"]),
                             preferred_element_type=jnp.float32) + p["se_b1"])
  g = jax.nn.sigmoid(jnp.einsum("nijr,rc->nijc", bf(h), bf(p["se_w2"]),
                                preferred_element_type=jnp.float32) + p["se_b2"])
  out = out * g
  if stride != 1 or x.shape[-1] != out.shape[-1]:
    res = bn(conv1x1(x, p["wd"], stride), p["bnd_scale"], p["bnd_shift"])
  else:
    res = x
  return jax.nn.relu(out + res)


# ---------------------------------------------------------------------------
# Parameter init (shapes per SEBottleneck.__init__, with_variation=False)
# ---------------------------------------------------------------------------
def fold_bn(gamma, beta, mean, var, eps=1e-5):
  scale = gamma / jnp.sqrt(var + eps)
  shift = beta - mean * scale
  return scale, shift


def init_params(key, inplanes, planes):
  out_planes = planes * 4                 # expansion = 4
  red = out_planes // 16                  # SEModule reduction = 16
  ks = jax.random.split(key, 12)
  nrm = lambda k, s, sc=0.1: sc * jax.random.normal(k, s, jnp.float32)

  w1 = nrm(ks[0], (inplanes, planes))                 # conv1 1x1
  w2_hwio = nrm(ks[1], (3, 3, planes, planes))        # conv2 3x3 (HWIO)
  w3 = nrm(ks[2], (planes, out_planes))               # conv3 1x1
  wd = nrm(ks[3], (inplanes, out_planes))             # downsample 1x1
  se_w1 = nrm(ks[4], (out_planes, red))               # SE fc1
  se_b1 = nrm(ks[5], (red,))
  se_w2 = nrm(ks[6], (red, out_planes))               # SE fc2
  se_b2 = nrm(ks[7], (out_planes,))

  def bn_params(k, c):
    k1, k2 = jax.random.split(k)
    gamma = 1.0 + 0.1 * jax.random.normal(k1, (c,), jnp.float32)
    beta = 0.1 * jax.random.normal(k2, (c,), jnp.float32)
    return fold_bn(gamma, beta, jnp.zeros((c,)), jnp.ones((c,)))

  bn1_s, bn1_b = bn_params(ks[8], planes)
  bn2_s, bn2_b = bn_params(ks[9], planes)
  bn3_s, bn3_b = bn_params(ks[10], out_planes)
  bnd_s, bnd_b = bn_params(ks[11], out_planes)

  return dict(
      w1=w1, w2_hwio=w2_hwio, w2=w2_hwio.reshape(9, planes, planes),
      w3=w3, wd=wd,
      se_w1=se_w1, se_b1=se_b1, se_w2=se_w2, se_b2=se_b2,
      bn1_scale=bn1_s, bn1_shift=bn1_b,
      bn2_scale=bn2_s, bn2_shift=bn2_b,
      bn3_scale=bn3_s, bn3_shift=bn3_b,
      bnd_scale=bnd_s, bnd_shift=bnd_b,
  )


if __name__ == "__main__":
  key = jax.random.PRNGKey(0)
  kx, kp = jax.random.split(key)

  # Small demo shapes; out_planes = 4*planes = 128 so the kernel's only HBM
  # store (final output) has a lane-dense trailing dim.
  N, H, W = 2, 16, 16
  inplanes, planes, stride = 32, 32, 1       # out_planes = 128, SE hidden = 8

  x_nchw = jax.random.normal(kx, (N, inplanes, H, W), jnp.float32)  # PyTorch NCHW
  x = jnp.transpose(x_nchw, (0, 2, 3, 1))                           # -> NHWC

  params = init_params(kp, inplanes, planes)

  out = se_bottleneck_forward(x, params, stride=stride)
  out = jax.block_until_ready(out)

  ref = ref_forward(x, params, stride=stride)
  np.testing.assert_allclose(np.asarray(out), np.asarray(ref),
                             rtol=1e-2, atol=1e-2)
  print("KERNEL_OK")
</pallas_src>

<mosaic_0001>
module attributes {stable_mosaic.version = 11 : i64} {
  func.func @_se_bottleneck_kernel(%arg0: i32, %arg1: memref<1x256x32xbf16, #tpu.memory_space<vmem>>, %arg2: memref<1x256x32xbf16, #tpu.memory_space<vmem>>, %arg3: memref<32x32xbf16, #tpu.memory_space<vmem>>, %arg4: memref<1x32xf32, #tpu.memory_space<vmem>>, %arg5: memref<1x32xf32, #tpu.memory_space<vmem>>, %arg6: memref<9x32x32xbf16, #tpu.memory_space<vmem>>, %arg7: memref<1x32xf32, #tpu.memory_space<vmem>>, %arg8: memref<1x32xf32, #tpu.memory_space<vmem>>, %arg9: memref<32x128xbf16, #tpu.memory_space<vmem>>, %arg10: memref<1x128xf32, #tpu.memory_space<vmem>>, %arg11: memref<1x128xf32, #tpu.memory_space<vmem>>, %arg12: memref<128x8xbf16, #tpu.memory_space<vmem>>, %arg13: memref<1x8xf32, #tpu.memory_space<vmem>>, %arg14: memref<8x128xbf16, #tpu.memory_space<vmem>>, %arg15: memref<1x128xf32, #tpu.memory_space<vmem>>, %arg16: memref<32x128xbf16, #tpu.memory_space<vmem>>, %arg17: memref<1x128xf32, #tpu.memory_space<vmem>>, %arg18: memref<1x128xf32, #tpu.memory_space<vmem>>, %arg19: memref<1x256x128xf32, #tpu.memory_space<vmem>>, %arg20: memref<18x18x32xf32, #tpu.memory_space<vmem>>) attributes {dimension_semantics = [#tpu.dimension_semantics<parallel>], iteration_bounds = array<i64: 2>, scalar_prefetch = 0 : i64, scratch_operands = 1 : i64, tpu.core_type = #tpu.core_type<tc>, window_params = [{transform_indices = @transform_0, window_bounds = array<i64: 1, 256, 32>}, {transform_indices = @transform_1, window_bounds = array<i64: 1, 256, 32>}, {pipeline_mode = #tpu.pipeline_mode<synchronous>, transform_indices = @transform_2, window_bounds = array<i64: 32, 32>}, {pipeline_mode = #tpu.pipeline_mode<synchronous>, transform_indices = @transform_3, window_bounds = array<i64: 1, 32>}, {pipeline_mode = #tpu.pipeline_mode<synchronous>, transform_indices = @transform_4, window_bounds = array<i64: 1, 32>}, {pipeline_mode = #tpu.pipeline_mode<synchronous>, transform_indices = @transform_5, window_bounds = array<i64: 9, 32, 32>}, {pipeline_mode = #tpu.pipeline_mode<synchronous>, transform_indices = @transform_6, window_bounds = array<i64: 1, 32>}, {pipeline_mode = #tpu.pipeline_mode<synchronous>, transform_indices = @transform_7, window_bounds = array<i64: 1, 32>}, {pipeline_mode = #tpu.pipeline_mode<synchronous>, transform_indices = @transform_8, window_bounds = array<i64: 32, 128>}, {pipeline_mode = #tpu.pipeline_mode<synchronous>, transform_indices = @transform_9, window_bounds = array<i64: 1, 128>}, {pipeline_mode = #tpu.pipeline_mode<synchronous>, transform_indices = @transform_10, window_bounds = array<i64: 1, 128>}, {pipeline_mode = #tpu.pipeline_mode<synchronous>, transform_indices = @transform_11, window_bounds = array<i64: 128, 8>}, {pipeline_mode = #tpu.pipeline_mode<synchronous>, transform_indices = @transform_12, window_bounds = array<i64: 1, 8>}, {pipeline_mode = #tpu.pipeline_mode<synchronous>, transform_indices = @transform_13, window_bounds = array<i64: 8, 128>}, {pipeline_mode = #tpu.pipeline_mode<synchronous>, transform_indices = @transform_14, window_bounds = array<i64: 1, 128>}, {pipeline_mode = #tpu.pipeline_mode<synchronous>, transform_indices = @transform_15, window_bounds = array<i64: 32, 128>}, {pipeline_mode = #tpu.pipeline_mode<synchronous>, transform_indices = @transform_16, window_bounds = array<i64: 1, 128>}, {pipeline_mode = #tpu.pipeline_mode<synchronous>, transform_indices = @transform_17, window_bounds = array<i64: 1, 128>}, {transform_indices = @transform_18, window_bounds = array<i64: 1, 256, 128>}]} {
    %c0 = arith.constant 0 : index
    %c0_0 = arith.constant 0 : index
    %c0_1 = arith.constant 0 : index
    %0 = vector.load %arg1[%c0, %c0_0, %c0_1] : memref<1x256x32xbf16, #tpu.memory_space<vmem>>, vector<1x256x32xbf16>
    %1 = vector.shape_cast %0 : vector<1x256x32xbf16> to vector<256x32xbf16>
    %c0_2 = arith.constant 0 : index
    %c0_3 = arith.constant 0 : index
    %2 = vector.load %arg3[%c0_2, %c0_3] : memref<32x32xbf16, #tpu.memory_space<vmem>>, vector<32x32xbf16>
    %cst = arith.constant dense<0.000000e+00> : vector<256x32xf32>
    %3 = tpu.matmul %1, %2, %cst {dimension_numbers = #tpu.dot_dimension_numbers<[1], [0], [0], [1], [0, 0, 1, 1], [], []>} : vector<256x32xbf16>, vector<32x32xbf16>, vector<256x32xf32> -> vector<256x32xf32>
    %c0_4 = arith.constant 0 : index
    %c0_5 = arith.constant 0 : index
    %4 = vector.load %arg4[%c0_4, %c0_5] : memref<1x32xf32, #tpu.memory_space<vmem>>, vector<1x32xf32>
    %5 = vector.broadcast %4 : vector<1x32xf32> to vector<256x32xf32>
    %6 = arith.mulf %3, %5 : vector<256x32xf32>
    %c0_6 = arith.constant 0 : index
    %c0_7 = arith.constant 0 : index
    %7 = vector.load %arg5[%c0_6, %c0_7] : memref<1x32xf32, #tpu.memory_space<vmem>>, vector<1x32xf32>
    %8 = vector.broadcast %7 : vector<1x32xf32> to vector<256x32xf32>
    %9 = arith.addf %6, %8 : vector<256x32xf32>
    %cst_8 = arith.constant 0.000000e+00 : f32
    %10 = vector.broadcast %cst_8 : f32 to vector<256x32xf32>
    %11 = arith.maximumf %9, %10 : vector<256x32xf32>
    %cst_9 = arith.constant 0.000000e+00 : f32
    %12 = vector.broadcast %cst_9 : f32 to vector<18x18x32xf32>
    %c0_10 = arith.constant 0 : index
    %c0_11 = arith.constant 0 : index
    %c0_12 = arith.constant 0 : index
    %13 = vector.load %arg20[%c0_10, %c0_11, %c0_12] : memref<18x18x32xf32, #tpu.memory_space<vmem>>, vector<18x18x32xf32>
    tpu.vector_store %arg20[%c0_10, %c0_11, %c0_12], %12 {strides = array<i32>} : memref<18x18x32xf32, #tpu.memory_space<vmem>>, vector<18x18x32xf32>,
    %14 = vector.shape_cast %11 : vector<256x32xf32> to vector<16x16x32xf32>
    %c1 = arith.constant 1 : index
    %c1_13 = arith.constant 1 : index
    %c0_14 = arith.constant 0 : index
    %15 = vector.load %arg20[%c1, %c1_13, %c0_14] : memref<18x18x32xf32, #tpu.memory_space<vmem>>, vector<16x16x32xf32>
    tpu.vector_store %arg20[%c1, %c1_13, %c0_14], %14 {strides = array<i32>} : memref<18x18x32xf32, #tpu.memory_space<vmem>>, vector<16x16x32xf32>,
    %cst_15 = arith.constant 0.000000e+00 : f32
    %16 = vector.broadcast %cst_15 : f32 to vector<256x32xf32>
    %c0_16 = arith.constant 0 : index
    %c0_17 = arith.constant 0 : index
    %c0_18 = arith.constant 0 : index
    %17 = vector.load %arg20[%c0_16, %c0_17, %c0_18] : memref<18x18x32xf32, #tpu.memory_space<vmem>>, vector<16x16x32xf32>
    %18 = vector.shape_cast %17 : vector<16x16x32xf32> to vector<256x32xf32>
    %19 = arith.truncf %18 : vector<256x32xf32> to vector<256x32xbf16>
    %c0_19 = arith.constant 0 : index
    %c0_20 = arith.constant 0 : index
    %c0_21 = arith.constant 0 : index
    %20 = vector.load %arg6[%c0_19, %c0_20, %c0_21] : memref<9x32x32xbf16, #tpu.memory_space<vmem>>, vector<1x32x32xbf16>
    %21 = vector.shape_cast %20 : vector<1x32x32xbf16> to vector<32x32xbf16>
    %cst_22 = arith.constant dense<0.000000e+00> : vector<256x32xf32>
    %22 = tpu.matmul %19, %21, %cst_22 {dimension_numbers = #tpu.dot_dimension_numbers<[1], [0], [0], [1], [0, 0, 1, 1], [], []>} : vector<256x32xbf16>, vector<32x32xbf16>, vector<256x32xf32> -> vector<256x32xf32>
    %23 = arith.addf %16, %22 : vector<256x32xf32>
    %c0_23 = arith.constant 0 : index
    %c1_24 = arith.constant 1 : index
    %c0_25 = arith.constant 0 : index
    %24 = vector.load %arg20[%c0_23, %c1_24, %c0_25] : memref<18x18x32xf32, #tpu.memory_space<vmem>>, vector<16x16x32xf32>
    %25 = vector.shape_cast %24 : vector<16x16x32xf32> to vector<256x32xf32>
    %26 = arith.truncf %25 : vector<256x32xf32> to vector<256x32xbf16>
    %c1_26 = arith.constant 1 : index
    %c0_27 = arith.constant 0 : index
    %c0_28 = arith.constant 0 : index
    %27 = vector.load %arg6[%c1_26, %c0_27, %c0_28] : memref<9x32x32xbf16, #tpu.memory_space<vmem>>, vector<1x32x32xbf16>
    %28 = vector.shape_cast %27 : vector<1x32x32xbf16> to vector<32x32xbf16>
    %cst_29 = arith.constant dense<0.000000e+00> : vector<256x32xf32>
    %29 = tpu.matmul %26, %28, %cst_29 {dimension_numbers = #tpu.dot_dimension_numbers<[1], [0], [0], [1], [0, 0, 1, 1], [], []>} : vector<256x32xbf16>, vector<32x32xbf16>, vector<256x32xf32> -> vector<256x32xf32>
    %30 = arith.addf %23, %29 : vector<256x32xf32>
    %c0_30 = arith.constant 0 : index
    %c2 = arith.constant 2 : index
    %c0_31 = arith.constant 0 : index
    %31 = vector.load %arg20[%c0_30, %c2, %c0_31] : memref<18x18x32xf32, #tpu.memory_space<vmem>>, vector<16x16x32xf32>
    %32 = vector.shape_cast %31 : vector<16x16x32xf32> to vector<256x32xf32>
    %33 = arith.truncf %32 : vector<256x32xf32> to vector<256x32xbf16>
    %c2_32 = arith.constant 2 : index
    %c0_33 = arith.constant 0 : index
    %c0_34 = arith.constant 0 : index
    %34 = vector.load %arg6[%c2_32, %c0_33, %c0_34] : memref<9x32x32xbf16, #tpu.memory_space<vmem>>, vector<1x32x32xbf16>
    %35 = vector.shape_cast %34 : vector<1x32x32xbf16> to vector<32x32xbf16>
    %cst_35 = arith.constant dense<0.000000e+00> : vector<256x32xf32>
    %36 = tpu.matmul %33, %35, %cst_35 {dimension_numbers = #tpu.dot_dimension_numbers<[1], [0], [0], [1], [0, 0, 1, 1], [], []>} : vector<256x32xbf16>, vector<32x32xbf16>, vector<256x32xf32> -> vector<256x32xf32>
    %37 = arith.addf %30, %36 : vector<256x32xf32>
    %c1_36 = arith.constant 1 : index
    %c0_37 = arith.constant 0 : index
    %c0_38 = arith.constant 0 : index
    %38 = vector.load %arg20[%c1_36, %c0_37, %c0_38] : memref<18x18x32xf32, #tpu.memory_space<vmem>>, vector<16x16x32xf32>
    %39 = vector.shape_cast %38 : vector<16x16x32xf32> to vector<256x32xf32>
    %40 = arith.truncf %39 : vector<256x32xf32> to vector<256x32xbf16>
    %c3 = arith.constant 3 : index
    %c0_39 = arith.constant 0 : index
    %c0_40 = arith.constant 0 : index
    %41 = vector.load %arg6[%c3, %c0_39, %c0_40] : memref<9x32x32xbf16, #tpu.memory_space<vmem>>, vector<1x32x32xbf16>
    %42 = vector.shape_cast %41 : vector<1x32x32xbf16> to vector<32x32xbf16>
    %cst_41 = arith.constant dense<0.000000e+00> : vector<256x32xf32>
    %43 = tpu.matmul %40, %42, %cst_41 {dimension_numbers = #tpu.dot_dimension_numbers<[1], [0], [0], [1], [0, 0, 1, 1], [], []>} : vector<256x32xbf16>, vector<32x32xbf16>, vector<256x32xf32> -> vector<256x32xf32>
    %44 = arith.addf %37, %43 : vector<256x32xf32>
    %c1_42 = arith.constant 1 : index
    %c1_43 = arith.constant 1 : index
    %c0_44 = arith.constant 0 : index
    %45 = vector.load %arg20[%c1_42, %c1_43, %c0_44] : memref<18x18x32xf32, #tpu.memory_space<vmem>>, vector<16x16x32xf32>
    %46 = vector.shape_cast %45 : vector<16x16x32xf32> to vector<256x32xf32>
    %47 = arith.truncf %46 : vector<256x32xf32> to vector<256x32xbf16>
    %c4 = arith.constant 4 : index
    %c0_45 = arith.constant 0 : index
    %c0_46 = arith.constant 0 : index
    %48 = vector.load %arg6[%c4, %c0_45, %c0_46] : memref<9x32x32xbf16, #tpu.memory_space<vmem>>, vector<1x32x32xbf16>
    %49 = vector.shape_cast %48 : vector<1x32x32xbf16> to vector<32x32xbf16>
    %cst_47 = arith.constant dense<0.000000e+00> : vector<256x32xf32>
    %50 = tpu.matmul %47, %49, %cst_47 {dimension_numbers = #tpu.dot_dimension_numbers<[1], [0], [0], [1], [0, 0, 1, 1], [], []>} : vector<256x32xbf16>, vector<32x32xbf16>, vector<256x32xf32> -> vector<256x32xf32>
    %51 = arith.addf %44, %50 : vector<256x32xf32>
    %c1_48 = arith.constant 1 : index
    %c2_49 = arith.constant 2 : index
    %c0_50 = arith.constant 0 : index
    %52 = vector.load %arg20[%c1_48, %c2_49, %c0_50] : memref<18x18x32xf32, #tpu.memory_space<vmem>>, vector<16x16x32xf32>
    %53 = vector.shape_cast %52 : vector<16x16x32xf32> to vector<256x32xf32>
    %54 = arith.truncf %53 : vector<256x32xf32> to vector<256x32xbf16>
    %c5 = arith.constant 5 : index
    %c0_51 = arith.constant 0 : index
    %c0_52 = arith.constant 0 : index
    %55 = vector.load %arg6[%c5, %c0_51, %c0_52] : memref<9x32x32xbf16, #tpu.memory_space<vmem>>, vector<1x32x32xbf16>
    %56 = vector.shape_cast %55 : vector<1x32x32xbf16> to vector<32x32xbf16>
    %cst_53 = arith.constant dense<0.000000e+00> : vector<256x32xf32>
    %57 = tpu.matmul %54, %56, %cst_53 {dimension_numbers = #tpu.dot_dimension_numbers<[1], [0], [0], [1], [0, 0, 1, 1], [], []>} : vector<256x32xbf16>, vector<32x32xbf16>, vector<256x32xf32> -> vector<256x32xf32>
    %58 = arith.addf %51, %57 : vector<256x32xf32>
    %c2_54 = arith.constant 2 : index
    %c0_55 = arith.constant 0 : index
    %c0_56 = arith.constant 0 : index
    %59 = vector.load %arg20[%c2_54, %c0_55, %c0_56] : memref<18x18x32xf32, #tpu.memory_space<vmem>>, vector<16x16x32xf32>
    %60 = vector.shape_cast %59 : vector<16x16x32xf32> to vector<256x32xf32>
    %61 = arith.truncf %60 : vector<256x32xf32> to vector<256x32xbf16>
    %c6 = arith.constant 6 : index
    %c0_57 = arith.constant 0 : index
    %c0_58 = arith.constant 0 : index
    %62 = vector.load %arg6[%c6, %c0_57, %c0_58] : memref<9x32x32xbf16, #tpu.memory_space<vmem>>, vector<1x32x32xbf16>
    %63 = vector.shape_cast %62 : vector<1x32x32xbf16> to vector<32x32xbf16>
    %cst_59 = arith.constant dense<0.000000e+00> : vector<256x32xf32>
    %64 = tpu.matmul %61, %63, %cst_59 {dimension_numbers = #tpu.dot_dimension_numbers<[1], [0], [0], [1], [0, 0, 1, 1], [], []>} : vector<256x32xbf16>, vector<32x32xbf16>, vector<256x32xf32> -> vector<256x32xf32>
    %65 = arith.addf %58, %64 : vector<256x32xf32>
    %c2_60 = arith.constant 2 : index
    %c1_61 = arith.constant 1 : index
    %c0_62 = arith.constant 0 : index
    %66 = vector.load %arg20[%c2_60, %c1_61, %c0_62] : memref<18x18x32xf32, #tpu.memory_space<vmem>>, vector<16x16x32xf32>
    %67 = vector.shape_cast %66 : vector<16x16x32xf32> to vector<256x32xf32>
    %68 = arith.truncf %67 : vector<256x32xf32> to vector<256x32xbf16>
    %c7 = arith.constant 7 : index
    %c0_63 = arith.constant 0 : index
    %c0_64 = arith.constant 0 : index
    %69 = vector.load %arg6[%c7, %c0_63, %c0_64] : memref<9x32x32xbf16, #tpu.memory_space<vmem>>, vector<1x32x32xbf16>
    %70 = vector.shape_cast %69 : vector<1x32x32xbf16> to vector<32x32xbf16>
    %cst_65 = arith.constant dense<0.000000e+00> : vector<256x32xf32>
    %71 = tpu.matmul %68, %70, %cst_65 {dimension_numbers = #tpu.dot_dimension_numbers<[1], [0], [0], [1], [0, 0, 1, 1], [], []>} : vector<256x32xbf16>, vector<32x32xbf16>, vector<256x32xf32> -> vector<256x32xf32>
    %72 = arith.addf %65, %71 : vector<256x32xf32>
    %c2_66 = arith.constant 2 : index
    %c2_67 = arith.constant 2 : index
    %c0_68 = arith.constant 0 : index
    %73 = vector.load %arg20[%c2_66, %c2_67, %c0_68] : memref<18x18x32xf32, #tpu.memory_space<vmem>>, vector<16x16x32xf32>
    %74 = vector.shape_cast %73 : vector<16x16x32xf32> to vector<256x32xf32>
    %75 = arith.truncf %74 : vector<256x32xf32> to vector<256x32xbf16>
    %c8 = arith.constant 8 : index
    %c0_69 = arith.constant 0 : index
    %c0_70 = arith.constant 0 : index
    %76 = vector.load %arg6[%c8, %c0_69, %c0_70] : memref<9x32x32xbf16, #tpu.memory_space<vmem>>, vector<1x32x32xbf16>
    %77 = vector.shape_cast %76 : vector<1x32x32xbf16> to vector<32x32xbf16>
    %cst_71 = arith.constant dense<0.000000e+00> : vector<256x32xf32>
    %78 = tpu.matmul %75, %77, %cst_71 {dimension_numbers = #tpu.dot_dimension_numbers<[1], [0], [0], [1], [0, 0, 1, 1], [], []>} : vector<256x32xbf16>, vector<32x32xbf16>, vector<256x32xf32> -> vector<256x32xf32>
    %79 = arith.addf %72, %78 : vector<256x32xf32>
    %c0_72 = arith.constant 0 : index
    %c0_73 = arith.constant 0 : index
    %80 = vector.load %arg7[%c0_72, %c0_73] : memref<1x32xf32, #tpu.memory_space<vmem>>, vector<1x32xf32>
    %81 = vector.broadcast %80 : vector<1x32xf32> to vector<256x32xf32>
    %82 = arith.mulf %79, %81 : vector<256x32xf32>
    %c0_74 = arith.constant 0 : index
    %c0_75 = arith.constant 0 : index
    %83 = vector.load %arg8[%c0_74, %c0_75] : memref<1x32xf32, #tpu.memory_space<vmem>>, vector<1x32xf32>
    %84 = vector.broadcast %83 : vector<1x32xf32> to vector<256x32xf32>
    %85 = arith.addf %82, %84 : vector<256x32xf32>
    %cst_76 = arith.constant 0.000000e+00 : f32
    %86 = vector.broadcast %cst_76 : f32 to vector<256x32xf32>
    %87 = arith.maximumf %85, %86 : vector<256x32xf32>
    %88 = arith.truncf %87 : vector<256x32xf32> to vector<256x32xbf16>
    %c0_77 = arith.constant 0 : index
    %c0_78 = arith.constant 0 : index
    %89 = vector.load %arg9[%c0_77, %c0_78] : memref<32x128xbf16, #tpu.memory_space<vmem>>, vector<32x128xbf16>
    %cst_79 = arith.constant dense<0.000000e+00> : vector<256x128xf32>
    %90 = tpu.matmul %88, %89, %cst_79 {dimension_numbers = #tpu.dot_dimension_numbers<[1], [0], [0], [1], [0, 0, 1, 1], [], []>} : vector<256x32xbf16>, vector<32x128xbf16>, vector<256x128xf32> -> vector<256x128xf32>
    %c0_80 = arith.constant 0 : index
    %c0_81 = arith.constant 0 : index
    %91 = vector.load %arg10[%c0_80, %c0_81] : memref<1x128xf32, #tpu.memory_space<vmem>>, vector<1x128xf32>
    %92 = vector.broadcast %91 : vector<1x128xf32> to vector<256x128xf32>
    %93 = arith.mulf %90, %92 : vector<256x128xf32>
    %c0_82 = arith.constant 0 : index
    %c0_83 = arith.constant 0 : index
    %94 = vector.load %arg11[%c0_82, %c0_83] : memref<1x128xf32, #tpu.memory_space<vmem>>, vector<1x128xf32>
    %95 = vector.broadcast %94 : vector<1x128xf32> to vector<256x128xf32>
    %96 = arith.addf %93, %95 : vector<256x128xf32>
    %cst_84 = arith.constant 3.906250e-03 : f32
    %97 = vector.broadcast %cst_84 : f32 to vector<1x256xf32>
    %cst_85 = arith.constant dense<0.000000e+00> : vector<1x128xf32>
    %98 = tpu.matmul %97, %96, %cst_85 {dimension_numbers = #tpu.dot_dimension_numbers<[1], [0], [0], [1], [0, 0, 1, 1], [], []>} : vector<1x256xf32>, vector<256x128xf32>, vector<1x128xf32> -> vector<1x128xf32>
    %99 = arith.truncf %98 : vector<1x128xf32> to vector<1x128xbf16>
    %c0_86 = arith.constant 0 : index
    %c0_87 = arith.constant 0 : index
    %100 = vector.load %arg12[%c0_86, %c0_87] : memref<128x8xbf16, #tpu.memory_space<vmem>>, vector<128x8xbf16>
    %cst_88 = arith.constant dense<0.000000e+00> : vector<1x8xf32>
    %101 = tpu.matmul %99, %100, %cst_88 {dimension_numbers = #tpu.dot_dimension_numbers<[1], [0], [0], [1], [0, 0, 1, 1], [], []>} : vector<1x128xbf16>, vector<128x8xbf16>, vector<1x8xf32> -> vector<1x8xf32>
    %c0_89 = arith.constant 0 : index
    %c0_90 = arith.constant 0 : index
    %102 = vector.load %arg13[%c0_89, %c0_90] : memref<1x8xf32, #tpu.memory_space<vmem>>, vector<1x8xf32>
    %103 = arith.addf %101, %102 : vector<1x8xf32>
    %cst_91 = arith.constant 0.000000e+00 : f32
    %104 = vector.broadcast %cst_91 : f32 to vector<1x8xf32>
    %105 = arith.maximumf %103, %104 : vector<1x8xf32>
    %106 = arith.truncf %105 : vector<1x8xf32> to vector<1x8xbf16>
    %c0_92 = arith.constant 0 : index
    %c0_93 = arith.constant 0 : index
    %107 = vector.load %arg14[%c0_92, %c0_93] : memref<8x128xbf16, #tpu.memory_space<vmem>>, vector<8x128xbf16>
    %cst_94 = arith.constant dense<0.000000e+00> : vector<1x128xf32>
    %108 = tpu.matmul %106, %107, %cst_94 {dimension_numbers = #tpu.dot_dimension_numbers<[1], [0], [0], [1], [0, 0, 1, 1], [], []>} : vector<1x8xbf16>, vector<8x128xbf16>, vector<1x128xf32> -> vector<1x128xf32>
    %c0_95 = arith.constant 0 : index
    %c0_96 = arith.constant 0 : index
    %109 = vector.load %arg15[%c0_95, %c0_96] : memref<1x128xf32, #tpu.memory_space<vmem>>, vector<1x128xf32>
    %110 = arith.addf %108, %109 : vector<1x128xf32>
    %111 = arith.negf %110 : vector<1x128xf32>
    %112 = math.exp %111 : vector<1x128xf32>
    %cst_97 = arith.constant 1.000000e+00 : f32
    %113 = vector.broadcast %cst_97 : f32 to vector<1x128xf32>
    %114 = arith.addf %113, %112 : vector<1x128xf32>
    %115 = arith.divf %113, %114 : vector<1x128xf32>
    %c0_98 = arith.constant 0 : index
    %c0_99 = arith.constant 0 : index
    %c0_100 = arith.constant 0 : index
    %116 = vector.load %arg2[%c0_98, %c0_99, %c0_100] : memref<1x256x32xbf16, #tpu.memory_space<vmem>>, vector<1x256x32xbf16>
    %117 = vector.shape_cast %116 : vector<1x256x32xbf16> to vector<256x32xbf16>
    %c0_101 = arith.constant 0 : index
    %c0_102 = arith.constant 0 : index
    %118 = vector.load %arg16[%c0_101, %c0_102] : memref<32x128xbf16, #tpu.memory_space<vmem>>, vector<32x128xbf16>
    %cst_103 = arith.constant dense<0.000000e+00> : vector<256x128xf32>
    %119 = tpu.matmul %117, %118, %cst_103 {dimension_numbers = #tpu.dot_dimension_numbers<[1], [0], [0], [1], [0, 0, 1, 1], [], []>} : vector<256x32xbf16>, vector<32x128xbf16>, vector<256x128xf32> -> vector<256x128xf32>
    %c0_104 = arith.constant 0 : index
    %c0_105 = arith.constant 0 : index
    %120 = vector.load %arg17[%c0_104, %c0_105] : memref<1x128xf32, #tpu.memory_space<vmem>>, vector<1x128xf32>
    %121 = vector.broadcast %120 : vector<1x128xf32> to vector<256x128xf32>
    %122 = arith.mulf %119, %121 : vector<256x128xf32>
    %c0_106 = arith.constant 0 : index
    %c0_107 = arith.constant 0 : index
    %123 = vector.load %arg18[%c0_106, %c0_107] : memref<1x128xf32, #tpu.memory_space<vmem>>, vector<1x128xf32>
    %124 = vector.broadcast %123 : vector<1x128xf32> to vector<256x128xf32>
    %125 = arith.addf %122, %124 : vector<256x128xf32>
    %126 = vector.broadcast %115 : vector<1x128xf32> to vector<256x128xf32>
    %127 = arith.mulf %96, %126 : vector<256x128xf32>
    %128 = arith.addf %127, %125 : vector<256x128xf32>
    %cst_108 = arith.constant 0.000000e+00 : f32
    %129 = vector.broadcast %cst_108 : f32 to vector<256x128xf32>
    %130 = arith.maximumf %128, %129 : vector<256x128xf32>
    %c0_109 = arith.constant 0 : index
    %c0_110 = arith.constant 0 : index
    %c0_111 = arith.constant 0 : index
    %131 = vector.load %arg19[%c0_109, %c0_110, %c0_111] : memref<1x256x128xf32, #tpu.memory_space<vmem>>, vector<1x256x128xf32>
    %132 = vector.shape_cast %131 : vector<1x256x128xf32> to vector<256x128xf32>
    %133 = vector.shape_cast %130 : vector<256x128xf32> to vector<1x256x128xf32>
    tpu.vector_store %arg19[%c0_109, %c0_110, %c0_111], %133 {strides = array<i32>} : memref<1x256x128xf32, #tpu.memory_space<vmem>>, vector<1x256x128xf32>,
    return
  }
  func.func @transform_0(%arg0: i32) -> (i32, i32, i32) {
    %c0_i32 = arith.constant 0 : i32
    %c0_i32_0 = arith.constant 0 : i32
    %c0_i32_1 = arith.constant 0 : i32
    return %arg0, %c0_i32, %c0_i32_0 : i32, i32, i32
  }
  func.func @transform_1(%arg0: i32) -> (i32, i32, i32) {
    %c0_i32 = arith.constant 0 : i32
    %c0_i32_0 = arith.constant 0 : i32
    %c0_i32_1 = arith.constant 0 : i32
    return %arg0, %c0_i32, %c0_i32_0 : i32, i32, i32
  }
  func.func @transform_2(%arg0: i32) -> (i32, i32) {
    %c0_i32 = arith.constant 0 : i32
    %c0_i32_0 = arith.constant 0 : i32
    %c0_i32_1 = arith.constant 0 : i32
    return %c0_i32, %c0_i32_0 : i32, i32
  }
  func.func @transform_3(%arg0: i32) -> (i32, i32) {
    %c0_i32 = arith.constant 0 : i32
    %c0_i32_0 = arith.constant 0 : i32
    %c0_i32_1 = arith.constant 0 : i32
    return %c0_i32, %c0_i32_0 : i32, i32
  }
  func.func @transform_4(%arg0: i32) -> (i32, i32) {
    %c0_i32 = arith.constant 0 : i32
    %c0_i32_0 = arith.constant 0 : i32
    %c0_i32_1 = arith.constant 0 : i32
    return %c0_i32, %c0_i32_0 : i32, i32
  }
  func.func @transform_5(%arg0: i32) -> (i32, i32, i32) {
    %c0_i32 = arith.constant 0 : i32
    %c0_i32_0 = arith.constant 0 : i32
    %c0_i32_1 = arith.constant 0 : i32
    %c0_i32_2 = arith.constant 0 : i32
    return %c0_i32, %c0_i32_0, %c0_i32_1 : i32, i32, i32
  }
  func.func @transform_6(%arg0: i32) -> (i32, i32) {
    %c0_i32 = arith.constant 0 : i32
    %c0_i32_0 = arith.constant 0 : i32
    %c0_i32_1 = arith.constant 0 : i32
    return %c0_i32, %c0_i32_0 : i32, i32
  }
  func.func @transform_7(%arg0: i32) -> (i32, i32) {
    %c0_i32 = arith.constant 0 : i32
    %c0_i32_0 = arith.constant 0 : i32
    %c0_i32_1 = arith.constant 0 : i32
    return %c0_i32, %c0_i32_0 : i32, i32
  }
  func.func @transform_8(%arg0: i32) -> (i32, i32) {
    %c0_i32 = arith.constant 0 : i32
    %c0_i32_0 = arith.constant 0 : i32
    %c0_i32_1 = arith.constant 0 : i32
    return %c0_i32, %c0_i32_0 : i32, i32
  }
  func.func @transform_9(%arg0: i32) -> (i32, i32) {
    %c0_i32 = arith.constant 0 : i32
    %c0_i32_0 = arith.constant 0 : i32
    %c0_i32_1 = arith.constant 0 : i32
    return %c0_i32, %c0_i32_0 : i32, i32
  }
  func.func @transform_10(%arg0: i32) -> (i32, i32) {
    %c0_i32 = arith.constant 0 : i32
    %c0_i32_0 = arith.constant 0 : i32
    %c0_i32_1 = arith.constant 0 : i32
    return %c0_i32, %c0_i32_0 : i32, i32
  }
  func.func @transform_11(%arg0: i32) -> (i32, i32) {
    %c0_i32 = arith.constant 0 : i32
    %c0_i32_0 = arith.constant 0 : i32
    %c0_i32_1 = arith.constant 0 : i32
    return %c0_i32, %c0_i32_0 : i32, i32
  }
  func.func @transform_12(%arg0: i32) -> (i32, i32) {
    %c0_i32 = arith.constant 0 : i32
    %c0_i32_0 = arith.constant 0 : i32
    %c0_i32_1 = arith.constant 0 : i32
    return %c0_i32, %c0_i32_0 : i32, i32
  }
  func.func @transform_13(%arg0: i32) -> (i32, i32) {
    %c0_i32 = arith.constant 0 : i32
    %c0_i32_0 = arith.constant 0 : i32
    %c0_i32_1 = arith.constant 0 : i32
    return %c0_i32, %c0_i32_0 : i32, i32
  }
  func.func @transform_14(%arg0: i32) -> (i32, i32) {
    %c0_i32 = arith.constant 0 : i32
    %c0_i32_0 = arith.constant 0 : i32
    %c0_i32_1 = arith.constant 0 : i32
    return %c0_i32, %c0_i32_0 : i32, i32
  }
  func.func @transform_15(%arg0: i32) -> (i32, i32) {
    %c0_i32 = arith.constant 0 : i32
    %c0_i32_0 = arith.constant 0 : i32
    %c0_i32_1 = arith.constant 0 : i32
    return %c0_i32, %c0_i32_0 : i32, i32
  }
  func.func @transform_16(%arg0: i32) -> (i32, i32) {
    %c0_i32 = arith.constant 0 : i32
    %c0_i32_0 = arith.constant 0 : i32
    %c0_i32_1 = arith.constant 0 : i32
    return %c0_i32, %c0_i32_0 : i32, i32
  }
  func.func @transform_17(%arg0: i32) -> (i32, i32) {
    %c0_i32 = arith.constant 0 : i32
    %c0_i32_0 = arith.constant 0 : i32
    %c0_i32_1 = arith.constant 0 : i32
    return %c0_i32, %c0_i32_0 : i32, i32
  }
  func.func @transform_18(%arg0: i32) -> (i32, i32, i32) {
    %c0_i32 = arith.constant 0 : i32
    %c0_i32_0 = arith.constant 0 : i32
    %c0_i32_1 = arith.constant 0 : i32
    return %arg0, %c0_i32, %c0_i32_0 : i32, i32, i32
  }
}

</mosaic_0001>

<llo_original>
// kernel: tpu_custom_call.1
$region0: #{tpu_custom_call.1}
  #allocation0 [shape = 'u32[]', space=smem, size = 0x4, offset = 0x4, fixed_abs, tag = 'smem constant byte address 0x4 - core index']
  #allocation1 [shape = 'u32[144,128]{1,0:T(1,128)}', space=vmem, size = 0x12000, scoped, tag = 'internal scratch']
  #allocation2 [shape = 'f32[18,18,32]{2,1,0:T(8,128)}', space=vmem, size = 0x36000, scoped, tag = 'scratch operand']
  %s0 = inlined_call_operand.vmem [shape: bf16[2,256,32], index: 0, kind: input, shape index: {}]
  %s1 = inlined_call_operand.vmem [shape: bf16[2,256,32], index: 1, kind: input, shape index: {}]
  %s2 = inlined_call_operand.vmem [shape: bf16[32,32], index: 2, kind: input, shape index: {}]
  %s3 = inlined_call_operand.vmem [shape: f32[1,32], index: 3, kind: input, shape index: {}]
  %s4 = inlined_call_operand.vmem [shape: f32[1,32], index: 4, kind: input, shape index: {}]
  %s5 = inlined_call_operand.vmem [shape: bf16[9,32,32], index: 5, kind: input, shape index: {}]
  %s6 = inlined_call_operand.vmem [shape: f32[1,32], index: 6, kind: input, shape index: {}]
  %s7 = inlined_call_operand.vmem [shape: f32[1,32], index: 7, kind: input, shape index: {}]
  %s8 = inlined_call_operand.vmem [shape: bf16[32,128], index: 8, kind: input, shape index: {}]
  %s9 = inlined_call_operand.vmem [shape: f32[1,128], index: 9, kind: input, shape index: {}]
  %s10 = inlined_call_operand.vmem [shape: f32[1,128], index: 10, kind: input, shape index: {}]
  %s11 = inlined_call_operand.vmem [shape: bf16[128,8], index: 11, kind: input, shape index: {}]
  %s12 = inlined_call_operand.vmem [shape: f32[1,8], index: 12, kind: input, shape index: {}]
  %s13 = inlined_call_operand.vmem [shape: bf16[8,128], index: 13, kind: input, shape index: {}]
  %s14 = inlined_call_operand.vmem [shape: f32[1,128], index: 14, kind: input, shape index: {}]
  %s15 = inlined_call_operand.vmem [shape: bf16[32,128], index: 15, kind: input, shape index: {}]
  %s16 = inlined_call_operand.vmem [shape: f32[1,128], index: 16, kind: input, shape index: {}]
  %s17 = inlined_call_operand.vmem [shape: f32[1,128], index: 17, kind: input, shape index: {}]
  %s18 = inlined_call_operand.hbm [shape: f32[2,256,128], index: 18, kind: output, shape index: {}]
  %s19 = sld [smem:[#allocation0]]
  $region105: #{tpu_custom_call.1} parent=0
    _
  %s21 = ssub.s32 1, %s19
  %s22 = scalar_select 0, %s21, %s19
  $region1: #{tpu_custom_call.1} parent=0
    #allocation3 [shape = 'u8[262144]{0}', space=vmem, size = 0x40000, scoped, tag = 'output window, operand 0']
    #allocation4 [shape = 's32[2]{0}', space=sflag, size = 0x8, scoped, tag = 'scoped memory for tpu_custom_call.1']
    %23 = vsyncpa [#allocation4], 0
    %s24 = scalar_lea.sflag [#allocation4], 1
    %25 = vsyncpa %s24, 0
    loop: start=0, step=1, limit=4
    $region2: #{tpu_custom_call.1} parent=1 // loop_pre_header
      _
    $region3: #{tpu_custom_call.1} parent=1 // loop_header
      %s27 = sphi 0, %s31
      %p28 = scmp.ge.s32.totalorder %s27, 4
      %s37 = sphi 0, %s39
      %s40 = sphi 0, %s37
      %s41 = sphi 0, %s40
      %s57 = sphi 0, %s41
      %s63 = sphi 0, %s65
      %s66 = sphi 0, %s63
      %s67 = sphi 0, %s66
      %s83 = sphi 0, %s67
      %s87 = sphi 0, %s87
      %s89 = sphi 0, %s87
      %s90 = sphi 0, %s89
      %s104 = sphi 0, %s90
      %s108 = sphi 0, %s108
      %s110 = sphi 0, %s108
      %s111 = sphi 0, %s110
      %s125 = sphi 0, %s111
      %s129 = sphi 0, %s129
      %s131 = sphi 0, %s129
      %s132 = sphi 0, %s131
      %s146 = sphi 0, %s132
      %s150 = sphi 0, %s150
      %s152 = sphi 0, %s150
      %s153 = sphi 0, %s152
      %s167 = sphi 0, %s153
      %s171 = sphi 0, %s171
      %s173 = sphi 0, %s171
      %s174 = sphi 0, %s173
      %s188 = sphi 0, %s174
      %s192 = sphi 0, %s192
      %s194 = sphi 0, %s192
      %s195 = sphi 0, %s194
      %s209 = sphi 0, %s195
      %s213 = sphi 0, %s213
      %s215 = sphi 0, %s213
      %s216 = sphi 0, %s215
      %s230 = sphi 0, %s216
      %s234 = sphi 0, %s234
      %s236 = sphi 0, %s234
      %s237 = sphi 0, %s236
      %s251 = sphi 0, %s237
      %s255 = sphi 0, %s255
      %s257 = sphi 0, %s255
      %s258 = sphi 0, %s257
      %s272 = sphi 0, %s258
      %s276 = sphi 0, %s276
      %s278 = sphi 0, %s276
      %s279 = sphi 0, %s278
      %s293 = sphi 0, %s279
      %s297 = sphi 0, %s297
      %s299 = sphi 0, %s297
      %s300 = sphi 0, %s299
      %s314 = sphi 0, %s300
      %s318 = sphi 0, %s318
      %s320 = sphi 0, %s318
      %s321 = sphi 0, %s320
      %s335 = sphi 0, %s321
      %s339 = sphi 0, %s339
      %s341 = sphi 0, %s339
      %s342 = sphi 0, %s341
      %s356 = sphi 0, %s342
      %s360 = sphi 0, %s360
      %s362 = sphi 0, %s360
      %s363 = sphi 0, %s362
      %s377 = sphi 0, %s363
      %s381 = sphi 0, %s381
      %s383 = sphi 0, %s381
      %s384 = sphi 0, %s383
      %s398 = sphi 0, %s384
      %s402 = sphi 0, %s402
      %s404 = sphi 0, %s402
      %s405 = sphi 0, %s404
      %s419 = sphi 0, %s405
      %s425 = sphi 0, %s427
      %s428 = sphi 0, %s425
      %s429 = sphi 0, %s428
      %s445 = sphi 0, %s429
    $region4: #{tpu_custom_call.1} parent=1 // loop_header_branch
      %30 = sbr.rel (%p28) target = $region8
    $region5: #{tpu_custom_call.1} parent=1 // loop_body
      %s32 = ssub.s32 %s27, 1
      %s33 = ssub.s32 %s27, 2
      %s34 = sadd.s32 %s27, 1
      %s35 = ssub.s32 %s27, %s34
      %p36 = scmp.eq.s32.totalorder %s35, 0
      %s38 = sadd.s32 %s37, 1
      %s39 = scalar_select %p36, %s37, %s38
      %p42 = pneg %p36
      %p43 = scmp.eq.s32.totalorder %s27, 1
      %p44 = por %p42, %p43
      %p45 = scmp.ne.s32.totalorder %s37, %s40
      %p46 = scmp.eq.s32.totalorder %s27, 0
      %p47 = por %p45, %p46
      %p48 = scmp.ne.s32.totalorder %s37, %s40
      %p49 = scmp.eq.s32.totalorder %s32, 1
      %p50 = por %p48, %p49
      %p51 = scmp.ne.s32.totalorder %s40, %s41
      %p52 = scmp.eq.s32.totalorder %s32, 0
      %p53 = por %p51, %p52
      %p54 = scmp.ne.s32.totalorder %s40, %s41
      %p55 = scmp.eq.s32.totalorder %s33, 1
      %p56 = por %p54, %p55
      %p58 = scmp.ne.s32.totalorder %s41, %s57
      %p59 = scmp.eq.s32.totalorder %s33, 0
      %p60 = por %p58, %p59
      %s61 = ssub.s32 %s27, %s34
      %p62 = scmp.eq.s32.totalorder %s61, 0
      %s64 = sadd.s32 %s63, 1
      %s65 = scalar_select %p62, %s63, %s64
      %p68 = pneg %p62
      %p69 = scmp.eq.s32.totalorder %s27, 1
      %p70 = por %p68, %p69
      %p71 = scmp.ne.s32.totalorder %s63, %s66
      %p72 = scmp.eq.s32.totalorder %s27, 0
      %p73 = por %p71, %p72
      %p74 = scmp.ne.s32.totalorder %s63, %s66
      %p75 = scmp.eq.s32.totalorder %s32, 1
      %p76 = por %p74, %p75
      %p77 = scmp.ne.s32.totalorder %s66, %s67
      %p78 = scmp.eq.s32.totalorder %s32, 0
      %p79 = por %p77, %p78
      %p80 = scmp.ne.s32.totalorder %s66, %s67
      %p81 = scmp.eq.s32.totalorder %s33, 1
      %p82 = por %p80, %p81
      %p84 = scmp.ne.s32.totalorder %s67, %s83
      %p85 = scmp.eq.s32.totalorder %s33, 0
      %p86 = por %p84, %p85
      %s88 = sadd.s32 %s87, 1
      %p91 = scmp.eq.s32.totalorder %s27, 1
      %p92 = scmp.ne.s32.totalorder %s87, %s89
      %p93 = scmp.eq.s32.totalorder %s27, 0
      %p94 = por %p92, %p93
      %p95 = scmp.ne.s32.totalorder %s87, %s89
      %p96 = scmp.eq.s32.totalorder %s32, 1
      %p97 = por %p95, %p96
      %p98 = scmp.ne.s32.totalorder %s89, %s90
      %p99 = scmp.eq.s32.totalorder %s32, 0
      %p100 = por %p98, %p99
      %p101 = scmp.ne.s32.totalorder %s89, %s90
      %p102 = scmp.eq.s32.totalorder %s33, 1
      %p103 = por %p101, %p102
      %p105 = scmp.ne.s32.totalorder %s90, %s104
      %p106 = scmp.eq.s32.totalorder %s33, 0
      %p107 = por %p105, %p106
      %s109 = sadd.s32 %s108, 1
      %p112 = scmp.eq.s32.totalorder %s27, 1
      %p113 = scmp.ne.s32.totalorder %s108, %s110
      %p114 = scmp.eq.s32.totalorder %s27, 0
      %p115 = por %p113, %p114
      %p116 = scmp.ne.s32.totalorder %s108, %s110
      %p117 = scmp.eq.s32.totalorder %s32, 1
      %p118 = por %p116, %p117
      %p119 = scmp.ne.s32.totalorder %s110, %s111
      %p120 = scmp.eq.s32.totalorder %s32, 0
      %p121 = por %p119, %p120
      %p122 = scmp.ne.s32.totalorder %s110, %s111
      %p123 = scmp.eq.s32.totalorder %s33, 1
      %p124 = por %p122, %p123
      %p126 = scmp.ne.s32.totalorder %s111, %s125
      %p127 = scmp.eq.s32.totalorder %s33, 0
      %p128 = por %p126, %p127
      %s130 = sadd.s32 %s129, 1
      %p133 = scmp.eq.s32.totalorder %s27, 1
      %p134 = scmp.ne.s32.totalorder %s129, %s131
      %p135 = scmp.eq.s32.totalorder %s27, 0
      %p136 = por %p134, %p135
      %p137 = scmp.ne.s32.totalorder %s129, %s131
      %p138 = scmp.eq.s32.totalorder %s32, 1
      %p139 = por %p137, %p138
      %p140 = scmp.ne.s32.totalorder %s131, %s132
      %p141 = scmp.eq.s32.totalorder %s32, 0
      %p142 = por %p140, %p141
      %p143 = scmp.ne.s32.totalorder %s131, %s132
      %p144 = scmp.eq.s32.totalorder %s33, 1
      %p145 = por %p143, %p144
      %p147 = scmp.ne.s32.totalorder %s132, %s146
      %p148 = scmp.eq.s32.totalorder %s33, 0
      %p149 = por %p147, %p148
      %s151 = sadd.s32 %s150, 1
      %p154 = scmp.eq.s32.totalorder %s27, 1
      %p155 = scmp.ne.s32.totalorder %s150, %s152
      %p156 = scmp.eq.s32.totalorder %s27, 0
      %p157 = por %p155, %p156
      %p158 = scmp.ne.s32.totalorder %s150, %s152
      %p159 = scmp.eq.s32.totalorder %s32, 1
      %p160 = por %p158, %p159
      %p161 = scmp.ne.s32.totalorder %s152, %s153
      %p162 = scmp.eq.s32.totalorder %s32, 0
      %p163 = por %p161, %p162
      %p164 = scmp.ne.s32.totalorder %s152, %s153
      %p165 = scmp.eq.s32.totalorder %s33, 1
      %p166 = por %p164, %p165
      %p168 = scmp.ne.s32.totalorder %s153, %s167
      %p169 = scmp.eq.s32.totalorder %s33, 0
      %p170 = por %p168, %p169
      %s172 = sadd.s32 %s171, 1
      %p175 = scmp.eq.s32.totalorder %s27, 1
      %p176 = scmp.ne.s32.totalorder %s171, %s173
      %p177 = scmp.eq.s32.totalorder %s27, 0
      %p178 = por %p176, %p177
      %p179 = scmp.ne.s32.totalorder %s171, %s173
      %p180 = scmp.eq.s32.totalorder %s32, 1
      %p181 = por %p179, %p180
      %p182 = scmp.ne.s32.totalorder %s173, %s174
      %p183 = scmp.eq.s32.totalorder %s32, 0
      %p184 = por %p182, %p183
      %p185 = scmp.ne.s32.totalorder %s173, %s174
      %p186 = scmp.eq.s32.totalorder %s33, 1
      %p187 = por %p185, %p186
      %p189 = scmp.ne.s32.totalorder %s174, %s188
      %p190 = scmp.eq.s32.totalorder %s33, 0
      %p191 = por %p189, %p190
      %s193 = sadd.s32 %s192, 1
      %p196 = scmp.eq.s32.totalorder %s27, 1
      %p197 = scmp.ne.s32.totalorder %s192, %s194
      %p198 = scmp.eq.s32.totalorder %s27, 0
      %p199 = por %p197, %p198
      %p200 = scmp.ne.s32.totalorder %s192, %s194
      %p201 = scmp.eq.s32.totalorder %s32, 1
      %p202 = por %p200, %p201
      %p203 = scmp.ne.s32.totalorder %s194, %s195
      %p204 = scmp.eq.s32.totalorder %s32, 0
      %p205 = por %p203, %p204
      %p206 = scmp.ne.s32.totalorder %s194, %s195
      %p207 = scmp.eq.s32.totalorder %s33, 1
      %p208 = por %p206, %p207
      %p210 = scmp.ne.s32.totalorder %s195, %s209
      %p211 = scmp.eq.s32.totalorder %s33, 0
      %p212 = por %p210, %p211
      %s214 = sadd.s32 %s213, 1
      %p217 = scmp.eq.s32.totalorder %s27, 1
      %p218 = scmp.ne.s32.totalorder %s213, %s215
      %p219 = scmp.eq.s32.totalorder %s27, 0
      %p220 = por %p218, %p219
      %p221 = scmp.ne.s32.totalorder %s213, %s215
      %p222 = scmp.eq.s32.totalorder %s32, 1
      %p223 = por %p221, %p222
      %p224 = scmp.ne.s32.totalorder %s215, %s216
      %p225 = scmp.eq.s32.totalorder %s32, 0
      %p226 = por %p224, %p225
      %p227 = scmp.ne.s32.totalorder %s215, %s216
      %p228 = scmp.eq.s32.totalorder %s33, 1
      %p229 = por %p227, %p228
      %p231 = scmp.ne.s32.totalorder %s216, %s230
      %p232 = scmp.eq.s32.totalorder %s33, 0
      %p233 = por %p231, %p232
      %s235 = sadd.s32 %s234, 1
      %p238 = scmp.eq.s32.totalorder %s27, 1
      %p239 = scmp.ne.s32.totalorder %s234, %s236
      %p240 = scmp.eq.s32.totalorder %s27, 0
      %p241 = por %p239, %p240
      %p242 = scmp.ne.s32.totalorder %s234, %s236
      %p243 = scmp.eq.s32.totalorder %s32, 1
      %p244 = por %p242, %p243
      %p245 = scmp.ne.s32.totalorder %s236, %s237
      %p246 = scmp.eq.s32.totalorder %s32, 0
      %p247 = por %p245, %p246
      %p248 = scmp.ne.s32.totalorder %s236, %s237
      %p249 = scmp.eq.s32.totalorder %s33, 1
      %p250 = por %p248, %p249
      %p252 = scmp.ne.s32.totalorder %s237, %s251
      %p253 = scmp.eq.s32.totalorder %s33, 0
      %p254 = por %p252, %p253
      %s256 = sadd.s32 %s255, 1
      %p259 = scmp.eq.s32.totalorder %s27, 1
      %p260 = scmp.ne.s32.totalorder %s255, %s257
      %p261 = scmp.eq.s32.totalorder %s27, 0
      %p262 = por %p260, %p261
      %p263 = scmp.ne.s32.totalorder %s255, %s257
      %p264 = scmp.eq.s32.totalorder %s32, 1
      %p265 = por %p263, %p264
      %p266 = scmp.ne.s32.totalorder %s257, %s258
      %p267 = scmp.eq.s32.totalorder %s32, 0
      %p268 = por %p266, %p267
      %p269 = scmp.ne.s32.totalorder %s257, %s258
      %p270 = scmp.eq.s32.totalorder %s33, 1
      %p271 = por %p269, %p270
      %p273 = scmp.ne.s32.totalorder %s258, %s272
      %p274 = scmp.eq.s32.totalorder %s33, 0
      %p275 = por %p273, %p274
      %s277 = sadd.s32 %s276, 1
      %p280 = scmp.eq.s32.totalorder %s27, 1
      %p281 = scmp.ne.s32.totalorder %s276, %s278
      %p282 = scmp.eq.s32.totalorder %s27, 0
      %p283 = por %p281, %p282
      %p284 = scmp.ne.s32.totalorder %s276, %s278
      %p285 = scmp.eq.s32.totalorder %s32, 1
      %p286 = por %p284, %p285
      %p287 = scmp.ne.s32.totalorder %s278, %s279
      %p288 = scmp.eq.s32.totalorder %s32, 0
      %p289 = por %p287, %p288
      %p290 = scmp.ne.s32.totalorder %s278, %s279
      %p291 = scmp.eq.s32.totalorder %s33, 1
      %p292 = por %p290, %p291
      %p294 = scmp.ne.s32.totalorder %s279, %s293
      %p295 = scmp.eq.s32.totalorder %s33, 0
      %p296 = por %p294, %p295
      %s298 = sadd.s32 %s297, 1
      %p301 = scmp.eq.s32.totalorder %s27, 1
      %p302 = scmp.ne.s32.totalorder %s297, %s299
      %p303 = scmp.eq.s32.totalorder %s27, 0
      %p304 = por %p302, %p303
      %p305 = scmp.ne.s32.totalorder %s297, %s299
      %p306 = scmp.eq.s32.totalorder %s32, 1
      %p307 = por %p305, %p306
      %p308 = scmp.ne.s32.totalorder %s299, %s300
      %p309 = scmp.eq.s32.totalorder %s32, 0
      %p310 = por %p308, %p309
      %p311 = scmp.ne.s32.totalorder %s299, %s300
      %p312 = scmp.eq.s32.totalorder %s33, 1
      %p313 = por %p311, %p312
      %p315 = scmp.ne.s32.totalorder %s300, %s314
      %p316 = scmp.eq.s32.totalorder %s33, 0
      %p317 = por %p315, %p316
      %s319 = sadd.s32 %s318, 1
      %p322 = scmp.eq.s32.totalorder %s27, 1
      %p323 = scmp.ne.s32.totalorder %s318, %s320
      %p324 = scmp.eq.s32.totalorder %s27, 0
      %p325 = por %p323, %p324
      %p326 = scmp.ne.s32.totalorder %s318, %s320
      %p327 = scmp.eq.s32.totalorder %s32, 1
      %p328 = por %p326, %p327
      %p329 = scmp.ne.s32.totalorder %s320, %s321
      %p330 = scmp.eq.s32.totalorder %s32, 0
      %p331 = por %p329, %p330
      %p332 = scmp.ne.s32.totalorder %s320, %s321
      %p333 = scmp.eq.s32.totalorder %s33, 1
      %p334 = por %p332, %p333
      %p336 = scmp.ne.s32.totalorder %s321, %s335
      %p337 = scmp.eq.s32.totalorder %s33, 0
      %p338 = por %p336, %p337
      %s340 = sadd.s32 %s339, 1
      %p343 = scmp.eq.s32.totalorder %s27, 1
      %p344 = scmp.ne.s32.totalorder %s339, %s341
      %p345 = scmp.eq.s32.totalorder %s27, 0
      %p346 = por %p344, %p345
      %p347 = scmp.ne.s32.totalorder %s339, %s341
      %p348 = scmp.eq.s32.totalorder %s32, 1
      %p349 = por %p347, %p348
      %p350 = scmp.ne.s32.totalorder %s341, %s342
      %p351 = scmp.eq.s32.totalorder %s32, 0
      %p352 = por %p350, %p351
      %p353 = scmp.ne.s32.totalorder %s341, %s342
      %p354 = scmp.eq.s32.totalorder %s33, 1
      %p355 = por %p353, %p354
      %p357 = scmp.ne.s32.totalorder %s342, %s356
      %p358 = scmp.eq.s32.totalorder %s33, 0
      %p359 = por %p357, %p358
      %s361 = sadd.s32 %s360, 1
      %p364 = scmp.eq.s32.totalorder %s27, 1
      %p365 = scmp.ne.s32.totalorder %s360, %s362
      %p366 = scmp.eq.s32.totalorder %s27, 0
      %p367 = por %p365, %p366
      %p368 = scmp.ne.s32.totalorder %s360, %s362
      %p369 = scmp.eq.s32.totalorder %s32, 1
      %p370 = por %p368, %p369
      %p371 = scmp.ne.s32.totalorder %s362, %s363
      %p372 = scmp.eq.s32.totalorder %s32, 0
      %p373 = por %p371, %p372
      %p374 = scmp.ne.s32.totalorder %s362, %s363
      %p375 = scmp.eq.s32.totalorder %s33, 1
      %p376 = por %p374, %p375
      %p378 = scmp.ne.s32.totalorder %s363, %s377
      %p379 = scmp.eq.s32.totalorder %s33, 0
      %p380 = por %p378, %p379
      %s382 = sadd.s32 %s381, 1
      %p385 = scmp.eq.s32.totalorder %s27, 1
      %p386 = scmp.ne.s32.totalorder %s381, %s383
      %p387 = scmp.eq.s32.totalorder %s27, 0
      %p388 = por %p386, %p387
      %p389 = scmp.ne.s32.totalorder %s381, %s383
      %p390 = scmp.eq.s32.totalorder %s32, 1
      %p391 = por %p389, %p390
      %p392 = scmp.ne.s32.totalorder %s383, %s384
      %p393 = scmp.eq.s32.totalorder %s32, 0
      %p394 = por %p392, %p393
      %p395 = scmp.ne.s32.totalorder %s383, %s384
      %p396 = scmp.eq.s32.totalorder %s33, 1
      %p397 = por %p395, %p396
      %p399 = scmp.ne.s32.totalorder %s384, %s398
      %p400 = scmp.eq.s32.totalorder %s33, 0
      %p401 = por %p399, %p400
      %s403 = sadd.s32 %s402, 1
      %p406 = scmp.eq.s32.totalorder %s27, 1
      %p407 = scmp.ne.s32.totalorder %s402, %s404
      %p408 = scmp.eq.s32.totalorder %s27, 0
      %p409 = por %p407, %p408
      %p410 = scmp.ne.s32.totalorder %s402, %s404
      %p411 = scmp.eq.s32.totalorder %s32, 1
      %p412 = por %p410, %p411
      %p413 = scmp.ne.s32.totalorder %s404, %s405
      %p414 = scmp.eq.s32.totalorder %s32, 0
      %p415 = por %p413, %p414
      %p416 = scmp.ne.s32.totalorder %s404, %s405
      %p417 = scmp.eq.s32.totalorder %s33, 1
      %p418 = por %p416, %p417
      %p420 = scmp.ne.s32.totalorder %s405, %s419
      %p421 = scmp.eq.s32.totalorder %s33, 0
      %p422 = por %p420, %p421
      %s423 = ssub.s32 %s27, %s34
      %p424 = scmp.eq.s32.totalorder %s423, 0
      %s426 = sadd.s32 %s425, 1
      %s427 = scalar_select %p424, %s425, %s426
      %p430 = pneg %p424
      %p431 = scmp.eq.s32.totalorder %s27, 1
      %p432 = por %p430, %p431
      %p433 = scmp.ne.s32.totalorder %s425, %s428
      %p434 = scmp.eq.s32.totalorder %s27, 0
      %p435 = por %p433, %p434
      %p436 = scmp.ne.s32.totalorder %s425, %s428
      %p437 = scmp.eq.s32.totalorder %s32, 1
      %p438 = por %p436, %p437
      %p439 = scmp.ne.s32.totalorder %s428, %s429
      %p440 = scmp.eq.s32.totalorder %s32, 0
      %p441 = por %p439, %p440
      %p442 = scmp.ne.s32.totalorder %s428, %s429
      %p443 = scmp.eq.s32.totalorder %s33, 1
      %p444 = por %p442, %p443
      %p446 = scmp.ne.s32.totalorder %s429, %s445
      %p447 = scmp.eq.s32.totalorder %s33, 0
      %p448 = por %p446, %p447
      %p449 = scmp.le.s32.totalorder 1, %s27
      %p450 = scmp.lt.s32.totalorder %s27, 3
      %p451 = pnand %p449, %p450
      %p452 = pneg %p451
      // Predicated region
      $region9: #{tpu_custom_call.1} parent=5 // pred_check
        _
      $region10: #{tpu_custom_call.1} parent=5 // pred_check_branch
        %454 = sbr.rel (%p451) target = $region12
      $region11: #{tpu_custom_call.1} parent=5 // pred_region
        %s455 = ssub.s32 %s27, 1
        // Predicated region
        $region13: #{tpu_custom_call.1} parent=11 // pred_check
          %p456 = pneg %p100
        $region14: #{tpu_custom_call.1} parent=11 // pred_check_branch
          %458 = sbr.rel (%p456) target = $region16
        $region15: #{tpu_custom_call.1} parent=11 // pred_region
          _
        $region16: #{tpu_custom_call.1} parent=11 // pred_fallthru
          _
        // Predicated region
        $region17: #{tpu_custom_call.1} parent=11 // pred_check
          %p459 = pneg %p121
        $region18: #{tpu_custom_call.1} parent=11 // pred_check_branch
          %461 = sbr.rel (%p459) target = $region20
        $region19: #{tpu_custom_call.1} parent=11 // pred_region
          _
        $region20: #{tpu_custom_call.1} parent=11 // pred_fallthru
          _
        // Predicated region
        $region21: #{tpu_custom_call.1} parent=11 // pred_check
          %p462 = pneg %p142
        $region22: #{tpu_custom_call.1} parent=11 // pred_check_branch
          %464 = sbr.rel (%p462) target = $region24
        $region23: #{tpu_custom_call.1} parent=11 // pred_region
          _
        $region24: #{tpu_custom_call.1} parent=11 // pred_fallthru
          _
        // Predicated region
        $region25: #{tpu_custom_call.1} parent=11 // pred_check
          %p465 = pneg %p163
        $region26: #{tpu_custom_call.1} parent=11 // pred_check_branch
          %467 = sbr.rel (%p465) target = $region28
        $region27: #{tpu_custom_call.1} parent=11 // pred_region
          _
        $region28: #{tpu_custom_call.1} parent=11 // pred_fallthru
          _
        // Predicated region
        $region29: #{tpu_custom_call.1} parent=11 // pred_check
          %p468 = pneg %p184
        $region30: #{tpu_custom_call.1} parent=11 // pred_check_branch
          %470 = sbr.rel (%p468) target = $region32
        $region31: #{tpu_custom_call.1} parent=11 // pred_region
          _
        $region32: #{tpu_custom_call.1} parent=11 // pred_fallthru
          _
        // Predicated region
        $region33: #{tpu_custom_call.1} parent=11 // pred_check
          %p471 = pneg %p205
        $region34: #{tpu_custom_call.1} parent=11 // pred_check_branch
          %473 = sbr.rel (%p471) target = $region36
        $region35: #{tpu_custom_call.1} parent=11 // pred_region
          _
        $region36: #{tpu_custom_call.1} parent=11 // pred_fallthru
          _
        // Predicated region
        $region37: #{tpu_custom_call.1} parent=11 // pred_check
          %p474 = pneg %p226
        $region38: #{tpu_custom_call.1} parent=11 // pred_check_branch
          %476 = sbr.rel (%p474) target = $region40
        $region39: #{tpu_custom_call.1} parent=11 // pred_region
          _
        $region40: #{tpu_custom_call.1} parent=11 // pred_fallthru
          _
        // Predicated region
        $region41: #{tpu_custom_call.1} parent=11 // pred_check
          %p477 = pneg %p247
        $region42: #{tpu_custom_call.1} parent=11 // pred_check_branch
          %479 = sbr.rel (%p477) target = $region44
        $region43: #{tpu_custom_call.1} parent=11 // pred_region
          _
        $region44: #{tpu_custom_call.1} parent=11 // pred_fallthru
          _
        // Predicated region
        $region45: #{tpu_custom_call.1} parent=11 // pred_check
          %p480 = pneg %p268
        $region46: #{tpu_custom_call.1} parent=11 // pred_check_branch
          %482 = sbr.rel (%p480) target = $region48
        $region47: #{tpu_custom_call.1} parent=11 // pred_region
          _
        $region48: #{tpu_custom_call.1} parent=11 // pred_fallthru
          _
        // Predicated region
        $region49: #{tpu_custom_call.1} parent=11 // pred_check
          %p483 = pneg %p289
        $region50: #{tpu_custom_call.1} parent=11 // pred_check_branch
          %485 = sbr.rel (%p483) target = $region52
        $region51: #{tpu_custom_call.1} parent=11 // pred_region
          _
        $region52: #{tpu_custom_call.1} parent=11 // pred_fallthru
          _
        // Predicated region
        $region53: #{tpu_custom_call.1} parent=11 // pred_check
          %p486 = pneg %p310
        $region54: #{tpu_custom_call.1} parent=11 // pred_check_branch
          %488 = sbr.rel (%p486) target = $region56
        $region55: #{tpu_custom_call.1} parent=11 // pred_region
          _
        $region56: #{tpu_custom_call.1} parent=11 // pred_fallthru
          _
        // Predicated region
        $region57: #{tpu_custom_call.1} parent=11 // pred_check
          %p489 = pneg %p331
        $region58: #{tpu_custom_call.1} parent=11 // pred_check_branch
          %491 = sbr.rel (%p489) target = $region60
        $region59: #{tpu_custom_call.1} parent=11 // pred_region
          _
        $region60: #{tpu_custom_call.1} parent=11 // pred_fallthru
          _
        // Predicated region
        $region61: #{tpu_custom_call.1} parent=11 // pred_check
          %p492 = pneg %p352
        $region62: #{tpu_custom_call.1} parent=11 // pred_check_branch
          %494 = sbr.rel (%p492) target = $region64
        $region63: #{tpu_custom_call.1} parent=11 // pred_region
          _
        $region64: #{tpu_custom_call.1} parent=11 // pred_fallthru
          _
        // Predicated region
        $region65: #{tpu_custom_call.1} parent=11 // pred_check
          %p495 = pneg %p373
        $region66: #{tpu_custom_call.1} parent=11 // pred_check_branch
          %497 = sbr.rel (%p495) target = $region68
        $region67: #{tpu_custom_call.1} parent=11 // pred_region
          _
        $region68: #{tpu_custom_call.1} parent=11 // pred_fallthru
          _
        // Predicated region
        $region69: #{tpu_custom_call.1} parent=11 // pred_check
          %p498 = pneg %p394
        $region70: #{tpu_custom_call.1} parent=11 // pred_check_branch
          %500 = sbr.rel (%p498) target = $region72
        $region71: #{tpu_custom_call.1} parent=11 // pred_region
          _
        $region72: #{tpu_custom_call.1} parent=11 // pred_fallthru
          _
        // Predicated region
        $region73: #{tpu_custom_call.1} parent=11 // pred_check
          %p501 = pneg %p415
        $region74: #{tpu_custom_call.1} parent=11 // pred_check_branch
          %503 = sbr.rel (%p501) target = $region76
        $region75: #{tpu_custom_call.1} parent=11 // pred_region
          _
        $region76: #{tpu_custom_call.1} parent=11 // pred_fallthru
          _
      $region12: #{tpu_custom_call.1} parent=5 // pred_fallthru
        _
      %p504 = scmp.lt.s32.totalorder %s27, 2
      // Predicated region
      $region77: #{tpu_custom_call.1} parent=5 // pred_check
        %p505 = pneg %p504
      $region78: #{tpu_custom_call.1} parent=5 // pred_check_branch
        %507 = sbr.rel (%p505) target = $region80
      $region79: #{tpu_custom_call.1} parent=5 // pred_region
        // Predicated region
        $region81: #{tpu_custom_call.1} parent=79 // pred_check
          %p508 = pneg %p47
        $region82: #{tpu_custom_call.1} parent=79 // pred_check_branch
          %510 = sbr.rel (%p508) target = $region84
        $region83: #{tpu_custom_call.1} parent=79 // pred_region
          %p511 = scmp.lt.s32.totalorder %s27, 1
          %s512 = scalar_select %p511, %s27, 1
          %s513 = smul.addr %s512, 32
          %s514 = smul.addr %s513, 4
          %s515 = scalar_lea.vmem %s0, %s514
        $region84: #{tpu_custom_call.1} parent=79 // pred_fallthru
          _
        // Predicated region
        $region85: #{tpu_custom_call.1} parent=79 // pred_check
          %p516 = pneg %p73
        $region86: #{tpu_custom_call.1} parent=79 // pred_check_branch
          %518 = sbr.rel (%p516) target = $region88
        $region87: #{tpu_custom_call.1} parent=79 // pred_region
          %p519 = scmp.lt.s32.totalorder %s27, 1
          %s520 = scalar_select %p519, %s27, 1
          %s521 = smul.addr %s520, 32
          %s522 = smul.addr %s521, 4
          %s523 = scalar_lea.vmem %s1, %s522
        $region88: #{tpu_custom_call.1} parent=79 // pred_fallthru
          _
      $region80: #{tpu_custom_call.1} parent=5 // pred_fallthru
        _
      %p524 = scmp.le.s32.totalorder 1, %s27
      %p525 = scmp.lt.s32.totalorder %s27, 3
      %p526 = pnand %p524, %p525
      %p527 = pneg %p526
      // Predicated region
      $region89: #{tpu_custom_call.1} parent=5 // pred_check
        _
      $region90: #{tpu_custom_call.1} parent=5 // pred_check_branch
        %529 = sbr.rel (%p526) target = $region92
      $region91: #{tpu_custom_call.1} parent=5 // pred_region
        %s530 = ssub.s32 %s27, 1
        %p531 = scmp.lt.s32.totalorder %s32, 1
        %s532 = scalar_select %p531, %s32, 1
        %s533 = smul.addr %s532, 32
        %s534 = smul.addr %s533, 4
        %s535 = scalar_lea.vmem %s0, %s534
        %p536 = pneg %p53
        %p537 = pneg %p50
        %p538 = scmp.lt.s32.totalorder %s32, 1
        %s539 = scalar_select %p538, %s32, 1
        %s540 = smul.addr %s539, 32
        %s541 = smul.addr %s540, 4
        %s542 = scalar_lea.vmem %s1, %s541
        %p543 = pneg %p79
        %p544 = pneg %p76
        %p545 = pneg %p100
        %p546 = pneg %p97
        %p547 = pneg %p121
        %p548 = pneg %p118
        %p549 = pneg %p142
        %p550 = pneg %p139
        %p551 = pneg %p163
        %p552 = pneg %p160
        %p553 = pneg %p184
        %p554 = pneg %p181
        %p555 = pneg %p205
        %p556 = pneg %p202
        %p557 = pneg %p226
        %p558 = pneg %p223
        %p559 = pneg %p247
        %p560 = pneg %p244
        %p561 = pneg %p268
        %p562 = pneg %p265
        %p563 = pneg %p289
        %p564 = pneg %p286
        %p565 = pneg %p310
        %p566 = pneg %p307
        %p567 = pneg %p331
        %p568 = pneg %p328
        %p569 = pneg %p352
        %p570 = pneg %p349
        %p571 = pneg %p373
        %p572 = pneg %p370
        %p573 = pneg %p394
        %p574 = pneg %p391
        %p575 = pneg %p415
        %p576 = pneg %p412
        %p577 = pneg %p441
        %p578 = pneg %p438
        %s579 = sand.u32 %s428, 1
        %s580 = scalar_lea.sflag [#allocation4], %s579
        %s581 = sand.u32 %s428, 1
        %s582 = smul.addr %s581, 256
        %s583 = scalar_lea.vmem [#allocation3], %s582
        %p584 = scmp.lt.s32.totalorder %s32, 1
        %s585 = scalar_select %p584, %s32, 1
        %s586 = smul.addr %s585, 32
        %s587 = smul.addr %s586, 4
        %s588 = scalar_lea.vmem %s0, %s587
        %p589 = scmp.lt.s32.totalorder %s32, 1
        %s590 = scalar_select %p589, %s32, 1
        %s591 = smul.addr %s590, 32
        %s592 = smul.addr %s591, 4
        %s593 = scalar_lea.vmem %s1, %s592
        %v595 = vld [vmem:[%s588] sm:$0xf]
        %v596 = vld [vmem:[%s588 + $0x4] sm:$0xf]
        %v597 = vld [vmem:[%s588 + $0x8] sm:$0xf]
        %v598 = vld [vmem:[%s588 + $0xc] sm:$0xf]
        %v599 = vld [vmem:[%s588 + $0x10] sm:$0xf]
        %v600 = vld [vmem:[%s588 + $0x14] sm:$0xf]
        %v601 = vld [vmem:[%s588 + $0x18] sm:$0xf]
        %v602 = vld [vmem:[%s588 + $0x1c] sm:$0xf]
        %v603 = vld [vmem:[%s588 + $0x20] sm:$0xf]
        %v604 = vld [vmem:[%s588 + $0x24] sm:$0xf]
        %v605 = vld [vmem:[%s588 + $0x28] sm:$0xf]
        %v606 = vld [vmem:[%s588 + $0x2c] sm:$0xf]
        %v607 = vld [vmem:[%s588 + $0x30] sm:$0xf]
        %v608 = vld [vmem:[%s588 + $0x34] sm:$0xf]
        %v609 = vld [vmem:[%s588 + $0x38] sm:$0xf]
        %v610 = vld [vmem:[%s588 + $0x3c] sm:$0xf]
        %v611 = vld [vmem:[%s588 + $0x40] sm:$0xf]
        %v612 = vld [vmem:[%s588 + $0x44] sm:$0xf]
        %v613 = vld [vmem:[%s588 + $0x48] sm:$0xf]
        %v614 = vld [vmem:[%s588 + $0x4c] sm:$0xf]
        %v615 = vld [vmem:[%s588 + $0x50] sm:$0xf]
        %v616 = vld [vmem:[%s588 + $0x54] sm:$0xf]
        %v617 = vld [vmem:[%s588 + $0x58] sm:$0xf]
        %v618 = vld [vmem:[%s588 + $0x5c] sm:$0xf]
        %v619 = vld [vmem:[%s588 + $0x60] sm:$0xf]
        %v620 = vld [vmem:[%s588 + $0x64] sm:$0xf]
        %v621 = vld [vmem:[%s588 + $0x68] sm:$0xf]
        %v622 = vld [vmem:[%s588 + $0x6c] sm:$0xf]
        %v623 = vld [vmem:[%s588 + $0x70] sm:$0xf]
        %v624 = vld [vmem:[%s588 + $0x74] sm:$0xf]
        %v625 = vld [vmem:[%s588 + $0x78] sm:$0xf]
        %v626 = vld [vmem:[%s588 + $0x7c] sm:$0xf]
        %v627 = vld [vmem:[%s2] sm:$0xf]
        %v628 = vld [vmem:[%s2 + $0x4] sm:$0xf]
        %v629 = vld [vmem:[%s2 + $0x8] sm:$0xf]
        %v630 = vld [vmem:[%s2 + $0xc] sm:$0xf]
        %v663 = vunpack.c.l.b16 %v595
        %v664 = vunpack.c.l.b16 %v596
        %v665 = vunpack.c.l.b16 %v597
        %v666 = vunpack.c.l.b16 %v598
        %v667 = vunpack.c.l.b16 %v599
        %v668 = vunpack.c.l.b16 %v600
        %v669 = vunpack.c.l.b16 %v601
        %v670 = vunpack.c.l.b16 %v602
        %v671 = vunpack.c.l.b16 %v603
        %v672 = vunpack.c.l.b16 %v604
        %v673 = vunpack.c.l.b16 %v605
        %v674 = vunpack.c.l.b16 %v606
        %v675 = vunpack.c.l.b16 %v607
        %v676 = vunpack.c.l.b16 %v608
        %v677 = vunpack.c.l.b16 %v609
        %v678 = vunpack.c.l.b16 %v610
        %v679 = vunpack.c.l.b16 %v611
        %v680 = vunpack.c.l.b16 %v612
        %v681 = vunpack.c.l.b16 %v613
        %v682 = vunpack.c.l.b16 %v614
        %v683 = vunpack.c.l.b16 %v615
        %v684 = vunpack.c.l.b16 %v616
        %v685 = vunpack.c.l.b16 %v617
        %v686 = vunpack.c.l.b16 %v618
        %v687 = vunpack.c.l.b16 %v619
        %v688 = vunpack.c.l.b16 %v620
        %v689 = vunpack.c.l.b16 %v621
        %v690 = vunpack.c.l.b16 %v622
        %v691 = vunpack.c.l.b16 %v623
        %v692 = vunpack.c.l.b16 %v624
        %v693 = vunpack.c.l.b16 %v625
        %v694 = vunpack.c.l.b16 %v626
        %v695 = vpack.c.b16 %v664, %v663
        %v696 = vpack.c.b16 %v666, %v665
        %v697 = vpack.c.b16 %v668, %v667
        %v698 = vpack.c.b16 %v670, %v669
        %v699 = vpack.c.b16 %v672, %v671
        %v700 = vpack.c.b16 %v674, %v673
        %v701 = vpack.c.b16 %v676, %v675
        %v702 = vpack.c.b16 %v678, %v677
        %v703 = vpack.c.b16 %v680, %v679
        %v704 = vpack.c.b16 %v682, %v681
        %v705 = vpack.c.b16 %v684, %v683
        %v706 = vpack.c.b16 %v686, %v685
        %v707 = vpack.c.b16 %v688, %v687
        %v708 = vpack.c.b16 %v690, %v689
        %v709 = vpack.c.b16 %v692, %v691
        %v710 = vpack.c.b16 %v694, %v693
        %v715 = vunpack.c.l.b16 %v627
        %v716 = vunpack.c.l.b16 %v628
        %v717 = vunpack.c.l.b16 %v629
        %v718 = vunpack.c.l.b16 %v630
        %v719 = vpack.c.b16 %v716, %v715
        %v720 = vpack.c.b16 %v718, %v717
        %vm723 = vcmask 261120
        %v725 = vsel %vm723, %v695, 0
        %v728 = vsel %vm723, %v696, 0
        %v731 = vsel %vm723, %v697, 0
        %v734 = vsel %vm723, %v698, 0
        %v737 = vsel %vm723, %v699, 0
        %v740 = vsel %vm723, %v700, 0
        %v743 = vsel %vm723, %v701, 0
        %v746 = vsel %vm723, %v702, 0
        %v749 = vsel %vm723, %v703, 0
        %v752 = vsel %vm723, %v704, 0
        %v755 = vsel %vm723, %v705, 0
        %v758 = vsel %vm723, %v706, 0
        %v761 = vsel %vm723, %v707, 0
        %v764 = vsel %vm723, %v708, 0
        %v767 = vsel %vm723, %v709, 0
        %v770 = vsel %vm723, %v710, 0
        %772 = vmatprep.subr.bf16.mxu0 0
        %773 = vmatpush1.bf16.msra.mxu0 0
        %774 = vmatprep.subr.bf16.mxu0 0
        %775 = vmatpush1.bf16.msra.mxu0 0
        %776 = vmatprep.subr.bf16.mxu0 0
        %777 = vmatpush1.bf16.msra.mxu0 0
        %778 = vmatprep.subr.bf16.mxu0 0
        %779 = vmatpush1.bf16.msra.mxu0 0
        %780 = vmatprep.subr.bf16.mxu0 0
        %781 = vmatpush1.bf16.msra.mxu0 0
        %782 = vmatprep.subr.bf16.mxu0 0
        %783 = vmatpush1.bf16.msra.mxu0 0
        %784 = vmatprep.subr.bf16.mxu0 0
        %785 = vmatpush1.bf16.msra.mxu0 %v720
        %786 = vmatprep.subr.bf16.mxu0 0
        %787 = vmatpush1.bf16.msra.mxu0 %v719
        %788 = vmatprep.subr.bf16.mxu0 0
        %789 = vmatpush2.bf16.msra.mxu0 0
        %790 = vmatprep.subr.bf16.mxu0 0
        %791 = vmatpush2.bf16.msra.mxu0 0
        %792 = vmatprep.subr.bf16.mxu0 0
        %793 = vmatpush2.bf16.msra.mxu0 0
        %794 = vmatprep.subr.bf16.mxu0 0
        %795 = vmatpush2.bf16.msra.mxu0 0
        %796 = vmatprep.subr.bf16.mxu0 0
        %797 = vmatpush2.bf16.msra.mxu0 0
        %798 = vmatprep.subr.bf16.mxu0 0
        %799 = vmatpush2.bf16.msra.mxu0 0
        %800 = vmatprep.subr.bf16.mxu0 0
        %801 = vmatpush2.bf16.msra.mxu0 0
        %802 = vmatprep.subr.bf16.mxu0 0
        %803 = vmatpush2.bf16.msra.mxu0 0
        %804 = vmatprep.mubr.bf16.mxu0 0
        %805 = vmatmul.mubr.bf16.gmra.mxu0 %v725
        %v806 = vpop.f32.mrf.mxu0
        %v807 = vadd.f32 0.0, %v806
        %v808 = vpop.f32.mrf.mxu0
        %v809 = vpop.f32.mrf.mxu0
        %v810 = vadd.f32 0.0, %v809
        %v811 = vpop.f32.mrf.mxu0
        %812 = vmatprep.mubr.bf16.mxu0 0
        %813 = vmatmul.mubr.bf16.gmra.mxu0 %v728
        %v814 = vpop.f32.mrf.mxu0
        %v815 = vadd.f32 0.0, %v814
        %v816 = vpop.f32.mrf.mxu0
        %v817 = vpop.f32.mrf.mxu0
        %v818 = vadd.f32 0.0, %v817
        %v819 = vpop.f32.mrf.mxu0
        %820 = vmatprep.mubr.bf16.mxu0 0
        %821 = vmatmul.mubr.bf16.gmra.mxu0 %v731
        %v822 = vpop.f32.mrf.mxu0
        %v823 = vadd.f32 0.0, %v822
        %v824 = vpop.f32.mrf.mxu0
        %v825 = vpop.f32.mrf.mxu0
        %v826 = vadd.f32 0.0, %v825
        %v827 = vpop.f32.mrf.mxu0
        %828 = vmatprep.mubr.bf16.mxu0 0
        %829 = vmatmul.mubr.bf16.gmra.mxu0 %v734
        %v830 = vpop.f32.mrf.mxu0
        %v831 = vadd.f32 0.0, %v830
        %v832 = vpop.f32.mrf.mxu0
        %v833 = vpop.f32.mrf.mxu0
        %v834 = vadd.f32 0.0, %v833
        %v835 = vpop.f32.mrf.mxu0
        %836 = vmatprep.mubr.bf16.mxu0 0
        %837 = vmatmul.mubr.bf16.gmra.mxu0 %v737
        %v838 = vpop.f32.mrf.mxu0
        %v839 = vadd.f32 0.0, %v838
        %v840 = vpop.f32.mrf.mxu0
        %v841 = vpop.f32.mrf.mxu0
        %v842 = vadd.f32 0.0, %v841
        %v843 = vpop.f32.mrf.mxu0
        %844 = vmatprep.mubr.bf16.mxu0 0
        %845 = vmatmul.mubr.bf16.gmra.mxu0 %v740
        %v846 = vpop.f32.mrf.mxu0
        %v847 = vadd.f32 0.0, %v846
        %v848 = vpop.f32.mrf.mxu0
        %v849 = vpop.f32.mrf.mxu0
        %v850 = vadd.f32 0.0, %v849
        %v851 = vpop.f32.mrf.mxu0
        %852 = vmatprep.mubr.bf16.mxu0 0
        %853 = vmatmul.mubr.bf16.gmra.mxu0 %v743
        %v854 = vpop.f32.mrf.mxu0
        %v855 = vadd.f32 0.0, %v854
        %v856 = vpop.f32.mrf.mxu0
        %v857 = vpop.f32.mrf.mxu0
        %v858 = vadd.f32 0.0, %v857
        %v859 = vpop.f32.mrf.mxu0
        %860 = vmatprep.mubr.bf16.mxu0 0
        %861 = vmatmul.mubr.bf16.gmra.mxu0 %v746
        %v862 = vpop.f32.mrf.mxu0
        %v863 = vadd.f32 0.0, %v862
        %v864 = vpop.f32.mrf.mxu0
        %v865 = vpop.f32.mrf.mxu0
        %v866 = vadd.f32 0.0, %v865
        %v867 = vpop.f32.mrf.mxu0
        %868 = vmatprep.mubr.bf16.mxu0 0
        %869 = vmatmul.mubr.bf16.gmra.mxu0 %v749
        %v870 = vpop.f32.mrf.mxu0
        %v871 = vadd.f32 0.0, %v870
        %v872 = vpop.f32.mrf.mxu0
        %v873 = vpop.f32.mrf.mxu0
        %v874 = vadd.f32 0.0, %v873
        %v875 = vpop.f32.mrf.mxu0
        %876 = vmatprep.mubr.bf16.mxu0 0
        %877 = vmatmul.mubr.bf16.gmra.mxu0 %v752
        %v878 = vpop.f32.mrf.mxu0
        %v879 = vadd.f32 0.0, %v878
        %v880 = vpop.f32.mrf.mxu0
        %v881 = vpop.f32.mrf.mxu0
        %v882 = vadd.f32 0.0, %v881
        %v883 = vpop.f32.mrf.mxu0
        %884 = vmatprep.mubr.bf16.mxu0 0
        %885 = vmatmul.mubr.bf16.gmra.mxu0 %v755
        %v886 = vpop.f32.mrf.mxu0
        %v887 = vadd.f32 0.0, %v886
        %v888 = vpop.f32.mrf.mxu0
        %v889 = vpop.f32.mrf.mxu0
        %v890 = vadd.f32 0.0, %v889
        %v891 = vpop.f32.mrf.mxu0
        %892 = vmatprep.mubr.bf16.mxu0 0
        %893 = vmatmul.mubr.bf16.gmra.mxu0 %v758
        %v894 = vpop.f32.mrf.mxu0
        %v895 = vadd.f32 0.0, %v894
        %v896 = vpop.f32.mrf.mxu0
        %v897 = vpop.f32.mrf.mxu0
        %v898 = vadd.f32 0.0, %v897
        %v899 = vpop.f32.mrf.mxu0
        %900 = vmatprep.mubr.bf16.mxu0 0
        %901 = vmatmul.mubr.bf16.gmra.mxu0 %v761
        %v902 = vpop.f32.mrf.mxu0
        %v903 = vadd.f32 0.0, %v902
        %v904 = vpop.f32.mrf.mxu0
        %v905 = vpop.f32.mrf.mxu0
        %v906 = vadd.f32 0.0, %v905
        %v907 = vpop.f32.mrf.mxu0
        %908 = vmatprep.mubr.bf16.mxu0 0
        %909 = vmatmul.mubr.bf16.gmra.mxu0 %v764
        %v910 = vpop.f32.mrf.mxu0
        %v911 = vadd.f32 0.0, %v910
        %v912 = vpop.f32.mrf.mxu0
        %v913 = vpop.f32.mrf.mxu0
        %v914 = vadd.f32 0.0, %v913
        %v915 = vpop.f32.mrf.mxu0
        %916 = vmatprep.mubr.bf16.mxu0 0
        %917 = vmatmul.mubr.bf16.gmra.mxu0 %v767
        %v918 = vpop.f32.mrf.mxu0
        %v919 = vadd.f32 0.0, %v918
        %v920 = vpop.f32.mrf.mxu0
        %v921 = vpop.f32.mrf.mxu0
        %v922 = vadd.f32 0.0, %v921
        %v923 = vpop.f32.mrf.mxu0
        %924 = vmatprep.mubr.bf16.mxu0 0
        %925 = vmatmul.mubr.bf16.gmra.mxu0 %v770
        %v926 = vpop.f32.mrf.mxu0
        %v927 = vadd.f32 0.0, %v926
        %v928 = vpop.f32.mrf.mxu0
        %v929 = vpop.f32.mrf.mxu0
        %v930 = vadd.f32 0.0, %v929
        %v931 = vpop.f32.mrf.mxu0
        %932 = vdwg.mxu0
        %v933 = vld [vmem:[%s3] sm:$0x1]
        %v935 = vlaneseq
        %v936 = vshrl.u32 %v935, 7
        %v937 = vsub.s32 0, %v936
        %v938 = vrot.slane %v933, %v937
        %v940 = vmul.f32 %v807, %v938
        %v941 = vmul.f32 %v810, %v938
        %v942 = vmul.f32 %v815, %v938
        %v943 = vmul.f32 %v818, %v938
        %v944 = vmul.f32 %v823, %v938
        %v945 = vmul.f32 %v826, %v938
        %v946 = vmul.f32 %v831, %v938
        %v947 = vmul.f32 %v834, %v938
        %v948 = vmul.f32 %v839, %v938
        %v949 = vmul.f32 %v842, %v938
        %v950 = vmul.f32 %v847, %v938
        %v951 = vmul.f32 %v850, %v938
        %v952 = vmul.f32 %v855, %v938
        %v953 = vmul.f32 %v858, %v938
        %v954 = vmul.f32 %v863, %v938
        %v955 = vmul.f32 %v866, %v938
        %v956 = vmul.f32 %v871, %v938
        %v957 = vmul.f32 %v874, %v938
        %v958 = vmul.f32 %v879, %v938
        %v959 = vmul.f32 %v882, %v938
        %v960 = vmul.f32 %v887, %v938
        %v961 = vmul.f32 %v890, %v938
        %v962 = vmul.f32 %v895, %v938
        %v963 = vmul.f32 %v898, %v938
        %v964 = vmul.f32 %v903, %v938
        %v965 = vmul.f32 %v906, %v938
        %v966 = vmul.f32 %v911, %v938
        %v967 = vmul.f32 %v914, %v938
        %v968 = vmul.f32 %v919, %v938
        %v969 = vmul.f32 %v922, %v938
        %v970 = vmul.f32 %v927, %v938
        %v971 = vmul.f32 %v930, %v938
        %v972 = vld [vmem:[%s4] sm:$0x1]
        %v974 = vlaneseq
        %v975 = vshrl.u32 %v974, 7
        %v976 = vsub.s32 0, %v975
        %v977 = vrot.slane %v972, %v976
        %v979 = vadd.f32 %v940, %v977
        %v980 = vadd.f32 %v941, %v977
        %v981 = vadd.f32 %v942, %v977
        %v982 = vadd.f32 %v943, %v977
        %v983 = vadd.f32 %v944, %v977
        %v984 = vadd.f32 %v945, %v977
        %v985 = vadd.f32 %v946, %v977
        %v986 = vadd.f32 %v947, %v977
        %v987 = vadd.f32 %v948, %v977
        %v988 = vadd.f32 %v949, %v977
        %v989 = vadd.f32 %v950, %v977
        %v990 = vadd.f32 %v951, %v977
        %v991 = vadd.f32 %v952, %v977
        %v992 = vadd.f32 %v953, %v977
        %v993 = vadd.f32 %v954, %v977
        %v994 = vadd.f32 %v955, %v977
        %v995 = vadd.f32 %v956, %v977
        %v996 = vadd.f32 %v957, %v977
        %v997 = vadd.f32 %v958, %v977
        %v998 = vadd.f32 %v959, %v977
        %v999 = vadd.f32 %v960, %v977
        %v1000 = vadd.f32 %v961, %v977
        %v1001 = vadd.f32 %v962, %v977
        %v1002 = vadd.f32 %v963, %v977
        %v1003 = vadd.f32 %v964, %v977
        %v1004 = vadd.f32 %v965, %v977
        %v1005 = vadd.f32 %v966, %v977
        %v1006 = vadd.f32 %v967, %v977
        %v1007 = vadd.f32 %v968, %v977
        %v1008 = vadd.f32 %v969, %v977
        %v1009 = vadd.f32 %v970, %v977
        %v1010 = vadd.f32 %v971, %v977
        %v1011 = vmax.f32 %v979, 0.0
        %v1012 = vmax.f32 %v980, 0.0
        %v1013 = vmax.f32 %v981, 0.0
        %v1014 = vmax.f32 %v982, 0.0
        %v1015 = vmax.f32 %v983, 0.0
        %v1016 = vmax.f32 %v984, 0.0
        %v1017 = vmax.f32 %v985, 0.0
        %v1018 = vmax.f32 %v986, 0.0
        %v1019 = vmax.f32 %v987, 0.0
        %v1020 = vmax.f32 %v988, 0.0
        %v1021 = vmax.f32 %v989, 0.0
        %v1022 = vmax.f32 %v990, 0.0
        %v1023 = vmax.f32 %v991, 0.0
        %v1024 = vmax.f32 %v992, 0.0
        %v1025 = vmax.f32 %v993, 0.0
        %v1026 = vmax.f32 %v994, 0.0
        %v1027 = vmax.f32 %v995, 0.0
        %v1028 = vmax.f32 %v996, 0.0
        %v1029 = vmax.f32 %v997, 0.0
        %v1030 = vmax.f32 %v998, 0.0
        %v1031 = vmax.f32 %v999, 0.0
        %v1032 = vmax.f32 %v1000, 0.0
        %v1033 = vmax.f32 %v1001, 0.0
        %v1034 = vmax.f32 %v1002, 0.0
        %v1035 = vmax.f32 %v1003, 0.0
        %v1036 = vmax.f32 %v1004, 0.0
        %v1037 = vmax.f32 %v1005, 0.0
        %v1038 = vmax.f32 %v1006, 0.0
        %v1039 = vmax.f32 %v1007, 0.0
        %v1040 = vmax.f32 %v1008, 0.0
        %v1041 = vmax.f32 %v1009, 0.0
        %v1042 = vmax.f32 %v1010, 0.0
        %1043 = vst.msk [vmem:[#allocation2] sm:$0xff] %vm723, 0.0
        %1044 = vst.msk [vmem:[#allocation2 + $0x8] sm:$0xff] %vm723, 0.0
        %vm1045 = vcmask 254976
        %1046 = vst.msk [vmem:[#allocation2 + $0x10] sm:$0x3] %vm1045, 0.0
        %1047 = vst.msk [vmem:[#allocation2 + $0x18] sm:$0xff] %vm723, 0.0
        %1048 = vst.msk [vmem:[#allocation2 + $0x20] sm:$0xff] %vm723, 0.0
        %1049 = vst.msk [vmem:[#allocation2 + $0x28] sm:$0x3] %vm1045, 0.0
        %1050 = vst.msk [vmem:[#allocation2 + $0x30] sm:$0xff] %vm723, 0.0
        %1051 = vst.msk [vmem:[#allocation2 + $0x38] sm:$0xff] %vm723, 0.0
        %1052 = vst.msk [vmem:[#allocation2 + $0x40] sm:$0x3] %vm1045, 0.0
        %1053 = vst.msk [vmem:[#allocation2 + $0x48] sm:$0xff] %vm723, 0.0
        %1054 = vst.msk [vmem:[#allocation2 + $0x50] sm:$0xff] %vm723, 0.0
        %1055 = vst.msk [vmem:[#allocation2 + $0x58] sm:$0x3] %vm1045, 0.0
        %1056 = vst.msk [vmem:[#allocation2 + $0x60] sm:$0xff] %vm723, 0.0
        %1057 = vst.msk [vmem:[#allocation2 + $0x68] sm:$0xff] %vm723, 0.0
        %1058 = vst.msk [vmem:[#allocation2 + $0x70] sm:$0x3] %vm1045, 0.0
        %1059 = vst.msk [vmem:[#allocation2 + $0x78] sm:$0xff] %vm723, 0.0
        %1060 = vst.msk [vmem:[#allocation2 + $0x80] sm:$0xff] %vm723, 0.0
        %1061 = vst.msk [vmem:[#allocation2 + $0x88] sm:$0x3] %vm1045, 0.0
        %1062 = vst.msk [vmem:[#allocation2 + $0x90] sm:$0xff] %vm723, 0.0
        %1063 = vst.msk [vmem:[#allocation2 + $0x98] sm:$0xff] %vm723, 0.0
        %1064 = vst.msk [vmem:[#allocation2 + $0xa0] sm:$0x3] %vm1045, 0.0
        %1065 = vst.msk [vmem:[#allocation2 + $0xa8] sm:$0xff] %vm723, 0.0
        %1066 = vst.msk [vmem:[#allocation2 + $0xb0] sm:$0xff] %vm723, 0.0
        %1067 = vst.msk [vmem:[#allocation2 + $0xb8] sm:$0x3] %vm1045, 0.0
        %1068 = vst.msk [vmem:[#allocation2 + $0xc0] sm:$0xff] %vm723, 0.0
        %1069 = vst.msk [vmem:[#allocation2 + $0xc8] sm:$0xff] %vm723, 0.0
        %1070 = vst.msk [vmem:[#allocation2 + $0xd0] sm:$0x3] %vm1045, 0.0
        %1071 = vst.msk [vmem:[#allocation2 + $0xd8] sm:$0xff] %vm723, 0.0
        %1072 = vst.msk [vmem:[#allocation2 + $0xe0] sm:$0xff] %vm723, 0.0
        %1073 = vst.msk [vmem:[#allocation2 + $0xe8] sm:$0x3] %vm1045, 0.0
        %1074 = vst.msk [vmem:[#allocation2 + $0xf0] sm:$0xff] %vm723, 0.0
        %1075 = vst.msk [vmem:[#allocation2 + $0xf8] sm:$0xff] %vm723, 0.0
        %1076 = vst.msk [vmem:[#allocation2 + $0x100] sm:$0x3] %vm1045, 0.0
        %1077 = vst.msk [vmem:[#allocation2 + $0x108] sm:$0xff] %vm723, 0.0
        %1078 = vst.msk [vmem:[#allocation2 + $0x110] sm:$0xff] %vm723, 0.0
        %1079 = vst.msk [vmem:[#allocation2 + $0x118] sm:$0x3] %vm1045, 0.0
        %1080 = vst.msk [vmem:[#allocation2 + $0x120] sm:$0xff] %vm723, 0.0
        %1081 = vst.msk [vmem:[#allocation2 + $0x128] sm:$0xff] %vm723, 0.0
        %1082 = vst.msk [vmem:[#allocation2 + $0x130] sm:$0x3] %vm1045, 0.0
        %1083 = vst.msk [vmem:[#allocation2 + $0x138] sm:$0xff] %vm723, 0.0
        %1084 = vst.msk [vmem:[#allocation2 + $0x140] sm:$0xff] %vm723, 0.0
        %1085 = vst.msk [vmem:[#allocation2 + $0x148] sm:$0x3] %vm1045, 0.0
        %1086 = vst.msk [vmem:[#allocation2 + $0x150] sm:$0xff] %vm723, 0.0
        %1087 = vst.msk [vmem:[#allocation2 + $0x158] sm:$0xff] %vm723, 0.0
        %1088 = vst.msk [vmem:[#allocation2 + $0x160] sm:$0x3] %vm1045, 0.0
        %1089 = vst.msk [vmem:[#allocation2 + $0x168] sm:$0xff] %vm723, 0.0
        %1090 = vst.msk [vmem:[#allocation2 + $0x170] sm:$0xff] %vm723, 0.0
        %1091 = vst.msk [vmem:[#allocation2 + $0x178] sm:$0x3] %vm1045, 0.0
        %1092 = vst.msk [vmem:[#allocation2 + $0x180] sm:$0xff] %vm723, 0.0
        %1093 = vst.msk [vmem:[#allocation2 + $0x188] sm:$0xff] %vm723, 0.0
        %1094 = vst.msk [vmem:[#allocation2 + $0x190] sm:$0x3] %vm1045, 0.0
        %1095 = vst.msk [vmem:[#allocation2 + $0x198] sm:$0xff] %vm723, 0.0
        %1096 = vst.msk [vmem:[#allocation2 + $0x1a0] sm:$0xff] %vm723, 0.0
        %1097 = vst.msk [vmem:[#allocation2 + $0x1a8] sm:$0x3] %vm1045, 0.0
        %s1098 = scalar_lea.vmem [#allocation2], 24
        %1099 = vst.msk [vmem:[%s1098 + $0x1] sm:$0xff] %vm723, %v1011
        %1100 = vst.msk [vmem:[%s1098 + $0x9] sm:$0xff] %vm723, %v1012
        %1101 = vst.msk [vmem:[%s1098 + $0x19] sm:$0xff] %vm723, %v1013
        %1102 = vst.msk [vmem:[%s1098 + $0x21] sm:$0xff] %vm723, %v1014
        %1103 = vst.msk [vmem:[%s1098 + $0x31] sm:$0xff] %vm723, %v1015
        %1104 = vst.msk [vmem:[%s1098 + $0x39] sm:$0xff] %vm723, %v1016
        %1105 = vst.msk [vmem:[%s1098 + $0x49] sm:$0xff] %vm723, %v1017
        %1106 = vst.msk [vmem:[%s1098 + $0x51] sm:$0xff] %vm723, %v1018
        %1107 = vst.msk [vmem:[%s1098 + $0x61] sm:$0xff] %vm723, %v1019
        %1108 = vst.msk [vmem:[%s1098 + $0x69] sm:$0xff] %vm723, %v1020
        %1109 = vst.msk [vmem:[%s1098 + $0x79] sm:$0xff] %vm723, %v1021
        %1110 = vst.msk [vmem:[%s1098 + $0x81] sm:$0xff] %vm723, %v1022
        %1111 = vst.msk [vmem:[%s1098 + $0x91] sm:$0xff] %vm723, %v1023
        %1112 = vst.msk [vmem:[%s1098 + $0x99] sm:$0xff] %vm723, %v1024
        %1113 = vst.msk [vmem:[%s1098 + $0xa9] sm:$0xff] %vm723, %v1025
        %1114 = vst.msk [vmem:[%s1098 + $0xb1] sm:$0xff] %vm723, %v1026
        %1115 = vst.msk [vmem:[%s1098 + $0xc1] sm:$0xff] %vm723, %v1027
        %1116 = vst.msk [vmem:[%s1098 + $0xc9] sm:$0xff] %vm723, %v1028
        %1117 = vst.msk [vmem:[%s1098 + $0xd9] sm:$0xff] %vm723, %v1029
        %1118 = vst.msk [vmem:[%s1098 + $0xe1] sm:$0xff] %vm723, %v1030
        %1119 = vst.msk [vmem:[%s1098 + $0xf1] sm:$0xff] %vm723, %v1031
        %1120 = vst.msk [vmem:[%s1098 + $0xf9] sm:$0xff] %vm723, %v1032
        %1121 = vst.msk [vmem:[%s1098 + $0x109] sm:$0xff] %vm723, %v1033
        %1122 = vst.msk [vmem:[%s1098 + $0x111] sm:$0xff] %vm723, %v1034
        %1123 = vst.msk [vmem:[%s1098 + $0x121] sm:$0xff] %vm723, %v1035
        %1124 = vst.msk [vmem:[%s1098 + $0x129] sm:$0xff] %vm723, %v1036
        %1125 = vst.msk [vmem:[%s1098 + $0x139] sm:$0xff] %vm723, %v1037
        %1126 = vst.msk [vmem:[%s1098 + $0x141] sm:$0xff] %vm723, %v1038
        %1127 = vst.msk [vmem:[%s1098 + $0x151] sm:$0xff] %vm723, %v1039
        %1128 = vst.msk [vmem:[%s1098 + $0x159] sm:$0xff] %vm723, %v1040
        %1129 = vst.msk [vmem:[%s1098 + $0x169] sm:$0xff] %vm723, %v1041
        %1130 = vst.msk [vmem:[%s1098 + $0x171] sm:$0xff] %vm723, %v1042
        %v1131 = vld [vmem:[#allocation2] sm:$0xff]
        %v1132 = vld [vmem:[#allocation2 + $0x8] sm:$0xff]
        %v1133 = vld [vmem:[#allocation2 + $0x18] sm:$0xff]
        %v1134 = vld [vmem:[#allocation2 + $0x20] sm:$0xff]
        %v1135 = vld [vmem:[#allocation2 + $0x30] sm:$0xff]
        %v1136 = vld [vmem:[#allocation2 + $0x38] sm:$0xff]
        %v1137 = vld [vmem:[#allocation2 + $0x48] sm:$0xff]
        %v1138 = vld [vmem:[#allocation2 + $0x50] sm:$0xff]
        %v1139 = vld [vmem:[#allocation2 + $0x60] sm:$0xff]
        %v1140 = vld [vmem:[#allocation2 + $0x68] sm:$0xff]
        %v1141 = vld [vmem:[#allocation2 + $0x78] sm:$0xff]
        %v1142 = vld [vmem:[#allocation2 + $0x80] sm:$0xff]
        %v1143 = vld [vmem:[#allocation2 + $0x90] sm:$0xff]
        %v1144 = vld [vmem:[#allocation2 + $0x98] sm:$0xff]
        %v1145 = vld [vmem:[#allocation2 + $0xa8] sm:$0xff]
        %v1146 = vld [vmem:[#allocation2 + $0xb0] sm:$0xff]
        %v1147 = vld [vmem:[#allocation2 + $0xc0] sm:$0xff]
        %v1148 = vld [vmem:[#allocation2 + $0xc8] sm:$0xff]
        %v1149 = vld [vmem:[#allocation2 + $0xd8] sm:$0xff]
        %v1150 = vld [vmem:[#allocation2 + $0xe0] sm:$0xff]
        %v1151 = vld [vmem:[#allocation2 + $0xf0] sm:$0xff]
        %v1152 = vld [vmem:[#allocation2 + $0xf8] sm:$0xff]
        %v1153 = vld [vmem:[#allocation2 + $0x108] sm:$0xff]
        %v1154 = vld [vmem:[#allocation2 + $0x110] sm:$0xff]
        %v1155 = vld [vmem:[#allocation2 + $0x120] sm:$0xff]
        %v1156 = vld [vmem:[#allocation2 + $0x128] sm:$0xff]
        %v1157 = vld [vmem:[#allocation2 + $0x138] sm:$0xff]
        %v1158 = vld [vmem:[#allocation2 + $0x140] sm:$0xff]
        %v1159 = vld [vmem:[#allocation2 + $0x150] sm:$0xff]
        %v1160 = vld [vmem:[#allocation2 + $0x158] sm:$0xff]
        %v1161 = vld [vmem:[#allocation2 + $0x168] sm:$0xff]
        %v1162 = vld [vmem:[#allocation2 + $0x170] sm:$0xff]
        %v1163 = vpack.c.bf16 %v1132, %v1131
        %v1164 = vpack.c.bf16 %v1134, %v1133
        %v1165 = vpack.c.bf16 %v1136, %v1135
        %v1166 = vpack.c.bf16 %v1138, %v1137
        %v1167 = vpack.c.bf16 %v1140, %v1139
        %v1168 = vpack.c.bf16 %v1142, %v1141
        %v1169 = vpack.c.bf16 %v1144, %v1143
        %v1170 = vpack.c.bf16 %v1146, %v1145
        %v1171 = vpack.c.bf16 %v1148, %v1147
        %v1172 = vpack.c.bf16 %v1150, %v1149
        %v1173 = vpack.c.bf16 %v1152, %v1151
        %v1174 = vpack.c.bf16 %v1154, %v1153
        %v1175 = vpack.c.bf16 %v1156, %v1155
        %v1176 = vpack.c.bf16 %v1158, %v1157
        %v1177 = vpack.c.bf16 %v1160, %v1159
        %v1178 = vpack.c.bf16 %v1162, %v1161
        %v1179 = vld [vmem:[%s5] sm:$0xf]
        %v1180 = vld [vmem:[%s5 + $0x4] sm:$0xf]
        %v1181 = vld [vmem:[%s5 + $0x8] sm:$0xf]
        %v1182 = vld [vmem:[%s5 + $0xc] sm:$0xf]
        %v1183 = vld [vmem:[#allocation2 + $0x1] sm:$0xff]
        %v1184 = vld [vmem:[#allocation2 + $0x9] sm:$0xff]
        %v1185 = vld [vmem:[#allocation2 + $0x19] sm:$0xff]
        %v1186 = vld [vmem:[#allocation2 + $0x21] sm:$0xff]
        %v1187 = vld [vmem:[#allocation2 + $0x31] sm:$0xff]
        %v1188 = vld [vmem:[#allocation2 + $0x39] sm:$0xff]
        %v1189 = vld [vmem:[#allocation2 + $0x49] sm:$0xff]
        %v1190 = vld [vmem:[#allocation2 + $0x51] sm:$0xff]
        %v1191 = vld [vmem:[#allocation2 + $0x61] sm:$0xff]
        %v1192 = vld [vmem:[#allocation2 + $0x69] sm:$0xff]
        %v1193 = vld [vmem:[#allocation2 + $0x79] sm:$0xff]
        %v1194 = vld [vmem:[#allocation2 + $0x81] sm:$0xff]
        %v1195 = vld [vmem:[#allocation2 + $0x91] sm:$0xff]
        %v1196 = vld [vmem:[#allocation2 + $0x99] sm:$0xff]
        %v1197 = vld [vmem:[#allocation2 + $0xa9] sm:$0xff]
        %v1198 = vld [vmem:[#allocation2 + $0xb1] sm:$0xff]
        %v1199 = vld [vmem:[#allocation2 + $0xc1] sm:$0xff]
        %v1200 = vld [vmem:[#allocation2 + $0xc9] sm:$0xff]
        %v1201 = vld [vmem:[#allocation2 + $0xd9] sm:$0xff]
        %v1202 = vld [vmem:[#allocation2 + $0xe1] sm:$0xff]
        %v1203 = vld [vmem:[#allocation2 + $0xf1] sm:$0xff]
        %v1204 = vld [vmem:[#allocation2 + $0xf9] sm:$0xff]
        %v1205 = vld [vmem:[#allocation2 + $0x109] sm:$0xff]
        %v1206 = vld [vmem:[#allocation2 + $0x111] sm:$0xff]
        %v1207 = vld [vmem:[#allocation2 + $0x121] sm:$0xff]
        %v1208 = vld [vmem:[#allocation2 + $0x129] sm:$0xff]
        %v1209 = vld [vmem:[#allocation2 + $0x139] sm:$0xff]
        %v1210 = vld [vmem:[#allocation2 + $0x141] sm:$0xff]
        %v1211 = vld [vmem:[#allocation2 + $0x151] sm:$0xff]
        %v1212 = vld [vmem:[#allocation2 + $0x159] sm:$0xff]
        %v1213 = vld [vmem:[#allocation2 + $0x169] sm:$0xff]
        %v1214 = vld [vmem:[#allocation2 + $0x171] sm:$0xff]
        %v1215 = vpack.c.bf16 %v1184, %v1183
        %v1216 = vpack.c.bf16 %v1186, %v1185
        %v1217 = vpack.c.bf16 %v1188, %v1187
        %v1218 = vpack.c.bf16 %v1190, %v1189
        %v1219 = vpack.c.bf16 %v1192, %v1191
        %v1220 = vpack.c.bf16 %v1194, %v1193
        %v1221 = vpack.c.bf16 %v1196, %v1195
        %v1222 = vpack.c.bf16 %v1198, %v1197
        %v1223 = vpack.c.bf16 %v1200, %v1199
        %v1224 = vpack.c.bf16 %v1202, %v1201
        %v1225 = vpack.c.bf16 %v1204, %v1203
        %v1226 = vpack.c.bf16 %v1206, %v1205
        %v1227 = vpack.c.bf16 %v1208, %v1207
        %v1228 = vpack.c.bf16 %v1210, %v1209
        %v1229 = vpack.c.bf16 %v1212, %v1211
        %v1230 = vpack.c.bf16 %v1214, %v1213
        %s1231 = scalar_lea.vmem %s5, 16
        %v1232 = vld [vmem:[%s1231] sm:$0xf]
        %v1233 = vld [vmem:[%s1231 + $0x4] sm:$0xf]
        %v1234 = vld [vmem:[%s1231 + $0x8] sm:$0xf]
        %v1235 = vld [vmem:[%s1231 + $0xc] sm:$0xf]
        %v1240 = vunpack.c.l.b16 %v1232
        %v1241 = vunpack.c.l.b16 %v1233
        %v1242 = vunpack.c.l.b16 %v1234
        %v1243 = vunpack.c.l.b16 %v1235
        %v1244 = vpack.c.b16 %v1241, %v1240
        %v1245 = vpack.c.b16 %v1243, %v1242
        %v1249 = vsel %vm723, %v1215, 0
        %v1252 = vsel %vm723, %v1216, 0
        %v1255 = vsel %vm723, %v1217, 0
        %v1258 = vsel %vm723, %v1218, 0
        %v1261 = vsel %vm723, %v1219, 0
        %v1264 = vsel %vm723, %v1220, 0
        %v1267 = vsel %vm723, %v1221, 0
        %v1270 = vsel %vm723, %v1222, 0
        %v1273 = vsel %vm723, %v1223, 0
        %v1276 = vsel %vm723, %v1224, 0
        %v1279 = vsel %vm723, %v1225, 0
        %v1282 = vsel %vm723, %v1226, 0
        %v1285 = vsel %vm723, %v1227, 0
        %v1288 = vsel %vm723, %v1228, 0
        %v1291 = vsel %vm723, %v1229, 0
        %v1294 = vsel %vm723, %v1230, 0
        %1296 = vmatprep.subr.bf16.mxu0 0
        %1297 = vmatpush1.bf16.msra.mxu0 0
        %1298 = vmatprep.subr.bf16.mxu0 0
        %1299 = vmatpush1.bf16.msra.mxu0 0
        %1300 = vmatprep.subr.bf16.mxu0 0
        %1301 = vmatpush1.bf16.msra.mxu0 0
        %1302 = vmatprep.subr.bf16.mxu0 0
        %1303 = vmatpush1.bf16.msra.mxu0 0
        %1304 = vmatprep.subr.bf16.mxu0 0
        %1305 = vmatpush1.bf16.msra.mxu0 0
        %1306 = vmatprep.subr.bf16.mxu0 0
        %1307 = vmatpush1.bf16.msra.mxu0 0
        %1308 = vmatprep.subr.bf16.mxu0 0
        %1309 = vmatpush1.bf16.msra.mxu0 %v1245
        %1310 = vmatprep.subr.bf16.mxu0 0
        %1311 = vmatpush1.bf16.msra.mxu0 %v1244
        %1312 = vmatprep.subr.bf16.mxu0 0
        %1313 = vmatpush2.bf16.msra.mxu0 0
        %1314 = vmatprep.subr.bf16.mxu0 0
        %1315 = vmatpush2.bf16.msra.mxu0 0
        %1316 = vmatprep.subr.bf16.mxu0 0
        %1317 = vmatpush2.bf16.msra.mxu0 0
        %1318 = vmatprep.subr.bf16.mxu0 0
        %1319 = vmatpush2.bf16.msra.mxu0 0
        %1320 = vmatprep.subr.bf16.mxu0 0
        %1321 = vmatpush2.bf16.msra.mxu0 0
        %1322 = vmatprep.subr.bf16.mxu0 0
        %1323 = vmatpush2.bf16.msra.mxu0 0
        %1324 = vmatprep.subr.bf16.mxu0 0
        %1325 = vmatpush2.bf16.msra.mxu0 0
        %1326 = vmatprep.subr.bf16.mxu0 0
        %1327 = vmatpush2.bf16.msra.mxu0 0
        %1328 = vmatprep.mubr.bf16.mxu0 0
        %1329 = vmatmul.mubr.bf16.gmra.mxu0 %v1249
        %v1330 = vpop.f32.mrf.mxu0
        %v1331 = vadd.f32 0.0, %v1330
        %v1332 = vpop.f32.mrf.mxu0
        %v1333 = vpop.f32.mrf.mxu0
        %v1334 = vadd.f32 0.0, %v1333
        %v1335 = vpop.f32.mrf.mxu0
        %1336 = vmatprep.mubr.bf16.mxu0 0
        %1337 = vmatmul.mubr.bf16.gmra.mxu0 %v1252
        %v1338 = vpop.f32.mrf.mxu0
        %v1339 = vadd.f32 0.0, %v1338
        %v1340 = vpop.f32.mrf.mxu0
        %v1341 = vpop.f32.mrf.mxu0
        %v1342 = vadd.f32 0.0, %v1341
        %v1343 = vpop.f32.mrf.mxu0
        %1344 = vmatprep.mubr.bf16.mxu0 0
        %1345 = vmatmul.mubr.bf16.gmra.mxu0 %v1255
        %v1346 = vpop.f32.mrf.mxu0
        %v1347 = vadd.f32 0.0, %v1346
        %v1348 = vpop.f32.mrf.mxu0
        %v1349 = vpop.f32.mrf.mxu0
        %v1350 = vadd.f32 0.0, %v1349
        %v1351 = vpop.f32.mrf.mxu0
        %1352 = vmatprep.mubr.bf16.mxu0 0
        %1353 = vmatmul.mubr.bf16.gmra.mxu0 %v1258
        %v1354 = vpop.f32.mrf.mxu0
        %v1355 = vadd.f32 0.0, %v1354
        %v1356 = vpop.f32.mrf.mxu0
        %v1357 = vpop.f32.mrf.mxu0
        %v1358 = vadd.f32 0.0, %v1357
        %v1359 = vpop.f32.mrf.mxu0
        %1360 = vmatprep.mubr.bf16.mxu0 0
        %1361 = vmatmul.mubr.bf16.gmra.mxu0 %v1261
        %v1362 = vpop.f32.mrf.mxu0
        %v1363 = vadd.f32 0.0, %v1362
        %v1364 = vpop.f32.mrf.mxu0
        %v1365 = vpop.f32.mrf.mxu0
        %v1366 = vadd.f32 0.0, %v1365
        %v1367 = vpop.f32.mrf.mxu0
        %1368 = vmatprep.mubr.bf16.mxu0 0
        %1369 = vmatmul.mubr.bf16.gmra.mxu0 %v1264
        %v1370 = vpop.f32.mrf.mxu0
        %v1371 = vadd.f32 0.0, %v1370
        %v1372 = vpop.f32.mrf.mxu0
        %v1373 = vpop.f32.mrf.mxu0
        %v1374 = vadd.f32 0.0, %v1373
        %v1375 = vpop.f32.mrf.mxu0
        %1376 = vmatprep.mubr.bf16.mxu0 0
        %1377 = vmatmul.mubr.bf16.gmra.mxu0 %v1267
        %v1378 = vpop.f32.mrf.mxu0
        %v1379 = vadd.f32 0.0, %v1378
        %v1380 = vpop.f32.mrf.mxu0
        %v1381 = vpop.f32.mrf.mxu0
        %v1382 = vadd.f32 0.0, %v1381
        %v1383 = vpop.f32.mrf.mxu0
        %1384 = vmatprep.mubr.bf16.mxu0 0
        %1385 = vmatmul.mubr.bf16.gmra.mxu0 %v1270
        %v1386 = vpop.f32.mrf.mxu0
        %v1387 = vadd.f32 0.0, %v1386
        %v1388 = vpop.f32.mrf.mxu0
        %v1389 = vpop.f32.mrf.mxu0
        %v1390 = vadd.f32 0.0, %v1389
        %v1391 = vpop.f32.mrf.mxu0
        %1392 = vmatprep.mubr.bf16.mxu0 0
        %1393 = vmatmul.mubr.bf16.gmra.mxu0 %v1273
        %v1394 = vpop.f32.mrf.mxu0
        %v1395 = vadd.f32 0.0, %v1394
        %v1396 = vpop.f32.mrf.mxu0
        %v1397 = vpop.f32.mrf.mxu0
        %v1398 = vadd.f32 0.0, %v1397
        %v1399 = vpop.f32.mrf.mxu0
        %1400 = vmatprep.mubr.bf16.mxu0 0
        %1401 = vmatmul.mubr.bf16.gmra.mxu0 %v1276
        %v1402 = vpop.f32.mrf.mxu0
        %v1403 = vadd.f32 0.0, %v1402
        %v1404 = vpop.f32.mrf.mxu0
        %v1405 = vpop.f32.mrf.mxu0
        %v1406 = vadd.f32 0.0, %v1405
        %v1407 = vpop.f32.mrf.mxu0
        %1408 = vmatprep.mubr.bf16.mxu0 0
        %1409 = vmatmul.mubr.bf16.gmra.mxu0 %v1279
        %v1410 = vpop.f32.mrf.mxu0
        %v1411 = vadd.f32 0.0, %v1410
        %v1412 = vpop.f32.mrf.mxu0
        %v1413 = vpop.f32.mrf.mxu0
        %v1414 = vadd.f32 0.0, %v1413
        %v1415 = vpop.f32.mrf.mxu0
        %1416 = vmatprep.mubr.bf16.mxu0 0
        %1417 = vmatmul.mubr.bf16.gmra.mxu0 %v1282
        %v1418 = vpop.f32.mrf.mxu0
        %v1419 = vadd.f32 0.0, %v1418
        %v1420 = vpop.f32.mrf.mxu0
        %v1421 = vpop.f32.mrf.mxu0
        %v1422 = vadd.f32 0.0, %v1421
        %v1423 = vpop.f32.mrf.mxu0
        %1424 = vmatprep.mubr.bf16.mxu0 0
        %1425 = vmatmul.mubr.bf16.gmra.mxu0 %v1285
        %v1426 = vpop.f32.mrf.mxu0
        %v1427 = vadd.f32 0.0, %v1426
        %v1428 = vpop.f32.mrf.mxu0
        %v1429 = vpop.f32.mrf.mxu0
        %v1430 = vadd.f32 0.0, %v1429
        %v1431 = vpop.f32.mrf.mxu0
        %1432 = vmatprep.mubr.bf16.mxu0 0
        %1433 = vmatmul.mubr.bf16.gmra.mxu0 %v1288
        %v1434 = vpop.f32.mrf.mxu0
        %v1435 = vadd.f32 0.0, %v1434
        %v1436 = vpop.f32.mrf.mxu0
        %v1437 = vpop.f32.mrf.mxu0
        %v1438 = vadd.f32 0.0, %v1437
        %v1439 = vpop.f32.mrf.mxu0
        %1440 = vmatprep.mubr.bf16.mxu0 0
        %1441 = vmatmul.mubr.bf16.gmra.mxu0 %v1291
        %v1442 = vpop.f32.mrf.mxu0
        %v1443 = vadd.f32 0.0, %v1442
        %v1444 = vpop.f32.mrf.mxu0
        %v1445 = vpop.f32.mrf.mxu0
        %v1446 = vadd.f32 0.0, %v1445
        %v1447 = vpop.f32.mrf.mxu0
        %1448 = vmatprep.mubr.bf16.mxu0 0
        %1449 = vmatmul.mubr.bf16.gmra.mxu0 %v1294
        %v1450 = vpop.f32.mrf.mxu0
        %v1451 = vadd.f32 0.0, %v1450
        %v1452 = vpop.f32.mrf.mxu0
        %v1453 = vpop.f32.mrf.mxu0
        %v1454 = vadd.f32 0.0, %v1453
        %v1455 = vpop.f32.mrf.mxu0
        %1456 = vdwg.mxu0
        %v1461 = vunpack.c.l.b16 %v1179
        %v1462 = vunpack.c.l.b16 %v1180
        %v1463 = vunpack.c.l.b16 %v1181
        %v1464 = vunpack.c.l.b16 %v1182
        %v1465 = vpack.c.b16 %v1462, %v1461
        %v1466 = vpack.c.b16 %v1464, %v1463
        %v1470 = vsel %vm723, %v1163, 0
        %v1473 = vsel %vm723, %v1164, 0
        %v1476 = vsel %vm723, %v1165, 0
        %v1479 = vsel %vm723, %v1166, 0
        %v1482 = vsel %vm723, %v1167, 0
        %v1485 = vsel %vm723, %v1168, 0
        %v1488 = vsel %vm723, %v1169, 0
        %v1491 = vsel %vm723, %v1170, 0
        %v1494 = vsel %vm723, %v1171, 0
        %v1497 = vsel %vm723, %v1172, 0
        %v1500 = vsel %vm723, %v1173, 0
        %v1503 = vsel %vm723, %v1174, 0
        %v1506 = vsel %vm723, %v1175, 0
        %v1509 = vsel %vm723, %v1176, 0
        %v1512 = vsel %vm723, %v1177, 0
        %v1515 = vsel %vm723, %v1178, 0
        %1517 = vmatprep.subr.bf16.mxu0 0
        %1518 = vmatpush1.bf16.msra.mxu0 0
        %1519 = vmatprep.subr.bf16.mxu0 0
        %1520 = vmatpush1.bf16.msra.mxu0 0
        %1521 = vmatprep.subr.bf16.mxu0 0
        %1522 = vmatpush1.bf16.msra.mxu0 0
        %1523 = vmatprep.subr.bf16.mxu0 0
        %1524 = vmatpush1.bf16.msra.mxu0 0
        %1525 = vmatprep.subr.bf16.mxu0 0
        %1526 = vmatpush1.bf16.msra.mxu0 0
        %1527 = vmatprep.subr.bf16.mxu0 0
        %1528 = vmatpush1.bf16.msra.mxu0 0
        %1529 = vmatprep.subr.bf16.mxu0 0
        %1530 = vmatpush1.bf16.msra.mxu0 %v1466
        %1531 = vmatprep.subr.bf16.mxu0 0
        %1532 = vmatpush1.bf16.msra.mxu0 %v1465
        %1533 = vmatprep.subr.bf16.mxu0 0
        %1534 = vmatpush2.bf16.msra.mxu0 0
        %1535 = vmatprep.subr.bf16.mxu0 0
        %1536 = vmatpush2.bf16.msra.mxu0 0
        %1537 = vmatprep.subr.bf16.mxu0 0
        %1538 = vmatpush2.bf16.msra.mxu0 0
        %1539 = vmatprep.subr.bf16.mxu0 0
        %1540 = vmatpush2.bf16.msra.mxu0 0
        %1541 = vmatprep.subr.bf16.mxu0 0
        %1542 = vmatpush2.bf16.msra.mxu0 0
        %1543 = vmatprep.subr.bf16.mxu0 0
        %1544 = vmatpush2.bf16.msra.mxu0 0
        %1545 = vmatprep.subr.bf16.mxu0 0
        %1546 = vmatpush2.bf16.msra.mxu0 0
        %1547 = vmatprep.subr.bf16.mxu0 0
        %1548 = vmatpush2.bf16.msra.mxu0 0
        %1549 = vmatprep.mubr.bf16.mxu0 0
        %1550 = vmatmul.mubr.bf16.gmra.mxu0 %v1470
        %v1551 = vpop.f32.mrf.mxu0
        %v1552 = vadd.f32 %v1331, %v1551
        %v1553 = vpop.f32.mrf.mxu0
        %v1554 = vpop.f32.mrf.mxu0
        %v1555 = vadd.f32 %v1334, %v1554
        %v1556 = vpop.f32.mrf.mxu0
        %1557 = vmatprep.mubr.bf16.mxu0 0
        %1558 = vmatmul.mubr.bf16.gmra.mxu0 %v1473
        %v1559 = vpop.f32.mrf.mxu0
        %v1560 = vadd.f32 %v1339, %v1559
        %v1561 = vpop.f32.mrf.mxu0
        %v1562 = vpop.f32.mrf.mxu0
        %v1563 = vadd.f32 %v1342, %v1562
        %v1564 = vpop.f32.mrf.mxu0
        %1565 = vmatprep.mubr.bf16.mxu0 0
        %1566 = vmatmul.mubr.bf16.gmra.mxu0 %v1476
        %v1567 = vpop.f32.mrf.mxu0
        %v1568 = vadd.f32 %v1347, %v1567
        %v1569 = vpop.f32.mrf.mxu0
        %v1570 = vpop.f32.mrf.mxu0
        %v1571 = vadd.f32 %v1350, %v1570
        %v1572 = vpop.f32.mrf.mxu0
        %1573 = vmatprep.mubr.bf16.mxu0 0
        %1574 = vmatmul.mubr.bf16.gmra.mxu0 %v1479
        %v1575 = vpop.f32.mrf.mxu0
        %v1576 = vadd.f32 %v1355, %v1575
        %v1577 = vpop.f32.mrf.mxu0
        %v1578 = vpop.f32.mrf.mxu0
        %v1579 = vadd.f32 %v1358, %v1578
        %v1580 = vpop.f32.mrf.mxu0
        %1581 = vmatprep.mubr.bf16.mxu0 0
        %1582 = vmatmul.mubr.bf16.gmra.mxu0 %v1482
        %v1583 = vpop.f32.mrf.mxu0
        %v1584 = vadd.f32 %v1363, %v1583
        %v1585 = vpop.f32.mrf.mxu0
        %v1586 = vpop.f32.mrf.mxu0
        %v1587 = vadd.f32 %v1366, %v1586
        %v1588 = vpop.f32.mrf.mxu0
        %1589 = vmatprep.mubr.bf16.mxu0 0
        %1590 = vmatmul.mubr.bf16.gmra.mxu0 %v1485
        %v1591 = vpop.f32.mrf.mxu0
        %v1592 = vadd.f32 %v1371, %v1591
        %v1593 = vpop.f32.mrf.mxu0
        %v1594 = vpop.f32.mrf.mxu0
        %v1595 = vadd.f32 %v1374, %v1594
        %v1596 = vpop.f32.mrf.mxu0
        %1597 = vmatprep.mubr.bf16.mxu0 0
        %1598 = vmatmul.mubr.bf16.gmra.mxu0 %v1488
        %v1599 = vpop.f32.mrf.mxu0
        %v1600 = vadd.f32 %v1379, %v1599
        %v1601 = vpop.f32.mrf.mxu0
        %v1602 = vpop.f32.mrf.mxu0
        %v1603 = vadd.f32 %v1382, %v1602
        %v1604 = vpop.f32.mrf.mxu0
        %1605 = vmatprep.mubr.bf16.mxu0 0
        %1606 = vmatmul.mubr.bf16.gmra.mxu0 %v1491
        %v1607 = vpop.f32.mrf.mxu0
        %v1608 = vadd.f32 %v1387, %v1607
        %v1609 = vpop.f32.mrf.mxu0
        %v1610 = vpop.f32.mrf.mxu0
        %v1611 = vadd.f32 %v1390, %v1610
        %v1612 = vpop.f32.mrf.mxu0
        %1613 = vmatprep.mubr.bf16.mxu0 0
        %1614 = vmatmul.mubr.bf16.gmra.mxu0 %v1494
        %v1615 = vpop.f32.mrf.mxu0
        %v1616 = vadd.f32 %v1395, %v1615
        %v1617 = vpop.f32.mrf.mxu0
        %v1618 = vpop.f32.mrf.mxu0
        %v1619 = vadd.f32 %v1398, %v1618
        %v1620 = vpop.f32.mrf.mxu0
        %1621 = vmatprep.mubr.bf16.mxu0 0
        %1622 = vmatmul.mubr.bf16.gmra.mxu0 %v1497
        %v1623 = vpop.f32.mrf.mxu0
        %v1624 = vadd.f32 %v1403, %v1623
        %v1625 = vpop.f32.mrf.mxu0
        %v1626 = vpop.f32.mrf.mxu0
        %v1627 = vadd.f32 %v1406, %v1626
        %v1628 = vpop.f32.mrf.mxu0
        %1629 = vmatprep.mubr.bf16.mxu0 0
        %1630 = vmatmul.mubr.bf16.gmra.mxu0 %v1500
        %v1631 = vpop.f32.mrf.mxu0
        %v1632 = vadd.f32 %v1411, %v1631
        %v1633 = vpop.f32.mrf.mxu0
        %v1634 = vpop.f32.mrf.mxu0
        %v1635 = vadd.f32 %v1414, %v1634
        %v1636 = vpop.f32.mrf.mxu0
        %1637 = vmatprep.mubr.bf16.mxu0 0
        %1638 = vmatmul.mubr.bf16.gmra.mxu0 %v1503
        %v1639 = vpop.f32.mrf.mxu0
        %v1640 = vadd.f32 %v1419, %v1639
        %v1641 = vpop.f32.mrf.mxu0
        %v1642 = vpop.f32.mrf.mxu0
        %v1643 = vadd.f32 %v1422, %v1642
        %v1644 = vpop.f32.mrf.mxu0
        %1645 = vmatprep.mubr.bf16.mxu0 0
        %1646 = vmatmul.mubr.bf16.gmra.mxu0 %v1506
        %v1647 = vpop.f32.mrf.mxu0
        %v1648 = vadd.f32 %v1427, %v1647
        %v1649 = vpop.f32.mrf.mxu0
        %v1650 = vpop.f32.mrf.mxu0
        %v1651 = vadd.f32 %v1430, %v1650
        %v1652 = vpop.f32.mrf.mxu0
        %1653 = vmatprep.mubr.bf16.mxu0 0
        %1654 = vmatmul.mubr.bf16.gmra.mxu0 %v1509
        %v1655 = vpop.f32.mrf.mxu0
        %v1656 = vadd.f32 %v1435, %v1655
        %v1657 = vpop.f32.mrf.mxu0
        %v1658 = vpop.f32.mrf.mxu0
        %v1659 = vadd.f32 %v1438, %v1658
        %v1660 = vpop.f32.mrf.mxu0
        %1661 = vmatprep.mubr.bf16.mxu0 0
        %1662 = vmatmul.mubr.bf16.gmra.mxu0 %v1512
        %v1663 = vpop.f32.mrf.mxu0
        %v1664 = vadd.f32 %v1443, %v1663
        %v1665 = vpop.f32.mrf.mxu0
        %v1666 = vpop.f32.mrf.mxu0
        %v1667 = vadd.f32 %v1446, %v1666
        %v1668 = vpop.f32.mrf.mxu0
        %1669 = vmatprep.mubr.bf16.mxu0 0
        %1670 = vmatmul.mubr.bf16.gmra.mxu0 %v1515
        %v1671 = vpop.f32.mrf.mxu0
        %v1672 = vadd.f32 %v1451, %v1671
        %v1673 = vpop.f32.mrf.mxu0
        %v1674 = vpop.f32.mrf.mxu0
        %v1675 = vadd.f32 %v1454, %v1674
        %v1676 = vpop.f32.mrf.mxu0
        %1677 = vdwg.mxu0
        %v1678 = vld [vmem:[#allocation2 + $0x2] sm:$0xff]
        %v1679 = vld [vmem:[#allocation2 + $0xa] sm:$0xff]
        %v1680 = vld [vmem:[#allocation2 + $0x1a] sm:$0xff]
        %v1681 = vld [vmem:[#allocation2 + $0x22] sm:$0xff]
        %v1682 = vld [vmem:[#allocation2 + $0x32] sm:$0xff]
        %v1683 = vld [vmem:[#allocation2 + $0x3a] sm:$0xff]
        %v1684 = vld [vmem:[#allocation2 + $0x4a] sm:$0xff]
        %v1685 = vld [vmem:[#allocation2 + $0x52] sm:$0xff]
        %v1686 = vld [vmem:[#allocation2 + $0x62] sm:$0xff]
        %v1687 = vld [vmem:[#allocation2 + $0x6a] sm:$0xff]
        %v1688 = vld [vmem:[#allocation2 + $0x7a] sm:$0xff]
        %v1689 = vld [vmem:[#allocation2 + $0x82] sm:$0xff]
        %v1690 = vld [vmem:[#allocation2 + $0x92] sm:$0xff]
        %v1691 = vld [vmem:[#allocation2 + $0x9a] sm:$0xff]
        %v1692 = vld [vmem:[#allocation2 + $0xaa] sm:$0xff]
        %v1693 = vld [vmem:[#allocation2 + $0xb2] sm:$0xff]
        %v1694 = vld [vmem:[#allocation2 + $0xc2] sm:$0xff]
        %v1695 = vld [vmem:[#allocation2 + $0xca] sm:$0xff]
        %v1696 = vld [vmem:[#allocation2 + $0xda] sm:$0xff]
        %v1697 = vld [vmem:[#allocation2 + $0xe2] sm:$0xff]
        %v1698 = vld [vmem:[#allocation2 + $0xf2] sm:$0xff]
        %v1699 = vld [vmem:[#allocation2 + $0xfa] sm:$0xff]
        %v1700 = vld [vmem:[#allocation2 + $0x10a] sm:$0xff]
        %v1701 = vld [vmem:[#allocation2 + $0x112] sm:$0xff]
        %v1702 = vld [vmem:[#allocation2 + $0x122] sm:$0xff]
        %v1703 = vld [vmem:[#allocation2 + $0x12a] sm:$0xff]
        %v1704 = vld [vmem:[#allocation2 + $0x13a] sm:$0xff]
        %v1705 = vld [vmem:[#allocation2 + $0x142] sm:$0xff]
        %v1706 = vld [vmem:[#allocation2 + $0x152] sm:$0xff]
        %v1707 = vld [vmem:[#allocation2 + $0x15a] sm:$0xff]
        %v1708 = vld [vmem:[#allocation2 + $0x16a] sm:$0xff]
        %v1709 = vld [vmem:[#allocation2 + $0x172] sm:$0xff]
        %v1710 = vpack.c.bf16 %v1679, %v1678
        %v1711 = vpack.c.bf16 %v1681, %v1680
        %v1712 = vpack.c.bf16 %v1683, %v1682
        %v1713 = vpack.c.bf16 %v1685, %v1684
        %v1714 = vpack.c.bf16 %v1687, %v1686
        %v1715 = vpack.c.bf16 %v1689, %v1688
        %v1716 = vpack.c.bf16 %v1691, %v1690
        %v1717 = vpack.c.bf16 %v1693, %v1692
        %v1718 = vpack.c.bf16 %v1695, %v1694
        %v1719 = vpack.c.bf16 %v1697, %v1696
        %v1720 = vpack.c.bf16 %v1699, %v1698
        %v1721 = vpack.c.bf16 %v1701, %v1700
        %v1722 = vpack.c.bf16 %v1703, %v1702
        %v1723 = vpack.c.bf16 %v1705, %v1704
        %v1724 = vpack.c.bf16 %v1707, %v1706
        %v1725 = vpack.c.bf16 %v1709, %v1708
        %s1726 = scalar_lea.vmem %s5, 32
        %v1727 = vld [vmem:[%s1726] sm:$0xf]
        %v1728 = vld [vmem:[%s1726 + $0x4] sm:$0xf]
        %v1729 = vld [vmem:[%s1726 + $0x8] sm:$0xf]
        %v1730 = vld [vmem:[%s1726 + $0xc] sm:$0xf]
        %v1735 = vunpack.c.l.b16 %v1727
        %v1736 = vunpack.c.l.b16 %v1728
        %v1737 = vunpack.c.l.b16 %v1729
        %v1738 = vunpack.c.l.b16 %v1730
        %v1739 = vpack.c.b16 %v1736, %v1735
        %v1740 = vpack.c.b16 %v1738, %v1737
        %v1744 = vsel %vm723, %v1710, 0
        %v1747 = vsel %vm723, %v1711, 0
        %v1750 = vsel %vm723, %v1712, 0
        %v1753 = vsel %vm723, %v1713, 0
        %v1756 = vsel %vm723, %v1714, 0
        %v1759 = vsel %vm723, %v1715, 0
        %v1762 = vsel %vm723, %v1716, 0
        %v1765 = vsel %vm723, %v1717, 0
        %v1768 = vsel %vm723, %v1718, 0
        %v1771 = vsel %vm723, %v1719, 0
        %v1774 = vsel %vm723, %v1720, 0
        %v1777 = vsel %vm723, %v1721, 0
        %v1780 = vsel %vm723, %v1722, 0
        %v1783 = vsel %vm723, %v1723, 0
        %v1786 = vsel %vm723, %v1724, 0
        %v1789 = vsel %vm723, %v1725, 0
        %1791 = vmatprep.subr.bf16.mxu0 0
        %1792 = vmatpush1.bf16.msra.mxu0 0
        %1793 = vmatprep.subr.bf16.mxu0 0
        %1794 = vmatpush1.bf16.msra.mxu0 0
        %1795 = vmatprep.subr.bf16.mxu0 0
        %1796 = vmatpush1.bf16.msra.mxu0 0
        %1797 = vmatprep.subr.bf16.mxu0 0
        %1798 = vmatpush1.bf16.msra.mxu0 0
        %1799 = vmatprep.subr.bf16.mxu0 0
        %1800 = vmatpush1.bf16.msra.mxu0 0
        %1801 = vmatprep.subr.bf16.mxu0 0
        %1802 = vmatpush1.bf16.msra.mxu0 0
        %1803 = vmatprep.subr.bf16.mxu0 0
        %1804 = vmatpush1.bf16.msra.mxu0 %v1740
        %1805 = vmatprep.subr.bf16.mxu0 0
        %1806 = vmatpush1.bf16.msra.mxu0 %v1739
        %1807 = vmatprep.subr.bf16.mxu0 0
        %1808 = vmatpush2.bf16.msra.mxu0 0
        %1809 = vmatprep.subr.bf16.mxu0 0
        %1810 = vmatpush2.bf16.msra.mxu0 0
        %1811 = vmatprep.subr.bf16.mxu0 0
        %1812 = vmatpush2.bf16.msra.mxu0 0
        %1813 = vmatprep.subr.bf16.mxu0 0
        %1814 = vmatpush2.bf16.msra.mxu0 0
        %1815 = vmatprep.subr.bf16.mxu0 0
        %1816 = vmatpush2.bf16.msra.mxu0 0
        %1817 = vmatprep.subr.bf16.mxu0 0
        %1818 = vmatpush2.bf16.msra.mxu0 0
        %1819 = vmatprep.subr.bf16.mxu0 0
        %1820 = vmatpush2.bf16.msra.mxu0 0
        %1821 = vmatprep.subr.bf16.mxu0 0
        %1822 = vmatpush2.bf16.msra.mxu0 0
        %1823 = vmatprep.mubr.bf16.mxu0 0
        %1824 = vmatmul.mubr.bf16.gmra.mxu0 %v1744
        %v1825 = vpop.f32.mrf.mxu0
        %v1826 = vadd.f32 0.0, %v1825
        %v1827 = vpop.f32.mrf.mxu0
        %v1828 = vpop.f32.mrf.mxu0
        %v1829 = vadd.f32 0.0, %v1828
        %v1830 = vpop.f32.mrf.mxu0
        %1831 = vmatprep.mubr.bf16.mxu0 0
        %1832 = vmatmul.mubr.bf16.gmra.mxu0 %v1747
        %v1833 = vpop.f32.mrf.mxu0
        %v1834 = vadd.f32 0.0, %v1833
        %v1835 = vpop.f32.mrf.mxu0
        %v1836 = vpop.f32.mrf.mxu0
        %v1837 = vadd.f32 0.0, %v1836
        %v1838 = vpop.f32.mrf.mxu0
        %1839 = vmatprep.mubr.bf16.mxu0 0
        %1840 = vmatmul.mubr.bf16.gmra.mxu0 %v1750
        %v1841 = vpop.f32.mrf.mxu0
        %v1842 = vadd.f32 0.0, %v1841
        %v1843 = vpop.f32.mrf.mxu0
        %v1844 = vpop.f32.mrf.mxu0
        %v1845 = vadd.f32 0.0, %v1844
        %v1846 = vpop.f32.mrf.mxu0
        %1847 = vmatprep.mubr.bf16.mxu0 0
        %1848 = vmatmul.mubr.bf16.gmra.mxu0 %v1753
        %v1849 = vpop.f32.mrf.mxu0
        %v1850 = vadd.f32 0.0, %v1849
        %v1851 = vpop.f32.mrf.mxu0
        %v1852 = vpop.f32.mrf.mxu0
        %v1853 = vadd.f32 0.0, %v1852
        %v1854 = vpop.f32.mrf.mxu0
        %1855 = vmatprep.mubr.bf16.mxu0 0
        %1856 = vmatmul.mubr.bf16.gmra.mxu0 %v1756
        %v1857 = vpop.f32.mrf.mxu0
        %v1858 = vadd.f32 0.0, %v1857
        %v1859 = vpop.f32.mrf.mxu0
        %v1860 = vpop.f32.mrf.mxu0
        %v1861 = vadd.f32 0.0, %v1860
        %v1862 = vpop.f32.mrf.mxu0
        %1863 = vmatprep.mubr.bf16.mxu0 0
        %1864 = vmatmul.mubr.bf16.gmra.mxu0 %v1759
        %v1865 = vpop.f32.mrf.mxu0
        %v1866 = vadd.f32 0.0, %v1865
        %v1867 = vpop.f32.mrf.mxu0
        %v1868 = vpop.f32.mrf.mxu0
        %v1869 = vadd.f32 0.0, %v1868
        %v1870 = vpop.f32.mrf.mxu0
        %1871 = vmatprep.mubr.bf16.mxu0 0
        %1872 = vmatmul.mubr.bf16.gmra.mxu0 %v1762
        %v1873 = vpop.f32.mrf.mxu0
        %v1874 = vadd.f32 0.0, %v1873
        %v1875 = vpop.f32.mrf.mxu0
        %v1876 = vpop.f32.mrf.mxu0
        %v1877 = vadd.f32 0.0, %v1876
        %v1878 = vpop.f32.mrf.mxu0
        %1879 = vmatprep.mubr.bf16.mxu0 0
        %1880 = vmatmul.mubr.bf16.gmra.mxu0 %v1765
        %v1881 = vpop.f32.mrf.mxu0
        %v1882 = vadd.f32 0.0, %v1881
        %v1883 = vpop.f32.mrf.mxu0
        %v1884 = vpop.f32.mrf.mxu0
        %v1885 = vadd.f32 0.0, %v1884
        %v1886 = vpop.f32.mrf.mxu0
        %1887 = vmatprep.mubr.bf16.mxu0 0
        %1888 = vmatmul.mubr.bf16.gmra.mxu0 %v1768
        %v1889 = vpop.f32.mrf.mxu0
        %v1890 = vadd.f32 0.0, %v1889
        %v1891 = vpop.f32.mrf.mxu0
        %v1892 = vpop.f32.mrf.mxu0
        %v1893 = vadd.f32 0.0, %v1892
        %v1894 = vpop.f32.mrf.mxu0
        %1895 = vmatprep.mubr.bf16.mxu0 0
        %1896 = vmatmul.mubr.bf16.gmra.mxu0 %v1771
        %v1897 = vpop.f32.mrf.mxu0
        %v1898 = vadd.f32 0.0, %v1897
        %v1899 = vpop.f32.mrf.mxu0
        %v1900 = vpop.f32.mrf.mxu0
        %v1901 = vadd.f32 0.0, %v1900
        %v1902 = vpop.f32.mrf.mxu0
        %1903 = vmatprep.mubr.bf16.mxu0 0
        %1904 = vmatmul.mubr.bf16.gmra.mxu0 %v1774
        %v1905 = vpop.f32.mrf.mxu0
        %v1906 = vadd.f32 0.0, %v1905
        %v1907 = vpop.f32.mrf.mxu0
        %v1908 = vpop.f32.mrf.mxu0
        %v1909 = vadd.f32 0.0, %v1908
        %v1910 = vpop.f32.mrf.mxu0
        %1911 = vmatprep.mubr.bf16.mxu0 0
        %1912 = vmatmul.mubr.bf16.gmra.mxu0 %v1777
        %v1913 = vpop.f32.mrf.mxu0
        %v1914 = vadd.f32 0.0, %v1913
        %v1915 = vpop.f32.mrf.mxu0
        %v1916 = vpop.f32.mrf.mxu0
        %v1917 = vadd.f32 0.0, %v1916
        %v1918 = vpop.f32.mrf.mxu0
        %1919 = vmatprep.mubr.bf16.mxu0 0
        %1920 = vmatmul.mubr.bf16.gmra.mxu0 %v1780
        %v1921 = vpop.f32.mrf.mxu0
        %v1922 = vadd.f32 0.0, %v1921
        %v1923 = vpop.f32.mrf.mxu0
        %v1924 = vpop.f32.mrf.mxu0
        %v1925 = vadd.f32 0.0, %v1924
        %v1926 = vpop.f32.mrf.mxu0
        %1927 = vmatprep.mubr.bf16.mxu0 0
        %1928 = vmatmul.mubr.bf16.gmra.mxu0 %v1783
        %v1929 = vpop.f32.mrf.mxu0
        %v1930 = vadd.f32 0.0, %v1929
        %v1931 = vpop.f32.mrf.mxu0
        %v1932 = vpop.f32.mrf.mxu0
        %v1933 = vadd.f32 0.0, %v1932
        %v1934 = vpop.f32.mrf.mxu0
        %1935 = vmatprep.mubr.bf16.mxu0 0
        %1936 = vmatmul.mubr.bf16.gmra.mxu0 %v1786
        %v1937 = vpop.f32.mrf.mxu0
        %v1938 = vadd.f32 0.0, %v1937
        %v1939 = vpop.f32.mrf.mxu0
        %v1940 = vpop.f32.mrf.mxu0
        %v1941 = vadd.f32 0.0, %v1940
        %v1942 = vpop.f32.mrf.mxu0
        %1943 = vmatprep.mubr.bf16.mxu0 0
        %1944 = vmatmul.mubr.bf16.gmra.mxu0 %v1789
        %v1945 = vpop.f32.mrf.mxu0
        %v1946 = vadd.f32 0.0, %v1945
        %v1947 = vpop.f32.mrf.mxu0
        %v1948 = vpop.f32.mrf.mxu0
        %v1949 = vadd.f32 0.0, %v1948
        %v1950 = vpop.f32.mrf.mxu0
        %1951 = vdwg.mxu0
        %v1952 = vadd.f32 %v1552, %v1826
        %v1953 = vadd.f32 %v1555, %v1829
        %v1954 = vadd.f32 %v1560, %v1834
        %v1955 = vadd.f32 %v1563, %v1837
        %v1956 = vadd.f32 %v1568, %v1842
        %v1957 = vadd.f32 %v1571, %v1845
        %v1958 = vadd.f32 %v1576, %v1850
        %v1959 = vadd.f32 %v1579, %v1853
        %v1960 = vadd.f32 %v1584, %v1858
        %v1961 = vadd.f32 %v1587, %v1861
        %v1962 = vadd.f32 %v1592, %v1866
        %v1963 = vadd.f32 %v1595, %v1869
        %v1964 = vadd.f32 %v1600, %v1874
        %v1965 = vadd.f32 %v1603, %v1877
        %v1966 = vadd.f32 %v1608, %v1882
        %v1967 = vadd.f32 %v1611, %v1885
        %v1968 = vadd.f32 %v1616, %v1890
        %v1969 = vadd.f32 %v1619, %v1893
        %v1970 = vadd.f32 %v1624, %v1898
        %v1971 = vadd.f32 %v1627, %v1901
        %v1972 = vadd.f32 %v1632, %v1906
        %v1973 = vadd.f32 %v1635, %v1909
        %v1974 = vadd.f32 %v1640, %v1914
        %v1975 = vadd.f32 %v1643, %v1917
        %v1976 = vadd.f32 %v1648, %v1922
        %v1977 = vadd.f32 %v1651, %v1925
        %v1978 = vadd.f32 %v1656, %v1930
        %v1979 = vadd.f32 %v1659, %v1933
        %v1980 = vadd.f32 %v1664, %v1938
        %v1981 = vadd.f32 %v1667, %v1941
        %v1982 = vadd.f32 %v1672, %v1946
        %v1983 = vadd.f32 %v1675, %v1949
        %v1984 = vld [vmem:[%s1098] sm:$0xff]
        %v1985 = vld [vmem:[%s1098 + $0x8] sm:$0xff]
        %v1986 = vld [vmem:[%s1098 + $0x18] sm:$0xff]
        %v1987 = vld [vmem:[%s1098 + $0x20] sm:$0xff]
        %v1988 = vld [vmem:[%s1098 + $0x30] sm:$0xff]
        %v1989 = vld [vmem:[%s1098 + $0x38] sm:$0xff]
        %v1990 = vld [vmem:[%s1098 + $0x48] sm:$0xff]
        %v1991 = vld [vmem:[%s1098 + $0x50] sm:$0xff]
        %v1992 = vld [vmem:[%s1098 + $0x60] sm:$0xff]
        %v1993 = vld [vmem:[%s1098 + $0x68] sm:$0xff]
        %v1994 = vld [vmem:[%s1098 + $0x78] sm:$0xff]
        %v1995 = vld [vmem:[%s1098 + $0x80] sm:$0xff]
        %v1996 = vld [vmem:[%s1098 + $0x90] sm:$0xff]
        %v1997 = vld [vmem:[%s1098 + $0x98] sm:$0xff]
        %v1998 = vld [vmem:[%s1098 + $0xa8] sm:$0xff]
        %v1999 = vld [vmem:[%s1098 + $0xb0] sm:$0xff]
        %v2000 = vld [vmem:[%s1098 + $0xc0] sm:$0xff]
        %v2001 = vld [vmem:[%s1098 + $0xc8] sm:$0xff]
        %v2002 = vld [vmem:[%s1098 + $0xd8] sm:$0xff]
        %v2003 = vld [vmem:[%s1098 + $0xe0] sm:$0xff]
        %v2004 = vld [vmem:[%s1098 + $0xf0] sm:$0xff]
        %v2005 = vld [vmem:[%s1098 + $0xf8] sm:$0xff]
        %v2006 = vld [vmem:[%s1098 + $0x108] sm:$0xff]
        %v2007 = vld [vmem:[%s1098 + $0x110] sm:$0xff]
        %v2008 = vld [vmem:[%s1098 + $0x120] sm:$0xff]
        %v2009 = vld [vmem:[%s1098 + $0x128] sm:$0xff]
        %v2010 = vld [vmem:[%s1098 + $0x138] sm:$0xff]
        %v2011 = vld [vmem:[%s1098 + $0x140] sm:$0xff]
        %v2012 = vld [vmem:[%s1098 + $0x150] sm:$0xff]
        %v2013 = vld [vmem:[%s1098 + $0x158] sm:$0xff]
        %v2014 = vld [vmem:[%s1098 + $0x168] sm:$0xff]
        %v2015 = vld [vmem:[%s1098 + $0x170] sm:$0xff]
        %v2016 = vpack.c.bf16 %v1985, %v1984
        %v2017 = vpack.c.bf16 %v1987, %v1986
        %v2018 = vpack.c.bf16 %v1989, %v1988
        %v2019 = vpack.c.bf16 %v1991, %v1990
        %v2020 = vpack.c.bf16 %v1993, %v1992
        %v2021 = vpack.c.bf16 %v1995, %v1994
        %v2022 = vpack.c.bf16 %v1997, %v1996
        %v2023 = vpack.c.bf16 %v1999, %v1998
        %v2024 = vpack.c.bf16 %v2001, %v2000
        %v2025 = vpack.c.bf16 %v2003, %v2002
        %v2026 = vpack.c.bf16 %v2005, %v2004
        %v2027 = vpack.c.bf16 %v2007, %v2006
        %v2028 = vpack.c.bf16 %v2009, %v2008
        %v2029 = vpack.c.bf16 %v2011, %v2010
        %v2030 = vpack.c.bf16 %v2013, %v2012
        %v2031 = vpack.c.bf16 %v2015, %v2014
        %s2032 = scalar_lea.vmem %s5, 48
        %v2033 = vld [vmem:[%s2032] sm:$0xf]
        %v2034 = vld [vmem:[%s2032 + $0x4] sm:$0xf]
        %v2035 = vld [vmem:[%s2032 + $0x8] sm:$0xf]
        %v2036 = vld [vmem:[%s2032 + $0xc] sm:$0xf]
        %v2041 = vunpack.c.l.b16 %v2033
        %v2042 = vunpack.c.l.b16 %v2034
        %v2043 = vunpack.c.l.b16 %v2035
        %v2044 = vunpack.c.l.b16 %v2036
        %v2045 = vpack.c.b16 %v2042, %v2041
        %v2046 = vpack.c.b16 %v2044, %v2043
        %v2050 = vsel %vm723, %v2016, 0
        %v2053 = vsel %vm723, %v2017, 0
        %v2056 = vsel %vm723, %v2018, 0
        %v2059 = vsel %vm723, %v2019, 0
        %v2062 = vsel %vm723, %v2020, 0
        %v2065 = vsel %vm723, %v2021, 0
        %v2068 = vsel %vm723, %v2022, 0
        %v2071 = vsel %vm723, %v2023, 0
        %v2074 = vsel %vm723, %v2024, 0
        %v2077 = vsel %vm723, %v2025, 0
        %v2080 = vsel %vm723, %v2026, 0
        %v2083 = vsel %vm723, %v2027, 0
        %v2086 = vsel %vm723, %v2028, 0
        %v2089 = vsel %vm723, %v2029, 0
        %v2092 = vsel %vm723, %v2030, 0
        %v2095 = vsel %vm723, %v2031, 0
        %2097 = vmatprep.subr.bf16.mxu0 0
        %2098 = vmatpush1.bf16.msra.mxu0 0
        %2099 = vmatprep.subr.bf16.mxu0 0
        %2100 = vmatpush1.bf16.msra.mxu0 0
        %2101 = vmatprep.subr.bf16.mxu0 0
        %2102 = vmatpush1.bf16.msra.mxu0 0
        %2103 = vmatprep.subr.bf16.mxu0 0
        %2104 = vmatpush1.bf16.msra.mxu0 0
        %2105 = vmatprep.subr.bf16.mxu0 0
        %2106 = vmatpush1.bf16.msra.mxu0 0
        %2107 = vmatprep.subr.bf16.mxu0 0
        %2108 = vmatpush1.bf16.msra.mxu0 0
        %2109 = vmatprep.subr.bf16.mxu0 0
        %2110 = vmatpush1.bf16.msra.mxu0 %v2046
        %2111 = vmatprep.subr.bf16.mxu0 0
        %2112 = vmatpush1.bf16.msra.mxu0 %v2045
        %2113 = vmatprep.subr.bf16.mxu0 0
        %2114 = vmatpush2.bf16.msra.mxu0 0
        %2115 = vmatprep.subr.bf16.mxu0 0
        %2116 = vmatpush2.bf16.msra.mxu0 0
        %2117 = vmatprep.subr.bf16.mxu0 0
        %2118 = vmatpush2.bf16.msra.mxu0 0
        %2119 = vmatprep.subr.bf16.mxu0 0
        %2120 = vmatpush2.bf16.msra.mxu0 0
        %2121 = vmatprep.subr.bf16.mxu0 0
        %2122 = vmatpush2.bf16.msra.mxu0 0
        %2123 = vmatprep.subr.bf16.mxu0 0
        %2124 = vmatpush2.bf16.msra.mxu0 0
        %2125 = vmatprep.subr.bf16.mxu0 0
        %2126 = vmatpush2.bf16.msra.mxu0 0
        %2127 = vmatprep.subr.bf16.mxu0 0
        %2128 = vmatpush2.bf16.msra.mxu0 0
        %2129 = vmatprep.mubr.bf16.mxu0 0
        %2130 = vmatmul.mubr.bf16.gmra.mxu0 %v2050
        %v2131 = vpop.f32.mrf.mxu0
        %v2132 = vadd.f32 0.0, %v2131
        %v2133 = vpop.f32.mrf.mxu0
        %v2134 = vpop.f32.mrf.mxu0
        %v2135 = vadd.f32 0.0, %v2134
        %v2136 = vpop.f32.mrf.mxu0
        %2137 = vmatprep.mubr.bf16.mxu0 0
        %2138 = vmatmul.mubr.bf16.gmra.mxu0 %v2053
        %v2139 = vpop.f32.mrf.mxu0
        %v2140 = vadd.f32 0.0, %v2139
        %v2141 = vpop.f32.mrf.mxu0
        %v2142 = vpop.f32.mrf.mxu0
        %v2143 = vadd.f32 0.0, %v2142
        %v2144 = vpop.f32.mrf.mxu0
        %2145 = vmatprep.mubr.bf16.mxu0 0
        %2146 = vmatmul.mubr.bf16.gmra.mxu0 %v2056
        %v2147 = vpop.f32.mrf.mxu0
        %v2148 = vadd.f32 0.0, %v2147
        %v2149 = vpop.f32.mrf.mxu0
        %v2150 = vpop.f32.mrf.mxu0
        %v2151 = vadd.f32 0.0, %v2150
        %v2152 = vpop.f32.mrf.mxu0
        %2153 = vmatprep.mubr.bf16.mxu0 0
        %2154 = vmatmul.mubr.bf16.gmra.mxu0 %v2059
        %v2155 = vpop.f32.mrf.mxu0
        %v2156 = vadd.f32 0.0, %v2155
        %v2157 = vpop.f32.mrf.mxu0
        %v2158 = vpop.f32.mrf.mxu0
        %v2159 = vadd.f32 0.0, %v2158
        %v2160 = vpop.f32.mrf.mxu0
        %2161 = vmatprep.mubr.bf16.mxu0 0
        %2162 = vmatmul.mubr.bf16.gmra.mxu0 %v2062
        %v2163 = vpop.f32.mrf.mxu0
        %v2164 = vadd.f32 0.0, %v2163
        %v2165 = vpop.f32.mrf.mxu0
        %v2166 = vpop.f32.mrf.mxu0
        %v2167 = vadd.f32 0.0, %v2166
        %v2168 = vpop.f32.mrf.mxu0
        %2169 = vmatprep.mubr.bf16.mxu0 0
        %2170 = vmatmul.mubr.bf16.gmra.mxu0 %v2065
        %v2171 = vpop.f32.mrf.mxu0
        %v2172 = vadd.f32 0.0, %v2171
        %v2173 = vpop.f32.mrf.mxu0
        %v2174 = vpop.f32.mrf.mxu0
        %v2175 = vadd.f32 0.0, %v2174
        %v2176 = vpop.f32.mrf.mxu0
        %2177 = vmatprep.mubr.bf16.mxu0 0
        %2178 = vmatmul.mubr.bf16.gmra.mxu0 %v2068
        %v2179 = vpop.f32.mrf.mxu0
        %v2180 = vadd.f32 0.0, %v2179
        %v2181 = vpop.f32.mrf.mxu0
        %v2182 = vpop.f32.mrf.mxu0
        %v2183 = vadd.f32 0.0, %v2182
        %v2184 = vpop.f32.mrf.mxu0
        %2185 = vmatprep.mubr.bf16.mxu0 0
        %2186 = vmatmul.mubr.bf16.gmra.mxu0 %v2071
        %v2187 = vpop.f32.mrf.mxu0
        %v2188 = vadd.f32 0.0, %v2187
        %v2189 = vpop.f32.mrf.mxu0
        %v2190 = vpop.f32.mrf.mxu0
        %v2191 = vadd.f32 0.0, %v2190
        %v2192 = vpop.f32.mrf.mxu0
        %2193 = vmatprep.mubr.bf16.mxu0 0
        %2194 = vmatmul.mubr.bf16.gmra.mxu0 %v2074
        %v2195 = vpop.f32.mrf.mxu0
        %v2196 = vadd.f32 0.0, %v2195
        %v2197 = vpop.f32.mrf.mxu0
        %v2198 = vpop.f32.mrf.mxu0
        %v2199 = vadd.f32 0.0, %v2198
        %v2200 = vpop.f32.mrf.mxu0
        %2201 = vmatprep.mubr.bf16.mxu0 0
        %2202 = vmatmul.mubr.bf16.gmra.mxu0 %v2077
        %v2203 = vpop.f32.mrf.mxu0
        %v2204 = vadd.f32 0.0, %v2203
        %v2205 = vpop.f32.mrf.mxu0
        %v2206 = vpop.f32.mrf.mxu0
        %v2207 = vadd.f32 0.0, %v2206
        %v2208 = vpop.f32.mrf.mxu0
        %2209 = vmatprep.mubr.bf16.mxu0 0
        %2210 = vmatmul.mubr.bf16.gmra.mxu0 %v2080
        %v2211 = vpop.f32.mrf.mxu0
        %v2212 = vadd.f32 0.0, %v2211
        %v2213 = vpop.f32.mrf.mxu0
        %v2214 = vpop.f32.mrf.mxu0
        %v2215 = vadd.f32 0.0, %v2214
        %v2216 = vpop.f32.mrf.mxu0
        %2217 = vmatprep.mubr.bf16.mxu0 0
        %2218 = vmatmul.mubr.bf16.gmra.mxu0 %v2083
        %v2219 = vpop.f32.mrf.mxu0
        %v2220 = vadd.f32 0.0, %v2219
        %v2221 = vpop.f32.mrf.mxu0
        %v2222 = vpop.f32.mrf.mxu0
        %v2223 = vadd.f32 0.0, %v2222
        %v2224 = vpop.f32.mrf.mxu0
        %2225 = vmatprep.mubr.bf16.mxu0 0
        %2226 = vmatmul.mubr.bf16.gmra.mxu0 %v2086
        %v2227 = vpop.f32.mrf.mxu0
        %v2228 = vadd.f32 0.0, %v2227
        %v2229 = vpop.f32.mrf.mxu0
        %v2230 = vpop.f32.mrf.mxu0
        %v2231 = vadd.f32 0.0, %v2230
        %v2232 = vpop.f32.mrf.mxu0
        %2233 = vmatprep.mubr.bf16.mxu0 0
        %2234 = vmatmul.mubr.bf16.gmra.mxu0 %v2089
        %v2235 = vpop.f32.mrf.mxu0
        %v2236 = vadd.f32 0.0, %v2235
        %v2237 = vpop.f32.mrf.mxu0
        %v2238 = vpop.f32.mrf.mxu0
        %v2239 = vadd.f32 0.0, %v2238
        %v2240 = vpop.f32.mrf.mxu0
        %2241 = vmatprep.mubr.bf16.mxu0 0
        %2242 = vmatmul.mubr.bf16.gmra.mxu0 %v2092
        %v2243 = vpop.f32.mrf.mxu0
        %v2244 = vadd.f32 0.0, %v2243
        %v2245 = vpop.f32.mrf.mxu0
        %v2246 = vpop.f32.mrf.mxu0
        %v2247 = vadd.f32 0.0, %v2246
        %v2248 = vpop.f32.mrf.mxu0
        %2249 = vmatprep.mubr.bf16.mxu0 0
        %2250 = vmatmul.mubr.bf16.gmra.mxu0 %v2095
        %v2251 = vpop.f32.mrf.mxu0
        %v2252 = vadd.f32 0.0, %v2251
        %v2253 = vpop.f32.mrf.mxu0
        %v2254 = vpop.f32.mrf.mxu0
        %v2255 = vadd.f32 0.0, %v2254
        %v2256 = vpop.f32.mrf.mxu0
        %2257 = vdwg.mxu0
        %v2258 = vadd.f32 %v1952, %v2132
        %v2259 = vadd.f32 %v1953, %v2135
        %v2260 = vadd.f32 %v1954, %v2140
        %v2261 = vadd.f32 %v1955, %v2143
        %v2262 = vadd.f32 %v1956, %v2148
        %v2263 = vadd.f32 %v1957, %v2151
        %v2264 = vadd.f32 %v1958, %v2156
        %v2265 = vadd.f32 %v1959, %v2159
        %v2266 = vadd.f32 %v1960, %v2164
        %v2267 = vadd.f32 %v1961, %v2167
        %v2268 = vadd.f32 %v1962, %v2172
        %v2269 = vadd.f32 %v1963, %v2175
        %v2270 = vadd.f32 %v1964, %v2180
        %v2271 = vadd.f32 %v1965, %v2183
        %v2272 = vadd.f32 %v1966, %v2188
        %v2273 = vadd.f32 %v1967, %v2191
        %v2274 = vadd.f32 %v1968, %v2196
        %v2275 = vadd.f32 %v1969, %v2199
        %v2276 = vadd.f32 %v1970, %v2204
        %v2277 = vadd.f32 %v1971, %v2207
        %v2278 = vadd.f32 %v1972, %v2212
        %v2279 = vadd.f32 %v1973, %v2215
        %v2280 = vadd.f32 %v1974, %v2220
        %v2281 = vadd.f32 %v1975, %v2223
        %v2282 = vadd.f32 %v1976, %v2228
        %v2283 = vadd.f32 %v1977, %v2231
        %v2284 = vadd.f32 %v1978, %v2236
        %v2285 = vadd.f32 %v1979, %v2239
        %v2286 = vadd.f32 %v1980, %v2244
        %v2287 = vadd.f32 %v1981, %v2247
        %v2288 = vadd.f32 %v1982, %v2252
        %v2289 = vadd.f32 %v1983, %v2255
        %v2290 = vld [vmem:[%s1098 + $0x1] sm:$0xff]
        %v2291 = vld [vmem:[%s1098 + $0x9] sm:$0xff]
        %v2292 = vld [vmem:[%s1098 + $0x19] sm:$0xff]
        %v2293 = vld [vmem:[%s1098 + $0x21] sm:$0xff]
        %v2294 = vld [vmem:[%s1098 + $0x31] sm:$0xff]
        %v2295 = vld [vmem:[%s1098 + $0x39] sm:$0xff]
        %v2296 = vld [vmem:[%s1098 + $0x49] sm:$0xff]
        %v2297 = vld [vmem:[%s1098 + $0x51] sm:$0xff]
        %v2298 = vld [vmem:[%s1098 + $0x61] sm:$0xff]
        %v2299 = vld [vmem:[%s1098 + $0x69] sm:$0xff]
        %v2300 = vld [vmem:[%s1098 + $0x79] sm:$0xff]
        %v2301 = vld [vmem:[%s1098 + $0x81] sm:$0xff]
        %v2302 = vld [vmem:[%s1098 + $0x91] sm:$0xff]
        %v2303 = vld [vmem:[%s1098 + $0x99] sm:$0xff]
        %v2304 = vld [vmem:[%s1098 + $0xa9] sm:$0xff]
        %v2305 = vld [vmem:[%s1098 + $0xb1] sm:$0xff]
        %v2306 = vld [vmem:[%s1098 + $0xc1] sm:$0xff]
        %v2307 = vld [vmem:[%s1098 + $0xc9] sm:$0xff]
        %v2308 = vld [vmem:[%s1098 + $0xd9] sm:$0xff]
        %v2309 = vld [vmem:[%s1098 + $0xe1] sm:$0xff]
        %v2310 = vld [vmem:[%s1098 + $0xf1] sm:$0xff]
        %v2311 = vld [vmem:[%s1098 + $0xf9] sm:$0xff]
        %v2312 = vld [vmem:[%s1098 + $0x109] sm:$0xff]
        %v2313 = vld [vmem:[%s1098 + $0x111] sm:$0xff]
        %v2314 = vld [vmem:[%s1098 + $0x121] sm:$0xff]
        %v2315 = vld [vmem:[%s1098 + $0x129] sm:$0xff]
        %v2316 = vld [vmem:[%s1098 + $0x139] sm:$0xff]
        %v2317 = vld [vmem:[%s1098 + $0x141] sm:$0xff]
        %v2318 = vld [vmem:[%s1098 + $0x151] sm:$0xff]
        %v2319 = vld [vmem:[%s1098 + $0x159] sm:$0xff]
        %v2320 = vld [vmem:[%s1098 + $0x169] sm:$0xff]
        %v2321 = vld [vmem:[%s1098 + $0x171] sm:$0xff]
        %v2322 = vpack.c.bf16 %v2291, %v2290
        %v2323 = vpack.c.bf16 %v2293, %v2292
        %v2324 = vpack.c.bf16 %v2295, %v2294
        %v2325 = vpack.c.bf16 %v2297, %v2296
        %v2326 = vpack.c.bf16 %v2299, %v2298
        %v2327 = vpack.c.bf16 %v2301, %v2300
        %v2328 = vpack.c.bf16 %v2303, %v2302
        %v2329 = vpack.c.bf16 %v2305, %v2304
        %v2330 = vpack.c.bf16 %v2307, %v2306
        %v2331 = vpack.c.bf16 %v2309, %v2308
        %v2332 = vpack.c.bf16 %v2311, %v2310
        %v2333 = vpack.c.bf16 %v2313, %v2312
        %v2334 = vpack.c.bf16 %v2315, %v2314
        %v2335 = vpack.c.bf16 %v2317, %v2316
        %v2336 = vpack.c.bf16 %v2319, %v2318
        %v2337 = vpack.c.bf16 %v2321, %v2320
        %s2338 = scalar_lea.vmem %s5, 64
        %v2339 = vld [vmem:[%s2338] sm:$0xf]
        %v2340 = vld [vmem:[%s2338 + $0x4] sm:$0xf]
        %v2341 = vld [vmem:[%s2338 + $0x8] sm:$0xf]
        %v2342 = vld [vmem:[%s2338 + $0xc] sm:$0xf]
        %v2347 = vunpack.c.l.b16 %v2339
        %v2348 = vunpack.c.l.b16 %v2340
        %v2349 = vunpack.c.l.b16 %v2341
        %v2350 = vunpack.c.l.b16 %v2342
        %v2351 = vpack.c.b16 %v2348, %v2347
        %v2352 = vpack.c.b16 %v2350, %v2349
        %v2356 = vsel %vm723, %v2322, 0
        %v2359 = vsel %vm723, %v2323, 0
        %v2362 = vsel %vm723, %v2324, 0
        %v2365 = vsel %vm723, %v2325, 0
        %v2368 = vsel %vm723, %v2326, 0
        %v2371 = vsel %vm723, %v2327, 0
        %v2374 = vsel %vm723, %v2328, 0
        %v2377 = vsel %vm723, %v2329, 0
        %v2380 = vsel %vm723, %v2330, 0
        %v2383 = vsel %vm723, %v2331, 0
        %v2386 = vsel %vm723, %v2332, 0
        %v2389 = vsel %vm723, %v2333, 0
        %v2392 = vsel %vm723, %v2334, 0
        %v2395 = vsel %vm723, %v2335, 0
        %v2398 = vsel %vm723, %v2336, 0
        %v2401 = vsel %vm723, %v2337, 0
        %2403 = vmatprep.subr.bf16.mxu0 0
        %2404 = vmatpush1.bf16.msra.mxu0 0
        %2405 = vmatprep.subr.bf16.mxu0 0
        %2406 = vmatpush1.bf16.msra.mxu0 0
        %2407 = vmatprep.subr.bf16.mxu0 0
        %2408 = vmatpush1.bf16.msra.mxu0 0
        %2409 = vmatprep.subr.bf16.mxu0 0
        %2410 = vmatpush1.bf16.msra.mxu0 0
        %2411 = vmatprep.subr.bf16.mxu0 0
        %2412 = vmatpush1.bf16.msra.mxu0 0
        %2413 = vmatprep.subr.bf16.mxu0 0
        %2414 = vmatpush1.bf16.msra.mxu0 0
        %2415 = vmatprep.subr.bf16.mxu0 0
        %2416 = vmatpush1.bf16.msra.mxu0 %v2352
        %2417 = vmatprep.subr.bf16.mxu0 0
        %2418 = vmatpush1.bf16.msra.mxu0 %v2351
        %2419 = vmatprep.subr.bf16.mxu0 0
        %2420 = vmatpush2.bf16.msra.mxu0 0
        %2421 = vmatprep.subr.bf16.mxu0 0
        %2422 = vmatpush2.bf16.msra.mxu0 0
        %2423 = vmatprep.subr.bf16.mxu0 0
        %2424 = vmatpush2.bf16.msra.mxu0 0
        %2425 = vmatprep.subr.bf16.mxu0 0
        %2426 = vmatpush2.bf16.msra.mxu0 0
        %2427 = vmatprep.subr.bf16.mxu0 0
        %2428 = vmatpush2.bf16.msra.mxu0 0
        %2429 = vmatprep.subr.bf16.mxu0 0
        %2430 = vmatpush2.bf16.msra.mxu0 0
        %2431 = vmatprep.subr.bf16.mxu0 0
        %2432 = vmatpush2.bf16.msra.mxu0 0
        %2433 = vmatprep.subr.bf16.mxu0 0
        %2434 = vmatpush2.bf16.msra.mxu0 0
        %2435 = vmatprep.mubr.bf16.mxu0 0
        %2436 = vmatmul.mubr.bf16.gmra.mxu0 %v2356
        %v2437 = vpop.f32.mrf.mxu0
        %v2438 = vadd.f32 0.0, %v2437
        %v2439 = vpop.f32.mrf.mxu0
        %v2440 = vpop.f32.mrf.mxu0
        %v2441 = vadd.f32 0.0, %v2440
        %v2442 = vpop.f32.mrf.mxu0
        %2443 = vmatprep.mubr.bf16.mxu0 0
        %2444 = vmatmul.mubr.bf16.gmra.mxu0 %v2359
        %v2445 = vpop.f32.mrf.mxu0
        %v2446 = vadd.f32 0.0, %v2445
        %v2447 = vpop.f32.mrf.mxu0
        %v2448 = vpop.f32.mrf.mxu0
        %v2449 = vadd.f32 0.0, %v2448
        %v2450 = vpop.f32.mrf.mxu0
        %2451 = vmatprep.mubr.bf16.mxu0 0
        %2452 = vmatmul.mubr.bf16.gmra.mxu0 %v2362
        %v2453 = vpop.f32.mrf.mxu0
        %v2454 = vadd.f32 0.0, %v2453
        %v2455 = vpop.f32.mrf.mxu0
        %v2456 = vpop.f32.mrf.mxu0
        %v2457 = vadd.f32 0.0, %v2456
        %v2458 = vpop.f32.mrf.mxu0
        %2459 = vmatprep.mubr.bf16.mxu0 0
        %2460 = vmatmul.mubr.bf16.gmra.mxu0 %v2365
        %v2461 = vpop.f32.mrf.mxu0
        %v2462 = vadd.f32 0.0, %v2461
        %v2463 = vpop.f32.mrf.mxu0
        %v2464 = vpop.f32.mrf.mxu0
        %v2465 = vadd.f32 0.0, %v2464
        %v2466 = vpop.f32.mrf.mxu0
        %2467 = vmatprep.mubr.bf16.mxu0 0
        %2468 = vmatmul.mubr.bf16.gmra.mxu0 %v2368
        %v2469 = vpop.f32.mrf.mxu0
        %v2470 = vadd.f32 0.0, %v2469
        %v2471 = vpop.f32.mrf.mxu0
        %v2472 = vpop.f32.mrf.mxu0
        %v2473 = vadd.f32 0.0, %v2472
        %v2474 = vpop.f32.mrf.mxu0
        %2475 = vmatprep.mubr.bf16.mxu0 0
        %2476 = vmatmul.mubr.bf16.gmra.mxu0 %v2371
        %v2477 = vpop.f32.mrf.mxu0
        %v2478 = vadd.f32 0.0, %v2477
        %v2479 = vpop.f32.mrf.mxu0
        %v2480 = vpop.f32.mrf.mxu0
        %v2481 = vadd.f32 0.0, %v2480
        %v2482 = vpop.f32.mrf.mxu0
        %2483 = vmatprep.mubr.bf16.mxu0 0
        %2484 = vmatmul.mubr.bf16.gmra.mxu0 %v2374
        %v2485 = vpop.f32.mrf.mxu0
        %v2486 = vadd.f32 0.0, %v2485
        %v2487 = vpop.f32.mrf.mxu0
        %v2488 = vpop.f32.mrf.mxu0
        %v2489 = vadd.f32 0.0, %v2488
        %v2490 = vpop.f32.mrf.mxu0
        %2491 = vmatprep.mubr.bf16.mxu0 0
        %2492 = vmatmul.mubr.bf16.gmra.mxu0 %v2377
        %v2493 = vpop.f32.mrf.mxu0
        %v2494 = vadd.f32 0.0, %v2493
        %v2495 = vpop.f32.mrf.mxu0
        %v2496 = vpop.f32.mrf.mxu0
        %v2497 = vadd.f32 0.0, %v2496
        %v2498 = vpop.f32.mrf.mxu0
        %2499 = vmatprep.mubr.bf16.mxu0 0
        %2500 = vmatmul.mubr.bf16.gmra.mxu0 %v2380
        %v2501 = vpop.f32.mrf.mxu0
        %v2502 = vadd.f32 0.0, %v2501
        %v2503 = vpop.f32.mrf.mxu0
        %v2504 = vpop.f32.mrf.mxu0
        %v2505 = vadd.f32 0.0, %v2504
        %v2506 = vpop.f32.mrf.mxu0
        %2507 = vmatprep.mubr.bf16.mxu0 0
        %2508 = vmatmul.mubr.bf16.gmra.mxu0 %v2383
        %v2509 = vpop.f32.mrf.mxu0
        %v2510 = vadd.f32 0.0, %v2509
        %v2511 = vpop.f32.mrf.mxu0
        %v2512 = vpop.f32.mrf.mxu0
        %v2513 = vadd.f32 0.0, %v2512
        %v2514 = vpop.f32.mrf.mxu0
        %2515 = vmatprep.mubr.bf16.mxu0 0
        %2516 = vmatmul.mubr.bf16.gmra.mxu0 %v2386
        %v2517 = vpop.f32.mrf.mxu0
        %v2518 = vadd.f32 0.0, %v2517
        %v2519 = vpop.f32.mrf.mxu0
        %v2520 = vpop.f32.mrf.mxu0
        %v2521 = vadd.f32 0.0, %v2520
        %v2522 = vpop.f32.mrf.mxu0
        %2523 = vmatprep.mubr.bf16.mxu0 0
        %2524 = vmatmul.mubr.bf16.gmra.mxu0 %v2389
        %v2525 = vpop.f32.mrf.mxu0
        %v2526 = vadd.f32 0.0, %v2525
        %v2527 = vpop.f32.mrf.mxu0
        %v2528 = vpop.f32.mrf.mxu0
        %v2529 = vadd.f32 0.0, %v2528
        %v2530 = vpop.f32.mrf.mxu0
        %2531 = vmatprep.mubr.bf16.mxu0 0
        %2532 = vmatmul.mubr.bf16.gmra.mxu0 %v2392
        %v2533 = vpop.f32.mrf.mxu0
        %v2534 = vadd.f32 0.0, %v2533
        %v2535 = vpop.f32.mrf.mxu0
        %v2536 = vpop.f32.mrf.mxu0
        %v2537 = vadd.f32 0.0, %v2536
        %v2538 = vpop.f32.mrf.mxu0
        %2539 = vmatprep.mubr.bf16.mxu0 0
        %2540 = vmatmul.mubr.bf16.gmra.mxu0 %v2395
        %v2541 = vpop.f32.mrf.mxu0
        %v2542 = vadd.f32 0.0, %v2541
        %v2543 = vpop.f32.mrf.mxu0
        %v2544 = vpop.f32.mrf.mxu0
        %v2545 = vadd.f32 0.0, %v2544
        %v2546 = vpop.f32.mrf.mxu0
        %2547 = vmatprep.mubr.bf16.mxu0 0
        %2548 = vmatmul.mubr.bf16.gmra.mxu0 %v2398
        %v2549 = vpop.f32.mrf.mxu0
        %v2550 = vadd.f32 0.0, %v2549
        %v2551 = vpop.f32.mrf.mxu0
        %v2552 = vpop.f32.mrf.mxu0
        %v2553 = vadd.f32 0.0, %v2552
        %v2554 = vpop.f32.mrf.mxu0
        %2555 = vmatprep.mubr.bf16.mxu0 0
        %2556 = vmatmul.mubr.bf16.gmra.mxu0 %v2401
        %v2557 = vpop.f32.mrf.mxu0
        %v2558 = vadd.f32 0.0, %v2557
        %v2559 = vpop.f32.mrf.mxu0
        %v2560 = vpop.f32.mrf.mxu0
        %v2561 = vadd.f32 0.0, %v2560
        %v2562 = vpop.f32.mrf.mxu0
        %2563 = vdwg.mxu0
        %v2564 = vadd.f32 %v2258, %v2438
        %v2565 = vadd.f32 %v2259, %v2441
        %v2566 = vadd.f32 %v2260, %v2446
        %v2567 = vadd.f32 %v2261, %v2449
        %v2568 = vadd.f32 %v2262, %v2454
        %v2569 = vadd.f32 %v2263, %v2457
        %v2570 = vadd.f32 %v2264, %v2462
        %v2571 = vadd.f32 %v2265, %v2465
        %v2572 = vadd.f32 %v2266, %v2470
        %v2573 = vadd.f32 %v2267, %v2473
        %v2574 = vadd.f32 %v2268, %v2478
        %v2575 = vadd.f32 %v2269, %v2481
        %v2576 = vadd.f32 %v2270, %v2486
        %v2577 = vadd.f32 %v2271, %v2489
        %v2578 = vadd.f32 %v2272, %v2494
        %v2579 = vadd.f32 %v2273, %v2497
        %v2580 = vadd.f32 %v2274, %v2502
        %v2581 = vadd.f32 %v2275, %v2505
        %v2582 = vadd.f32 %v2276, %v2510
        %v2583 = vadd.f32 %v2277, %v2513
        %v2584 = vadd.f32 %v2278, %v2518
        %v2585 = vadd.f32 %v2279, %v2521
        %v2586 = vadd.f32 %v2280, %v2526
        %v2587 = vadd.f32 %v2281, %v2529
        %v2588 = vadd.f32 %v2282, %v2534
        %v2589 = vadd.f32 %v2283, %v2537
        %v2590 = vadd.f32 %v2284, %v2542
        %v2591 = vadd.f32 %v2285, %v2545
        %v2592 = vadd.f32 %v2286, %v2550
        %v2593 = vadd.f32 %v2287, %v2553
        %v2594 = vadd.f32 %v2288, %v2558
        %v2595 = vadd.f32 %v2289, %v2561
        %v2596 = vld [vmem:[%s1098 + $0x2] sm:$0xff]
        %v2597 = vld [vmem:[%s1098 + $0xa] sm:$0xff]
        %v2598 = vld [vmem:[%s1098 + $0x1a] sm:$0xff]
        %v2599 = vld [vmem:[%s1098 + $0x22] sm:$0xff]
        %v2600 = vld [vmem:[%s1098 + $0x32] sm:$0xff]
        %v2601 = vld [vmem:[%s1098 + $0x3a] sm:$0xff]
        %v2602 = vld [vmem:[%s1098 + $0x4a] sm:$0xff]
        %v2603 = vld [vmem:[%s1098 + $0x52] sm:$0xff]
        %v2604 = vld [vmem:[%s1098 + $0x62] sm:$0xff]
        %v2605 = vld [vmem:[%s1098 + $0x6a] sm:$0xff]
        %v2606 = vld [vmem:[%s1098 + $0x7a] sm:$0xff]
        %v2607 = vld [vmem:[%s1098 + $0x82] sm:$0xff]
        %v2608 = vld [vmem:[%s1098 + $0x92] sm:$0xff]
        %v2609 = vld [vmem:[%s1098 + $0x9a] sm:$0xff]
        %v2610 = vld [vmem:[%s1098 + $0xaa] sm:$0xff]
        %v2611 = vld [vmem:[%s1098 + $0xb2] sm:$0xff]
        %v2612 = vld [vmem:[%s1098 + $0xc2] sm:$0xff]
        %v2613 = vld [vmem:[%s1098 + $0xca] sm:$0xff]
        %v2614 = vld [vmem:[%s1098 + $0xda] sm:$0xff]
        %v2615 = vld [vmem:[%s1098 + $0xe2] sm:$0xff]
        %v2616 = vld [vmem:[%s1098 + $0xf2] sm:$0xff]
        %v2617 = vld [vmem:[%s1098 + $0xfa] sm:$0xff]
        %v2618 = vld [vmem:[%s1098 + $0x10a] sm:$0xff]
        %v2619 = vld [vmem:[%s1098 + $0x112] sm:$0xff]
        %v2620 = vld [vmem:[%s1098 + $0x122] sm:$0xff]
        %v2621 = vld [vmem:[%s1098 + $0x12a] sm:$0xff]
        %v2622 = vld [vmem:[%s1098 + $0x13a] sm:$0xff]
        %v2623 = vld [vmem:[%s1098 + $0x142] sm:$0xff]
        %v2624 = vld [vmem:[%s1098 + $0x152] sm:$0xff]
        %v2625 = vld [vmem:[%s1098 + $0x15a] sm:$0xff]
        %v2626 = vld [vmem:[%s1098 + $0x16a] sm:$0xff]
        %v2627 = vld [vmem:[%s1098 + $0x172] sm:$0xff]
        %v2628 = vpack.c.bf16 %v2597, %v2596
        %v2629 = vpack.c.bf16 %v2599, %v2598
        %v2630 = vpack.c.bf16 %v2601, %v2600
        %v2631 = vpack.c.bf16 %v2603, %v2602
        %v2632 = vpack.c.bf16 %v2605, %v2604
        %v2633 = vpack.c.bf16 %v2607, %v2606
        %v2634 = vpack.c.bf16 %v2609, %v2608
        %v2635 = vpack.c.bf16 %v2611, %v2610
        %v2636 = vpack.c.bf16 %v2613, %v2612
        %v2637 = vpack.c.bf16 %v2615, %v2614
        %v2638 = vpack.c.bf16 %v2617, %v2616
        %v2639 = vpack.c.bf16 %v2619, %v2618
        %v2640 = vpack.c.bf16 %v2621, %v2620
        %v2641 = vpack.c.bf16 %v2623, %v2622
        %v2642 = vpack.c.bf16 %v2625, %v2624
        %v2643 = vpack.c.bf16 %v2627, %v2626
        %s2644 = scalar_lea.vmem %s5, 80
        %v2645 = vld [vmem:[%s2644] sm:$0xf]
        %v2646 = vld [vmem:[%s2644 + $0x4] sm:$0xf]
        %v2647 = vld [vmem:[%s2644 + $0x8] sm:$0xf]
        %v2648 = vld [vmem:[%s2644 + $0xc] sm:$0xf]
        %v2653 = vunpack.c.l.b16 %v2645
        %v2654 = vunpack.c.l.b16 %v2646
        %v2655 = vunpack.c.l.b16 %v2647
        %v2656 = vunpack.c.l.b16 %v2648
        %v2657 = vpack.c.b16 %v2654, %v2653
        %v2658 = vpack.c.b16 %v2656, %v2655
        %v2662 = vsel %vm723, %v2628, 0
        %v2665 = vsel %vm723, %v2629, 0
        %v2668 = vsel %vm723, %v2630, 0
        %v2671 = vsel %vm723, %v2631, 0
        %v2674 = vsel %vm723, %v2632, 0
        %v2677 = vsel %vm723, %v2633, 0
        %v2680 = vsel %vm723, %v2634, 0
        %v2683 = vsel %vm723, %v2635, 0
        %v2686 = vsel %vm723, %v2636, 0
        %v2689 = vsel %vm723, %v2637, 0
        %v2692 = vsel %vm723, %v2638, 0
        %v2695 = vsel %vm723, %v2639, 0
        %v2698 = vsel %vm723, %v2640, 0
        %v2701 = vsel %vm723, %v2641, 0
        %v2704 = vsel %vm723, %v2642, 0
        %v2707 = vsel %vm723, %v2643, 0
        %2709 = vmatprep.subr.bf16.mxu0 0
        %2710 = vmatpush1.bf16.msra.mxu0 0
        %2711 = vmatprep.subr.bf16.mxu0 0
        %2712 = vmatpush1.bf16.msra.mxu0 0
        %2713 = vmatprep.subr.bf16.mxu0 0
        %2714 = vmatpush1.bf16.msra.mxu0 0
        %2715 = vmatprep.subr.bf16.mxu0 0
        %2716 = vmatpush1.bf16.msra.mxu0 0
        %2717 = vmatprep.subr.bf16.mxu0 0
        %2718 = vmatpush1.bf16.msra.mxu0 0
        %2719 = vmatprep.subr.bf16.mxu0 0
        %2720 = vmatpush1.bf16.msra.mxu0 0
        %2721 = vmatprep.subr.bf16.mxu0 0
        %2722 = vmatpush1.bf16.msra.mxu0 %v2658
        %2723 = vmatprep.subr.bf16.mxu0 0
        %2724 = vmatpush1.bf16.msra.mxu0 %v2657
        %2725 = vmatprep.subr.bf16.mxu0 0
        %2726 = vmatpush2.bf16.msra.mxu0 0
        %2727 = vmatprep.subr.bf16.mxu0 0
        %2728 = vmatpush2.bf16.msra.mxu0 0
        %2729 = vmatprep.subr.bf16.mxu0 0
        %2730 = vmatpush2.bf16.msra.mxu0 0
        %2731 = vmatprep.subr.bf16.mxu0 0
        %2732 = vmatpush2.bf16.msra.mxu0 0
        %2733 = vmatprep.subr.bf16.mxu0 0
        %2734 = vmatpush2.bf16.msra.mxu0 0
        %2735 = vmatprep.subr.bf16.mxu0 0
        %2736 = vmatpush2.bf16.msra.mxu0 0
        %2737 = vmatprep.subr.bf16.mxu0 0
        %2738 = vmatpush2.bf16.msra.mxu0 0
        %2739 = vmatprep.subr.bf16.mxu0 0
        %2740 = vmatpush2.bf16.msra.mxu0 0
        %2741 = vmatprep.mubr.bf16.mxu0 0
        %2742 = vmatmul.mubr.bf16.gmra.mxu0 %v2662
        %v2743 = vpop.f32.mrf.mxu0
        %v2744 = vadd.f32 0.0, %v2743
        %v2745 = vpop.f32.mrf.mxu0
        %v2746 = vpop.f32.mrf.mxu0
        %v2747 = vadd.f32 0.0, %v2746
        %v2748 = vpop.f32.mrf.mxu0
        %2749 = vmatprep.mubr.bf16.mxu0 0
        %2750 = vmatmul.mubr.bf16.gmra.mxu0 %v2665
        %v2751 = vpop.f32.mrf.mxu0
        %v2752 = vadd.f32 0.0, %v2751
        %v2753 = vpop.f32.mrf.mxu0
        %v2754 = vpop.f32.mrf.mxu0
        %v2755 = vadd.f32 0.0, %v2754
        %v2756 = vpop.f32.mrf.mxu0
        %2757 = vmatprep.mubr.bf16.mxu0 0
        %2758 = vmatmul.mubr.bf16.gmra.mxu0 %v2668
        %v2759 = vpop.f32.mrf.mxu0
        %v2760 = vadd.f32 0.0, %v2759
        %v2761 = vpop.f32.mrf.mxu0
        %v2762 = vpop.f32.mrf.mxu0
        %v2763 = vadd.f32 0.0, %v2762
        %v2764 = vpop.f32.mrf.mxu0
        %2765 = vmatprep.mubr.bf16.mxu0 0
        %2766 = vmatmul.mubr.bf16.gmra.mxu0 %v2671
        %v2767 = vpop.f32.mrf.mxu0
        %v2768 = vadd.f32 0.0, %v2767
        %v2769 = vpop.f32.mrf.mxu0
        %v2770 = vpop.f32.mrf.mxu0
        %v2771 = vadd.f32 0.0, %v2770
        %v2772 = vpop.f32.mrf.mxu0
        %2773 = vmatprep.mubr.bf16.mxu0 0
        %2774 = vmatmul.mubr.bf16.gmra.mxu0 %v2674
        %v2775 = vpop.f32.mrf.mxu0
        %v2776 = vadd.f32 0.0, %v2775
        %v2777 = vpop.f32.mrf.mxu0
        %v2778 = vpop.f32.mrf.mxu0
        %v2779 = vadd.f32 0.0, %v2778
        %v2780 = vpop.f32.mrf.mxu0
        %2781 = vmatprep.mubr.bf16.mxu0 0
        %2782 = vmatmul.mubr.bf16.gmra.mxu0 %v2677
        %v2783 = vpop.f32.mrf.mxu0
        %v2784 = vadd.f32 0.0, %v2783
        %v2785 = vpop.f32.mrf.mxu0
        %v2786 = vpop.f32.mrf.mxu0
        %v2787 = vadd.f32 0.0, %v2786
        %v2788 = vpop.f32.mrf.mxu0
        %2789 = vmatprep.mubr.bf16.mxu0 0
        %2790 = vmatmul.mubr.bf16.gmra.mxu0 %v2680
        %v2791 = vpop.f32.mrf.mxu0
        %v2792 = vadd.f32 0.0, %v2791
        %v2793 = vpop.f32.mrf.mxu0
        %v2794 = vpop.f32.mrf.mxu0
        %v2795 = vadd.f32 0.0, %v2794
        %v2796 = vpop.f32.mrf.mxu0
        %2797 = vmatprep.mubr.bf16.mxu0 0
        %2798 = vmatmul.mubr.bf16.gmra.mxu0 %v2683
        %v2799 = vpop.f32.mrf.mxu0
        %v2800 = vadd.f32 0.0, %v2799
        %v2801 = vpop.f32.mrf.mxu0
        %v2802 = vpop.f32.mrf.mxu0
        %v2803 = vadd.f32 0.0, %v2802
        %v2804 = vpop.f32.mrf.mxu0
        %2805 = vmatprep.mubr.bf16.mxu0 0
        %2806 = vmatmul.mubr.bf16.gmra.mxu0 %v2686
        %v2807 = vpop.f32.mrf.mxu0
        %v2808 = vadd.f32 0.0, %v2807
        %v2809 = vpop.f32.mrf.mxu0
        %v2810 = vpop.f32.mrf.mxu0
        %v2811 = vadd.f32 0.0, %v2810
        %v2812 = vpop.f32.mrf.mxu0
        %2813 = vmatprep.mubr.bf16.mxu0 0
        %2814 = vmatmul.mubr.bf16.gmra.mxu0 %v2689
        %v2815 = vpop.f32.mrf.mxu0
        %v2816 = vadd.f32 0.0, %v2815
        %v2817 = vpop.f32.mrf.mxu0
        %v2818 = vpop.f32.mrf.mxu0
        %v2819 = vadd.f32 0.0, %v2818
        %v2820 = vpop.f32.mrf.mxu0
        %2821 = vmatprep.mubr.bf16.mxu0 0
        %2822 = vmatmul.mubr.bf16.gmra.mxu0 %v2692
        %v2823 = vpop.f32.mrf.mxu0
        %v2824 = vadd.f32 0.0, %v2823
        %v2825 = vpop.f32.mrf.mxu0
        %v2826 = vpop.f32.mrf.mxu0
        %v2827 = vadd.f32 0.0, %v2826
        %v2828 = vpop.f32.mrf.mxu0
        %2829 = vmatprep.mubr.bf16.mxu0 0
        %2830 = vmatmul.mubr.bf16.gmra.mxu0 %v2695
        %v2831 = vpop.f32.mrf.mxu0
        %v2832 = vadd.f32 0.0, %v2831
        %v2833 = vpop.f32.mrf.mxu0
        %v2834 = vpop.f32.mrf.mxu0
        %v2835 = vadd.f32 0.0, %v2834
        %v2836 = vpop.f32.mrf.mxu0
        %2837 = vmatprep.mubr.bf16.mxu0 0
        %2838 = vmatmul.mubr.bf16.gmra.mxu0 %v2698
        %v2839 = vpop.f32.mrf.mxu0
        %v2840 = vadd.f32 0.0, %v2839
        %v2841 = vpop.f32.mrf.mxu0
        %v2842 = vpop.f32.mrf.mxu0
        %v2843 = vadd.f32 0.0, %v2842
        %v2844 = vpop.f32.mrf.mxu0
        %2845 = vmatprep.mubr.bf16.mxu0 0
        %2846 = vmatmul.mubr.bf16.gmra.mxu0 %v2701
        %v2847 = vpop.f32.mrf.mxu0
        %v2848 = vadd.f32 0.0, %v2847
        %v2849 = vpop.f32.mrf.mxu0
        %v2850 = vpop.f32.mrf.mxu0
        %v2851 = vadd.f32 0.0, %v2850
        %v2852 = vpop.f32.mrf.mxu0
        %2853 = vmatprep.mubr.bf16.mxu0 0
        %2854 = vmatmul.mubr.bf16.gmra.mxu0 %v2704
        %v2855 = vpop.f32.mrf.mxu0
        %v2856 = vadd.f32 0.0, %v2855
        %v2857 = vpop.f32.mrf.mxu0
        %v2858 = vpop.f32.mrf.mxu0
        %v2859 = vadd.f32 0.0, %v2858
        %v2860 = vpop.f32.mrf.mxu0
        %2861 = vmatprep.mubr.bf16.mxu0 0
        %2862 = vmatmul.mubr.bf16.gmra.mxu0 %v2707
        %v2863 = vpop.f32.mrf.mxu0
        %v2864 = vadd.f32 0.0, %v2863
        %v2865 = vpop.f32.mrf.mxu0
        %v2866 = vpop.f32.mrf.mxu0
        %v2867 = vadd.f32 0.0, %v2866
        %v2868 = vpop.f32.mrf.mxu0
        %2869 = vdwg.mxu0
        %v2870 = vadd.f32 %v2564, %v2744
        %v2871 = vadd.f32 %v2565, %v2747
        %v2872 = vadd.f32 %v2566, %v2752
        %v2873 = vadd.f32 %v2567, %v2755
        %v2874 = vadd.f32 %v2568, %v2760
        %v2875 = vadd.f32 %v2569, %v2763
        %v2876 = vadd.f32 %v2570, %v2768
        %v2877 = vadd.f32 %v2571, %v2771
        %v2878 = vadd.f32 %v2572, %v2776
        %v2879 = vadd.f32 %v2573, %v2779
        %v2880 = vadd.f32 %v2574, %v2784
        %v2881 = vadd.f32 %v2575, %v2787
        %v2882 = vadd.f32 %v2576, %v2792
        %v2883 = vadd.f32 %v2577, %v2795
        %v2884 = vadd.f32 %v2578, %v2800
        %v2885 = vadd.f32 %v2579, %v2803
        %v2886 = vadd.f32 %v2580, %v2808
        %v2887 = vadd.f32 %v2581, %v2811
        %v2888 = vadd.f32 %v2582, %v2816
        %v2889 = vadd.f32 %v2583, %v2819
        %v2890 = vadd.f32 %v2584, %v2824
        %v2891 = vadd.f32 %v2585, %v2827
        %v2892 = vadd.f32 %v2586, %v2832
        %v2893 = vadd.f32 %v2587, %v2835
        %v2894 = vadd.f32 %v2588, %v2840
        %v2895 = vadd.f32 %v2589, %v2843
        %v2896 = vadd.f32 %v2590, %v2848
        %v2897 = vadd.f32 %v2591, %v2851
        %v2898 = vadd.f32 %v2592, %v2856
        %v2899 = vadd.f32 %v2593, %v2859
        %v2900 = vadd.f32 %v2594, %v2864
        %v2901 = vadd.f32 %v2595, %v2867
        %s2902 = scalar_lea.vmem [#allocation2], 48
        %v2903 = vld [vmem:[%s2902] sm:$0xff]
        %v2904 = vld [vmem:[%s2902 + $0x8] sm:$0xff]
        %v2905 = vld [vmem:[%s2902 + $0x18] sm:$0xff]
        %v2906 = vld [vmem:[%s2902 + $0x20] sm:$0xff]
        %v2907 = vld [vmem:[%s2902 + $0x30] sm:$0xff]
        %v2908 = vld [vmem:[%s2902 + $0x38] sm:$0xff]
        %v2909 = vld [vmem:[%s2902 + $0x48] sm:$0xff]
        %v2910 = vld [vmem:[%s2902 + $0x50] sm:$0xff]
        %v2911 = vld [vmem:[%s2902 + $0x60] sm:$0xff]
        %v2912 = vld [vmem:[%s2902 + $0x68] sm:$0xff]
        %v2913 = vld [vmem:[%s2902 + $0x78] sm:$0xff]
        %v2914 = vld [vmem:[%s2902 + $0x80] sm:$0xff]
        %v2915 = vld [vmem:[%s2902 + $0x90] sm:$0xff]
        %v2916 = vld [vmem:[%s2902 + $0x98] sm:$0xff]
        %v2917 = vld [vmem:[%s2902 + $0xa8] sm:$0xff]
        %v2918 = vld [vmem:[%s2902 + $0xb0] sm:$0xff]
        %v2919 = vld [vmem:[%s2902 + $0xc0] sm:$0xff]
        %v2920 = vld [vmem:[%s2902 + $0xc8] sm:$0xff]
        %v2921 = vld [vmem:[%s2902 + $0xd8] sm:$0xff]
        %v2922 = vld [vmem:[%s2902 + $0xe0] sm:$0xff]
        %v2923 = vld [vmem:[%s2902 + $0xf0] sm:$0xff]
        %v2924 = vld [vmem:[%s2902 + $0xf8] sm:$0xff]
        %v2925 = vld [vmem:[%s2902 + $0x108] sm:$0xff]
        %v2926 = vld [vmem:[%s2902 + $0x110] sm:$0xff]
        %v2927 = vld [vmem:[%s2902 + $0x120] sm:$0xff]
        %v2928 = vld [vmem:[%s2902 + $0x128] sm:$0xff]
        %v2929 = vld [vmem:[%s2902 + $0x138] sm:$0xff]
        %v2930 = vld [vmem:[%s2902 + $0x140] sm:$0xff]
        %v2931 = vld [vmem:[%s2902 + $0x150] sm:$0xff]
        %v2932 = vld [vmem:[%s2902 + $0x158] sm:$0xff]
        %v2933 = vld [vmem:[%s2902 + $0x168] sm:$0xff]
        %v2934 = vld [vmem:[%s2902 + $0x170] sm:$0xff]
        %v2935 = vpack.c.bf16 %v2904, %v2903
        %v2936 = vpack.c.bf16 %v2906, %v2905
        %v2937 = vpack.c.bf16 %v2908, %v2907
        %v2938 = vpack.c.bf16 %v2910, %v2909
        %v2939 = vpack.c.bf16 %v2912, %v2911
        %v2940 = vpack.c.bf16 %v2914, %v2913
        %v2941 = vpack.c.bf16 %v2916, %v2915
        %v2942 = vpack.c.bf16 %v2918, %v2917
        %v2943 = vpack.c.bf16 %v2920, %v2919
        %v2944 = vpack.c.bf16 %v2922, %v2921
        %v2945 = vpack.c.bf16 %v2924, %v2923
        %v2946 = vpack.c.bf16 %v2926, %v2925
        %v2947 = vpack.c.bf16 %v2928, %v2927
        %v2948 = vpack.c.bf16 %v2930, %v2929
        %v2949 = vpack.c.bf16 %v2932, %v2931
        %v2950 = vpack.c.bf16 %v2934, %v2933
        %s2951 = scalar_lea.vmem %s5, 96
        %v2952 = vld [vmem:[%s2951] sm:$0xf]
        %v2953 = vld [vmem:[%s2951 + $0x4] sm:$0xf]
        %v2954 = vld [vmem:[%s2951 + $0x8] sm:$0xf]
        %v2955 = vld [vmem:[%s2951 + $0xc] sm:$0xf]
        %v2960 = vunpack.c.l.b16 %v2952
        %v2961 = vunpack.c.l.b16 %v2953
        %v2962 = vunpack.c.l.b16 %v2954
        %v2963 = vunpack.c.l.b16 %v2955
        %v2964 = vpack.c.b16 %v2961, %v2960
        %v2965 = vpack.c.b16 %v2963, %v2962
        %v2969 = vsel %vm723, %v2935, 0
        %v2972 = vsel %vm723, %v2936, 0
        %v2975 = vsel %vm723, %v2937, 0
        %v2978 = vsel %vm723, %v2938, 0
        %v2981 = vsel %vm723, %v2939, 0
        %v2984 = vsel %vm723, %v2940, 0
        %v2987 = vsel %vm723, %v2941, 0
        %v2990 = vsel %vm723, %v2942, 0
        %v2993 = vsel %vm723, %v2943, 0
        %v2996 = vsel %vm723, %v2944, 0
        %v2999 = vsel %vm723, %v2945, 0
        %v3002 = vsel %vm723, %v2946, 0
        %v3005 = vsel %vm723, %v2947, 0
        %v3008 = vsel %vm723, %v2948, 0
        %v3011 = vsel %vm723, %v2949, 0
        %v3014 = vsel %vm723, %v2950, 0
        %3016 = vmatprep.subr.bf16.mxu0 0
        %3017 = vmatpush1.bf16.msra.mxu0 0
        %3018 = vmatprep.subr.bf16.mxu0 0
        %3019 = vmatpush1.bf16.msra.mxu0 0
        %3020 = vmatprep.subr.bf16.mxu0 0
        %3021 = vmatpush1.bf16.msra.mxu0 0
        %3022 = vmatprep.subr.bf16.mxu0 0
        %3023 = vmatpush1.bf16.msra.mxu0 0
        %3024 = vmatprep.subr.bf16.mxu0 0
        %3025 = vmatpush1.bf16.msra.mxu0 0
        %3026 = vmatprep.subr.bf16.mxu0 0
        %3027 = vmatpush1.bf16.msra.mxu0 0
        %3028 = vmatprep.subr.bf16.mxu0 0
        %3029 = vmatpush1.bf16.msra.mxu0 %v2965
        %3030 = vmatprep.subr.bf16.mxu0 0
        %3031 = vmatpush1.bf16.msra.mxu0 %v2964
        %3032 = vmatprep.subr.bf16.mxu0 0
        %3033 = vmatpush2.bf16.msra.mxu0 0
        %3034 = vmatprep.subr.bf16.mxu0 0
        %3035 = vmatpush2.bf16.msra.mxu0 0
        %3036 = vmatprep.subr.bf16.mxu0 0
        %3037 = vmatpush2.bf16.msra.mxu0 0
        %3038 = vmatprep.subr.bf16.mxu0 0
        %3039 = vmatpush2.bf16.msra.mxu0 0
        %3040 = vmatprep.subr.bf16.mxu0 0
        %3041 = vmatpush2.bf16.msra.mxu0 0
        %3042 = vmatprep.subr.bf16.mxu0 0
        %3043 = vmatpush2.bf16.msra.mxu0 0
        %3044 = vmatprep.subr.bf16.mxu0 0
        %3045 = vmatpush2.bf16.msra.mxu0 0
        %3046 = vmatprep.subr.bf16.mxu0 0
        %3047 = vmatpush2.bf16.msra.mxu0 0
        %3048 = vmatprep.mubr.bf16.mxu0 0
        %3049 = vmatmul.mubr.bf16.gmra.mxu0 %v2969
        %v3050 = vpop.f32.mrf.mxu0
        %v3051 = vadd.f32 0.0, %v3050
        %v3052 = vpop.f32.mrf.mxu0
        %v3053 = vpop.f32.mrf.mxu0
        %v3054 = vadd.f32 0.0, %v3053
        %v3055 = vpop.f32.mrf.mxu0
        %3056 = vmatprep.mubr.bf16.mxu0 0
        %3057 = vmatmul.mubr.bf16.gmra.mxu0 %v2972
        %v3058 = vpop.f32.mrf.mxu0
        %v3059 = vadd.f32 0.0, %v3058
        %v3060 = vpop.f32.mrf.mxu0
        %v3061 = vpop.f32.mrf.mxu0
        %v3062 = vadd.f32 0.0, %v3061
        %v3063 = vpop.f32.mrf.mxu0
        %3064 = vmatprep.mubr.bf16.mxu0 0
        %3065 = vmatmul.mubr.bf16.gmra.mxu0 %v2975
        %v3066 = vpop.f32.mrf.mxu0
        %v3067 = vadd.f32 0.0, %v3066
        %v3068 = vpop.f32.mrf.mxu0
        %v3069 = vpop.f32.mrf.mxu0
        %v3070 = vadd.f32 0.0, %v3069
        %v3071 = vpop.f32.mrf.mxu0
        %3072 = vmatprep.mubr.bf16.mxu0 0
        %3073 = vmatmul.mubr.bf16.gmra.mxu0 %v2978
        %v3074 = vpop.f32.mrf.mxu0
        %v3075 = vadd.f32 0.0, %v3074
        %v3076 = vpop.f32.mrf.mxu0
        %v3077 = vpop.f32.mrf.mxu0
        %v3078 = vadd.f32 0.0, %v3077
        %v3079 = vpop.f32.mrf.mxu0
        %3080 = vmatprep.mubr.bf16.mxu0 0
        %3081 = vmatmul.mubr.bf16.gmra.mxu0 %v2981
        %v3082 = vpop.f32.mrf.mxu0
        %v3083 = vadd.f32 0.0, %v3082
        %v3084 = vpop.f32.mrf.mxu0
        %v3085 = vpop.f32.mrf.mxu0
        %v3086 = vadd.f32 0.0, %v3085
        %v3087 = vpop.f32.mrf.mxu0
        %3088 = vmatprep.mubr.bf16.mxu0 0
        %3089 = vmatmul.mubr.bf16.gmra.mxu0 %v2984
        %v3090 = vpop.f32.mrf.mxu0
        %v3091 = vadd.f32 0.0, %v3090
        %v3092 = vpop.f32.mrf.mxu0
        %v3093 = vpop.f32.mrf.mxu0
        %v3094 = vadd.f32 0.0, %v3093
        %v3095 = vpop.f32.mrf.mxu0
        %3096 = vmatprep.mubr.bf16.mxu0 0
        %3097 = vmatmul.mubr.bf16.gmra.mxu0 %v2987
        %v3098 = vpop.f32.mrf.mxu0
        %v3099 = vadd.f32 0.0, %v3098
        %v3100 = vpop.f32.mrf.mxu0
        %v3101 = vpop.f32.mrf.mxu0
        %v3102 = vadd.f32 0.0, %v3101
        %v3103 = vpop.f32.mrf.mxu0
        %3104 = vmatprep.mubr.bf16.mxu0 0
        %3105 = vmatmul.mubr.bf16.gmra.mxu0 %v2990
        %v3106 = vpop.f32.mrf.mxu0
        %v3107 = vadd.f32 0.0, %v3106
        %v3108 = vpop.f32.mrf.mxu0
        %v3109 = vpop.f32.mrf.mxu0
        %v3110 = vadd.f32 0.0, %v3109
        %v3111 = vpop.f32.mrf.mxu0
        %3112 = vmatprep.mubr.bf16.mxu0 0
        %3113 = vmatmul.mubr.bf16.gmra.mxu0 %v2993
        %v3114 = vpop.f32.mrf.mxu0
        %v3115 = vadd.f32 0.0, %v3114
        %v3116 = vpop.f32.mrf.mxu0
        %v3117 = vpop.f32.mrf.mxu0
        %v3118 = vadd.f32 0.0, %v3117
        %v3119 = vpop.f32.mrf.mxu0
        %3120 = vmatprep.mubr.bf16.mxu0 0
        %3121 = vmatmul.mubr.bf16.gmra.mxu0 %v2996
        %v3122 = vpop.f32.mrf.mxu0
        %v3123 = vadd.f32 0.0, %v3122
        %v3124 = vpop.f32.mrf.mxu0
        %v3125 = vpop.f32.mrf.mxu0
        %v3126 = vadd.f32 0.0, %v3125
        %v3127 = vpop.f32.mrf.mxu0
        %3128 = vmatprep.mubr.bf16.mxu0 0
        %3129 = vmatmul.mubr.bf16.gmra.mxu0 %v2999
        %v3130 = vpop.f32.mrf.mxu0
        %v3131 = vadd.f32 0.0, %v3130
        %v3132 = vpop.f32.mrf.mxu0
        %v3133 = vpop.f32.mrf.mxu0
        %v3134 = vadd.f32 0.0, %v3133
        %v3135 = vpop.f32.mrf.mxu0
        %3136 = vmatprep.mubr.bf16.mxu0 0
        %3137 = vmatmul.mubr.bf16.gmra.mxu0 %v3002
        %v3138 = vpop.f32.mrf.mxu0
        %v3139 = vadd.f32 0.0, %v3138
        %v3140 = vpop.f32.mrf.mxu0
        %v3141 = vpop.f32.mrf.mxu0
        %v3142 = vadd.f32 0.0, %v3141
        %v3143 = vpop.f32.mrf.mxu0
        %3144 = vmatprep.mubr.bf16.mxu0 0
        %3145 = vmatmul.mubr.bf16.gmra.mxu0 %v3005
        %v3146 = vpop.f32.mrf.mxu0
        %v3147 = vadd.f32 0.0, %v3146
        %v3148 = vpop.f32.mrf.mxu0
        %v3149 = vpop.f32.mrf.mxu0
        %v3150 = vadd.f32 0.0, %v3149
        %v3151 = vpop.f32.mrf.mxu0
        %3152 = vmatprep.mubr.bf16.mxu0 0
        %3153 = vmatmul.mubr.bf16.gmra.mxu0 %v3008
        %v3154 = vpop.f32.mrf.mxu0
        %v3155 = vadd.f32 0.0, %v3154
        %v3156 = vpop.f32.mrf.mxu0
        %v3157 = vpop.f32.mrf.mxu0
        %v3158 = vadd.f32 0.0, %v3157
        %v3159 = vpop.f32.mrf.mxu0
        %3160 = vmatprep.mubr.bf16.mxu0 0
        %3161 = vmatmul.mubr.bf16.gmra.mxu0 %v3011
        %v3162 = vpop.f32.mrf.mxu0
        %v3163 = vadd.f32 0.0, %v3162
        %v3164 = vpop.f32.mrf.mxu0
        %v3165 = vpop.f32.mrf.mxu0
        %v3166 = vadd.f32 0.0, %v3165
        %v3167 = vpop.f32.mrf.mxu0
        %3168 = vmatprep.mubr.bf16.mxu0 0
        %3169 = vmatmul.mubr.bf16.gmra.mxu0 %v3014
        %v3170 = vpop.f32.mrf.mxu0
        %v3171 = vadd.f32 0.0, %v3170
        %v3172 = vpop.f32.mrf.mxu0
        %v3173 = vpop.f32.mrf.mxu0
        %v3174 = vadd.f32 0.0, %v3173
        %v3175 = vpop.f32.mrf.mxu0
        %3176 = vdwg.mxu0
        %v3177 = vadd.f32 %v2870, %v3051
        %v3178 = vadd.f32 %v2871, %v3054
        %v3179 = vadd.f32 %v2872, %v3059
        %v3180 = vadd.f32 %v2873, %v3062
        %v3181 = vadd.f32 %v2874, %v3067
        %v3182 = vadd.f32 %v2875, %v3070
        %v3183 = vadd.f32 %v2876, %v3075
        %v3184 = vadd.f32 %v2877, %v3078
        %v3185 = vadd.f32 %v2878, %v3083
        %v3186 = vadd.f32 %v2879, %v3086
        %v3187 = vadd.f32 %v2880, %v3091
        %v3188 = vadd.f32 %v2881, %v3094
        %v3189 = vadd.f32 %v2882, %v3099
        %v3190 = vadd.f32 %v2883, %v3102
        %v3191 = vadd.f32 %v2884, %v3107
        %v3192 = vadd.f32 %v2885, %v3110
        %v3193 = vadd.f32 %v2886, %v3115
        %v3194 = vadd.f32 %v2887, %v3118
        %v3195 = vadd.f32 %v2888, %v3123
        %v3196 = vadd.f32 %v2889, %v3126
        %v3197 = vadd.f32 %v2890, %v3131
        %v3198 = vadd.f32 %v2891, %v3134
        %v3199 = vadd.f32 %v2892, %v3139
        %v3200 = vadd.f32 %v2893, %v3142
        %v3201 = vadd.f32 %v2894, %v3147
        %v3202 = vadd.f32 %v2895, %v3150
        %v3203 = vadd.f32 %v2896, %v3155
        %v3204 = vadd.f32 %v2897, %v3158
        %v3205 = vadd.f32 %v2898, %v3163
        %v3206 = vadd.f32 %v2899, %v3166
        %v3207 = vadd.f32 %v2900, %v3171
        %v3208 = vadd.f32 %v2901, %v3174
        %v3209 = vld [vmem:[%s2902 + $0x1] sm:$0xff]
        %v3210 = vld [vmem:[%s2902 + $0x9] sm:$0xff]
        %v3211 = vld [vmem:[%s2902 + $0x19] sm:$0xff]
        %v3212 = vld [vmem:[%s2902 + $0x21] sm:$0xff]
        %v3213 = vld [vmem:[%s2902 + $0x31] sm:$0xff]
        %v3214 = vld [vmem:[%s2902 + $0x39] sm:$0xff]
        %v3215 = vld [vmem:[%s2902 + $0x49] sm:$0xff]
        %v3216 = vld [vmem:[%s2902 + $0x51] sm:$0xff]
        %v3217 = vld [vmem:[%s2902 + $0x61] sm:$0xff]
        %v3218 = vld [vmem:[%s2902 + $0x69] sm:$0xff]
        %v3219 = vld [vmem:[%s2902 + $0x79] sm:$0xff]
        %v3220 = vld [vmem:[%s2902 + $0x81] sm:$0xff]
        %v3221 = vld [vmem:[%s2902 + $0x91] sm:$0xff]
        %v3222 = vld [vmem:[%s2902 + $0x99] sm:$0xff]
        %v3223 = vld [vmem:[%s2902 + $0xa9] sm:$0xff]
        %v3224 = vld [vmem:[%s2902 + $0xb1] sm:$0xff]
        %v3225 = vld [vmem:[%s2902 + $0xc1] sm:$0xff]
        %v3226 = vld [vmem:[%s2902 + $0xc9] sm:$0xff]
        %v3227 = vld [vmem:[%s2902 + $0xd9] sm:$0xff]
        %v3228 = vld [vmem:[%s2902 + $0xe1] sm:$0xff]
        %v3229 = vld [vmem:[%s2902 + $0xf1] sm:$0xff]
        %v3230 = vld [vmem:[%s2902 + $0xf9] sm:$0xff]
        %v3231 = vld [vmem:[%s2902 + $0x109] sm:$0xff]
        %v3232 = vld [vmem:[%s2902 + $0x111] sm:$0xff]
        %v3233 = vld [vmem:[%s2902 + $0x121] sm:$0xff]
        %v3234 = vld [vmem:[%s2902 + $0x129] sm:$0xff]
        %v3235 = vld [vmem:[%s2902 + $0x139] sm:$0xff]
        %v3236 = vld [vmem:[%s2902 + $0x141] sm:$0xff]
        %v3237 = vld [vmem:[%s2902 + $0x151] sm:$0xff]
        %v3238 = vld [vmem:[%s2902 + $0x159] sm:$0xff]
        %v3239 = vld [vmem:[%s2902 + $0x169] sm:$0xff]
        %v3240 = vld [vmem:[%s2902 + $0x171] sm:$0xff]
        %v3241 = vpack.c.bf16 %v3210, %v3209
        %v3242 = vpack.c.bf16 %v3212, %v3211
        %v3243 = vpack.c.bf16 %v3214, %v3213
        %v3244 = vpack.c.bf16 %v3216, %v3215
        %v3245 = vpack.c.bf16 %v3218, %v3217
        %v3246 = vpack.c.bf16 %v3220, %v3219
        %v3247 = vpack.c.bf16 %v3222, %v3221
        %v3248 = vpack.c.bf16 %v3224, %v3223
        %v3249 = vpack.c.bf16 %v3226, %v3225
        %v3250 = vpack.c.bf16 %v3228, %v3227
        %v3251 = vpack.c.bf16 %v3230, %v3229
        %v3252 = vpack.c.bf16 %v3232, %v3231
        %v3253 = vpack.c.bf16 %v3234, %v3233
        %v3254 = vpack.c.bf16 %v3236, %v3235
        %v3255 = vpack.c.bf16 %v3238, %v3237
        %v3256 = vpack.c.bf16 %v3240, %v3239
        %s3257 = scalar_lea.vmem %s5, 112
        %v3258 = vld [vmem:[%s3257] sm:$0xf]
        %v3259 = vld [vmem:[%s3257 + $0x4] sm:$0xf]
        %v3260 = vld [vmem:[%s3257 + $0x8] sm:$0xf]
        %v3261 = vld [vmem:[%s3257 + $0xc] sm:$0xf]
        %v3266 = vunpack.c.l.b16 %v3258
        %v3267 = vunpack.c.l.b16 %v3259
        %v3268 = vunpack.c.l.b16 %v3260
        %v3269 = vunpack.c.l.b16 %v3261
        %v3270 = vpack.c.b16 %v3267, %v3266
        %v3271 = vpack.c.b16 %v3269, %v3268
        %v3275 = vsel %vm723, %v3241, 0
        %v3278 = vsel %vm723, %v3242, 0
        %v3281 = vsel %vm723, %v3243, 0
        %v3284 = vsel %vm723, %v3244, 0
        %v3287 = vsel %vm723, %v3245, 0
        %v3290 = vsel %vm723, %v3246, 0
        %v3293 = vsel %vm723, %v3247, 0
        %v3296 = vsel %vm723, %v3248, 0
        %v3299 = vsel %vm723, %v3249, 0
        %v3302 = vsel %vm723, %v3250, 0
        %v3305 = vsel %vm723, %v3251, 0
        %v3308 = vsel %vm723, %v3252, 0
        %v3311 = vsel %vm723, %v3253, 0
        %v3314 = vsel %vm723, %v3254, 0
        %v3317 = vsel %vm723, %v3255, 0
        %v3320 = vsel %vm723, %v3256, 0
        %3322 = vmatprep.subr.bf16.mxu0 0
        %3323 = vmatpush1.bf16.msra.mxu0 0
        %3324 = vmatprep.subr.bf16.mxu0 0
        %3325 = vmatpush1.bf16.msra.mxu0 0
        %3326 = vmatprep.subr.bf16.mxu0 0
        %3327 = vmatpush1.bf16.msra.mxu0 0
        %3328 = vmatprep.subr.bf16.mxu0 0
        %3329 = vmatpush1.bf16.msra.mxu0 0
        %3330 = vmatprep.subr.bf16.mxu0 0
        %3331 = vmatpush1.bf16.msra.mxu0 0
        %3332 = vmatprep.subr.bf16.mxu0 0
        %3333 = vmatpush1.bf16.msra.mxu0 0
        %3334 = vmatprep.subr.bf16.mxu0 0
        %3335 = vmatpush1.bf16.msra.mxu0 %v3271
        %3336 = vmatprep.subr.bf16.mxu0 0
        %3337 = vmatpush1.bf16.msra.mxu0 %v3270
        %3338 = vmatprep.subr.bf16.mxu0 0
        %3339 = vmatpush2.bf16.msra.mxu0 0
        %3340 = vmatprep.subr.bf16.mxu0 0
        %3341 = vmatpush2.bf16.msra.mxu0 0
        %3342 = vmatprep.subr.bf16.mxu0 0
        %3343 = vmatpush2.bf16.msra.mxu0 0
        %3344 = vmatprep.subr.bf16.mxu0 0
        %3345 = vmatpush2.bf16.msra.mxu0 0
        %3346 = vmatprep.subr.bf16.mxu0 0
        %3347 = vmatpush2.bf16.msra.mxu0 0
        %3348 = vmatprep.subr.bf16.mxu0 0
        %3349 = vmatpush2.bf16.msra.mxu0 0
        %3350 = vmatprep.subr.bf16.mxu0 0
        %3351 = vmatpush2.bf16.msra.mxu0 0
        %3352 = vmatprep.subr.bf16.mxu0 0
        %3353 = vmatpush2.bf16.msra.mxu0 0
        %3354 = vmatprep.mubr.bf16.mxu0 0
        %3355 = vmatmul.mubr.bf16.gmra.mxu0 %v3275
        %v3356 = vpop.f32.mrf.mxu0
        %v3357 = vadd.f32 0.0, %v3356
        %v3358 = vpop.f32.mrf.mxu0
        %v3359 = vpop.f32.mrf.mxu0
        %v3360 = vadd.f32 0.0, %v3359
        %v3361 = vpop.f32.mrf.mxu0
        %3362 = vmatprep.mubr.bf16.mxu0 0
        %3363 = vmatmul.mubr.bf16.gmra.mxu0 %v3278
        %v3364 = vpop.f32.mrf.mxu0
        %v3365 = vadd.f32 0.0, %v3364
        %v3366 = vpop.f32.mrf.mxu0
        %v3367 = vpop.f32.mrf.mxu0
        %v3368 = vadd.f32 0.0, %v3367
        %v3369 = vpop.f32.mrf.mxu0
        %3370 = vmatprep.mubr.bf16.mxu0 0
        %3371 = vmatmul.mubr.bf16.gmra.mxu0 %v3281
        %v3372 = vpop.f32.mrf.mxu0
        %v3373 = vadd.f32 0.0, %v3372
        %v3374 = vpop.f32.mrf.mxu0
        %v3375 = vpop.f32.mrf.mxu0
        %v3376 = vadd.f32 0.0, %v3375
        %v3377 = vpop.f32.mrf.mxu0
        %3378 = vmatprep.mubr.bf16.mxu0 0
        %3379 = vmatmul.mubr.bf16.gmra.mxu0 %v3284
        %v3380 = vpop.f32.mrf.mxu0
        %v3381 = vadd.f32 0.0, %v3380
        %v3382 = vpop.f32.mrf.mxu0
        %v3383 = vpop.f32.mrf.mxu0
        %v3384 = vadd.f32 0.0, %v3383
        %v3385 = vpop.f32.mrf.mxu0
        %3386 = vmatprep.mubr.bf16.mxu0 0
        %3387 = vmatmul.mubr.bf16.gmra.mxu0 %v3287
        %v3388 = vpop.f32.mrf.mxu0
        %v3389 = vadd.f32 0.0, %v3388
        %v3390 = vpop.f32.mrf.mxu0
        %v3391 = vpop.f32.mrf.mxu0
        %v3392 = vadd.f32 0.0, %v3391
        %v3393 = vpop.f32.mrf.mxu0
        %3394 = vmatprep.mubr.bf16.mxu0 0
        %3395 = vmatmul.mubr.bf16.gmra.mxu0 %v3290
        %v3396 = vpop.f32.mrf.mxu0
        %v3397 = vadd.f32 0.0, %v3396
        %v3398 = vpop.f32.mrf.mxu0
        %v3399 = vpop.f32.mrf.mxu0
        %v3400 = vadd.f32 0.0, %v3399
        %v3401 = vpop.f32.mrf.mxu0
        %3402 = vmatprep.mubr.bf16.mxu0 0
        %3403 = vmatmul.mubr.bf16.gmra.mxu0 %v3293
        %v3404 = vpop.f32.mrf.mxu0
        %v3405 = vadd.f32 0.0, %v3404
        %v3406 = vpop.f32.mrf.mxu0
        %v3407 = vpop.f32.mrf.mxu0
        %v3408 = vadd.f32 0.0, %v3407
        %v3409 = vpop.f32.mrf.mxu0
        %3410 = vmatprep.mubr.bf16.mxu0 0
        %3411 = vmatmul.mubr.bf16.gmra.mxu0 %v3296
        %v3412 = vpop.f32.mrf.mxu0
        %v3413 = vadd.f32 0.0, %v3412
        %v3414 = vpop.f32.mrf.mxu0
        %v3415 = vpop.f32.mrf.mxu0
        %v3416 = vadd.f32 0.0, %v3415
        %v3417 = vpop.f32.mrf.mxu0
        %3418 = vmatprep.mubr.bf16.mxu0 0
        %3419 = vmatmul.mubr.bf16.gmra.mxu0 %v3299
        %v3420 = vpop.f32.mrf.mxu0
        %v3421 = vadd.f32 0.0, %v3420
        %v3422 = vpop.f32.mrf.mxu0
        %v3423 = vpop.f32.mrf.mxu0
        %v3424 = vadd.f32 0.0, %v3423
        %v3425 = vpop.f32.mrf.mxu0
        %3426 = vmatprep.mubr.bf16.mxu0 0
        %3427 = vmatmul.mubr.bf16.gmra.mxu0 %v3302
        %v3428 = vpop.f32.mrf.mxu0
        %v3429 = vadd.f32 0.0, %v3428
        %v3430 = vpop.f32.mrf.mxu0
        %v3431 = vpop.f32.mrf.mxu0
        %v3432 = vadd.f32 0.0, %v3431
        %v3433 = vpop.f32.mrf.mxu0
        %3434 = vmatprep.mubr.bf16.mxu0 0
        %3435 = vmatmul.mubr.bf16.gmra.mxu0 %v3305
        %v3436 = vpop.f32.mrf.mxu0
        %v3437 = vadd.f32 0.0, %v3436
        %v3438 = vpop.f32.mrf.mxu0
        %v3439 = vpop.f32.mrf.mxu0
        %v3440 = vadd.f32 0.0, %v3439
        %v3441 = vpop.f32.mrf.mxu0
        %3442 = vmatprep.mubr.bf16.mxu0 0
        %3443 = vmatmul.mubr.bf16.gmra.mxu0 %v3308
        %v3444 = vpop.f32.mrf.mxu0
        %v3445 = vadd.f32 0.0, %v3444
        %v3446 = vpop.f32.mrf.mxu0
        %v3447 = vpop.f32.mrf.mxu0
        %v3448 = vadd.f32 0.0, %v3447
        %v3449 = vpop.f32.mrf.mxu0
        %3450 = vmatprep.mubr.bf16.mxu0 0
        %3451 = vmatmul.mubr.bf16.gmra.mxu0 %v3311
        %v3452 = vpop.f32.mrf.mxu0
        %v3453 = vadd.f32 0.0, %v3452
        %v3454 = vpop.f32.mrf.mxu0
        %v3455 = vpop.f32.mrf.mxu0
        %v3456 = vadd.f32 0.0, %v3455
        %v3457 = vpop.f32.mrf.mxu0
        %3458 = vmatprep.mubr.bf16.mxu0 0
        %3459 = vmatmul.mubr.bf16.gmra.mxu0 %v3314
        %v3460 = vpop.f32.mrf.mxu0
        %v3461 = vadd.f32 0.0, %v3460
        %v3462 = vpop.f32.mrf.mxu0
        %v3463 = vpop.f32.mrf.mxu0
        %v3464 = vadd.f32 0.0, %v3463
        %v3465 = vpop.f32.mrf.mxu0
        %3466 = vmatprep.mubr.bf16.mxu0 0
        %3467 = vmatmul.mubr.bf16.gmra.mxu0 %v3317
        %v3468 = vpop.f32.mrf.mxu0
        %v3469 = vadd.f32 0.0, %v3468
        %v3470 = vpop.f32.mrf.mxu0
        %v3471 = vpop.f32.mrf.mxu0
        %v3472 = vadd.f32 0.0, %v3471
        %v3473 = vpop.f32.mrf.mxu0
        %3474 = vmatprep.mubr.bf16.mxu0 0
        %3475 = vmatmul.mubr.bf16.gmra.mxu0 %v3320
        %v3476 = vpop.f32.mrf.mxu0
        %v3477 = vadd.f32 0.0, %v3476
        %v3478 = vpop.f32.mrf.mxu0
        %v3479 = vpop.f32.mrf.mxu0
        %v3480 = vadd.f32 0.0, %v3479
        %v3481 = vpop.f32.mrf.mxu0
        %3482 = vdwg.mxu0
        %v3483 = vadd.f32 %v3177, %v3357
        %v3484 = vadd.f32 %v3178, %v3360
        %v3485 = vadd.f32 %v3179, %v3365
        %v3486 = vadd.f32 %v3180, %v3368
        %v3487 = vadd.f32 %v3181, %v3373
        %v3488 = vadd.f32 %v3182, %v3376
        %v3489 = vadd.f32 %v3183, %v3381
        %v3490 = vadd.f32 %v3184, %v3384
        %v3491 = vadd.f32 %v3185, %v3389
        %v3492 = vadd.f32 %v3186, %v3392
        %v3493 = vadd.f32 %v3187, %v3397
        %v3494 = vadd.f32 %v3188, %v3400
        %v3495 = vadd.f32 %v3189, %v3405
        %v3496 = vadd.f32 %v3190, %v3408
        %v3497 = vadd.f32 %v3191, %v3413
        %v3498 = vadd.f32 %v3192, %v3416
        %v3499 = vadd.f32 %v3193, %v3421
        %v3500 = vadd.f32 %v3194, %v3424
        %v3501 = vadd.f32 %v3195, %v3429
        %v3502 = vadd.f32 %v3196, %v3432
        %v3503 = vadd.f32 %v3197, %v3437
        %v3504 = vadd.f32 %v3198, %v3440
        %v3505 = vadd.f32 %v3199, %v3445
        %v3506 = vadd.f32 %v3200, %v3448
        %v3507 = vadd.f32 %v3201, %v3453
        %v3508 = vadd.f32 %v3202, %v3456
        %v3509 = vadd.f32 %v3203, %v3461
        %v3510 = vadd.f32 %v3204, %v3464
        %v3511 = vadd.f32 %v3205, %v3469
        %v3512 = vadd.f32 %v3206, %v3472
        %v3513 = vadd.f32 %v3207, %v3477
        %v3514 = vadd.f32 %v3208, %v3480
        %v3515 = vld [vmem:[%s2902 + $0x2] sm:$0xff]
        %v3516 = vld [vmem:[%s2902 + $0xa] sm:$0xff]
        %v3517 = vld [vmem:[%s2902 + $0x1a] sm:$0xff]
        %v3518 = vld [vmem:[%s2902 + $0x22] sm:$0xff]
        %v3519 = vld [vmem:[%s2902 + $0x32] sm:$0xff]
        %v3520 = vld [vmem:[%s2902 + $0x3a] sm:$0xff]
        %v3521 = vld [vmem:[%s2902 + $0x4a] sm:$0xff]
        %v3522 = vld [vmem:[%s2902 + $0x52] sm:$0xff]
        %v3523 = vld [vmem:[%s2902 + $0x62] sm:$0xff]
        %v3524 = vld [vmem:[%s2902 + $0x6a] sm:$0xff]
        %v3525 = vld [vmem:[%s2902 + $0x7a] sm:$0xff]
        %v3526 = vld [vmem:[%s2902 + $0x82] sm:$0xff]
        %v3527 = vld [vmem:[%s2902 + $0x92] sm:$0xff]
        %v3528 = vld [vmem:[%s2902 + $0x9a] sm:$0xff]
        %v3529 = vld [vmem:[%s2902 + $0xaa] sm:$0xff]
        %v3530 = vld [vmem:[%s2902 + $0xb2] sm:$0xff]
        %v3531 = vld [vmem:[%s2902 + $0xc2] sm:$0xff]
        %v3532 = vld [vmem:[%s2902 + $0xca] sm:$0xff]
        %v3533 = vld [vmem:[%s2902 + $0xda] sm:$0xff]
        %v3534 = vld [vmem:[%s2902 + $0xe2] sm:$0xff]
        %v3535 = vld [vmem:[%s2902 + $0xf2] sm:$0xff]
        %v3536 = vld [vmem:[%s2902 + $0xfa] sm:$0xff]
        %v3537 = vld [vmem:[%s2902 + $0x10a] sm:$0xff]
        %v3538 = vld [vmem:[%s2902 + $0x112] sm:$0xff]
        %v3539 = vld [vmem:[%s2902 + $0x122] sm:$0xff]
        %v3540 = vld [vmem:[%s2902 + $0x12a] sm:$0xff]
        %v3541 = vld [vmem:[%s2902 + $0x13a] sm:$0xff]
        %v3542 = vld [vmem:[%s2902 + $0x142] sm:$0xff]
        %v3543 = vld [vmem:[%s2902 + $0x152] sm:$0xff]
        %v3544 = vld [vmem:[%s2902 + $0x15a] sm:$0xff]
        %v3545 = vld [vmem:[%s2902 + $0x16a] sm:$0xff]
        %v3546 = vld [vmem:[%s2902 + $0x172] sm:$0xff]
        %v3547 = vpack.c.bf16 %v3516, %v3515
        %v3548 = vpack.c.bf16 %v3518, %v3517
        %v3549 = vpack.c.bf16 %v3520, %v3519
        %v3550 = vpack.c.bf16 %v3522, %v3521
        %v3551 = vpack.c.bf16 %v3524, %v3523
        %v3552 = vpack.c.bf16 %v3526, %v3525
        %v3553 = vpack.c.bf16 %v3528, %v3527
        %v3554 = vpack.c.bf16 %v3530, %v3529
        %v3555 = vpack.c.bf16 %v3532, %v3531
        %v3556 = vpack.c.bf16 %v3534, %v3533
        %v3557 = vpack.c.bf16 %v3536, %v3535
        %v3558 = vpack.c.bf16 %v3538, %v3537
        %v3559 = vpack.c.bf16 %v3540, %v3539
        %v3560 = vpack.c.bf16 %v3542, %v3541
        %v3561 = vpack.c.bf16 %v3544, %v3543
        %v3562 = vpack.c.bf16 %v3546, %v3545
        %s3563 = scalar_lea.vmem %s5, 128
        %v3564 = vld [vmem:[%s3563] sm:$0xf]
        %v3565 = vld [vmem:[%s3563 + $0x4] sm:$0xf]
        %v3566 = vld [vmem:[%s3563 + $0x8] sm:$0xf]
        %v3567 = vld [vmem:[%s3563 + $0xc] sm:$0xf]
        %v3572 = vunpack.c.l.b16 %v3564
        %v3573 = vunpack.c.l.b16 %v3565
        %v3574 = vunpack.c.l.b16 %v3566
        %v3575 = vunpack.c.l.b16 %v3567
        %v3576 = vpack.c.b16 %v3573, %v3572
        %v3577 = vpack.c.b16 %v3575, %v3574
        %v3581 = vsel %vm723, %v3547, 0
        %v3584 = vsel %vm723, %v3548, 0
        %v3587 = vsel %vm723, %v3549, 0
        %v3590 = vsel %vm723, %v3550, 0
        %v3593 = vsel %vm723, %v3551, 0
        %v3596 = vsel %vm723, %v3552, 0
        %v3599 = vsel %vm723, %v3553, 0
        %v3602 = vsel %vm723, %v3554, 0
        %v3605 = vsel %vm723, %v3555, 0
        %v3608 = vsel %vm723, %v3556, 0
        %v3611 = vsel %vm723, %v3557, 0
        %v3614 = vsel %vm723, %v3558, 0
        %v3617 = vsel %vm723, %v3559, 0
        %v3620 = vsel %vm723, %v3560, 0
        %v3623 = vsel %vm723, %v3561, 0
        %v3626 = vsel %vm723, %v3562, 0
        %3628 = vmatprep.subr.bf16.mxu0 0
        %3629 = vmatpush1.bf16.msra.mxu0 0
        %3630 = vmatprep.subr.bf16.mxu0 0
        %3631 = vmatpush1.bf16.msra.mxu0 0
        %3632 = vmatprep.subr.bf16.mxu0 0
        %3633 = vmatpush1.bf16.msra.mxu0 0
        %3634 = vmatprep.subr.bf16.mxu0 0
        %3635 = vmatpush1.bf16.msra.mxu0 0
        %3636 = vmatprep.subr.bf16.mxu0 0
        %3637 = vmatpush1.bf16.msra.mxu0 0
        %3638 = vmatprep.subr.bf16.mxu0 0
        %3639 = vmatpush1.bf16.msra.mxu0 0
        %3640 = vmatprep.subr.bf16.mxu0 0
        %3641 = vmatpush1.bf16.msra.mxu0 %v3577
        %3642 = vmatprep.subr.bf16.mxu0 0
        %3643 = vmatpush1.bf16.msra.mxu0 %v3576
        %3644 = vmatprep.subr.bf16.mxu0 0
        %3645 = vmatpush2.bf16.msra.mxu0 0
        %3646 = vmatprep.subr.bf16.mxu0 0
        %3647 = vmatpush2.bf16.msra.mxu0 0
        %3648 = vmatprep.subr.bf16.mxu0 0
        %3649 = vmatpush2.bf16.msra.mxu0 0
        %3650 = vmatprep.subr.bf16.mxu0 0
        %3651 = vmatpush2.bf16.msra.mxu0 0
        %3652 = vmatprep.subr.bf16.mxu0 0
        %3653 = vmatpush2.bf16.msra.mxu0 0
        %3654 = vmatprep.subr.bf16.mxu0 0
        %3655 = vmatpush2.bf16.msra.mxu0 0
        %3656 = vmatprep.subr.bf16.mxu0 0
        %3657 = vmatpush2.bf16.msra.mxu0 0
        %3658 = vmatprep.subr.bf16.mxu0 0
        %3659 = vmatpush2.bf16.msra.mxu0 0
        %3660 = vmatprep.mubr.bf16.mxu0 0
        %3661 = vmatmul.mubr.bf16.gmra.mxu0 %v3581
        %v3662 = vpop.f32.mrf.mxu0
        %v3663 = vadd.f32 0.0, %v3662
        %v3664 = vpop.f32.mrf.mxu0
        %v3665 = vpop.f32.mrf.mxu0
        %v3666 = vadd.f32 0.0, %v3665
        %v3667 = vpop.f32.mrf.mxu0
        %3668 = vmatprep.mubr.bf16.mxu0 0
        %3669 = vmatmul.mubr.bf16.gmra.mxu0 %v3584
        %v3670 = vpop.f32.mrf.mxu0
        %v3671 = vadd.f32 0.0, %v3670
        %v3672 = vpop.f32.mrf.mxu0
        %v3673 = vpop.f32.mrf.mxu0
        %v3674 = vadd.f32 0.0, %v3673
        %v3675 = vpop.f32.mrf.mxu0
        %3676 = vmatprep.mubr.bf16.mxu0 0
        %3677 = vmatmul.mubr.bf16.gmra.mxu0 %v3587
        %v3678 = vpop.f32.mrf.mxu0
        %v3679 = vadd.f32 0.0, %v3678
        %v3680 = vpop.f32.mrf.mxu0
        %v3681 = vpop.f32.mrf.mxu0
        %v3682 = vadd.f32 0.0, %v3681
        %v3683 = vpop.f32.mrf.mxu0
        %3684 = vmatprep.mubr.bf16.mxu0 0
        %3685 = vmatmul.mubr.bf16.gmra.mxu0 %v3590
        %v3686 = vpop.f32.mrf.mxu0
        %v3687 = vadd.f32 0.0, %v3686
        %v3688 = vpop.f32.mrf.mxu0
        %v3689 = vpop.f32.mrf.mxu0
        %v3690 = vadd.f32 0.0, %v3689
        %v3691 = vpop.f32.mrf.mxu0
        %3692 = vmatprep.mubr.bf16.mxu0 0
        %3693 = vmatmul.mubr.bf16.gmra.mxu0 %v3593
        %v3694 = vpop.f32.mrf.mxu0
        %v3695 = vadd.f32 0.0, %v3694
        %v3696 = vpop.f32.mrf.mxu0
        %v3697 = vpop.f32.mrf.mxu0
        %v3698 = vadd.f32 0.0, %v3697
        %v3699 = vpop.f32.mrf.mxu0
        %3700 = vmatprep.mubr.bf16.mxu0 0
        %3701 = vmatmul.mubr.bf16.gmra.mxu0 %v3596
        %v3702 = vpop.f32.mrf.mxu0
        %v3703 = vadd.f32 0.0, %v3702
        %v3704 = vpop.f32.mrf.mxu0
        %v3705 = vpop.f32.mrf.mxu0
        %v3706 = vadd.f32 0.0, %v3705
        %v3707 = vpop.f32.mrf.mxu0
        %3708 = vmatprep.mubr.bf16.mxu0 0
        %3709 = vmatmul.mubr.bf16.gmra.mxu0 %v3599
        %v3710 = vpop.f32.mrf.mxu0
        %v3711 = vadd.f32 0.0, %v3710
        %v3712 = vpop.f32.mrf.mxu0
        %v3713 = vpop.f32.mrf.mxu0
        %v3714 = vadd.f32 0.0, %v3713
        %v3715 = vpop.f32.mrf.mxu0
        %3716 = vmatprep.mubr.bf16.mxu0 0
        %3717 = vmatmul.mubr.bf16.gmra.mxu0 %v3602
        %v3718 = vpop.f32.mrf.mxu0
        %v3719 = vadd.f32 0.0, %v3718
        %v3720 = vpop.f32.mrf.mxu0
        %v3721 = vpop.f32.mrf.mxu0
        %v3722 = vadd.f32 0.0, %v3721
        %v3723 = vpop.f32.mrf.mxu0
        %3724 = vmatprep.mubr.bf16.mxu0 0
        %3725 = vmatmul.mubr.bf16.gmra.mxu0 %v3605
        %v3726 = vpop.f32.mrf.mxu0
        %v3727 = vadd.f32 0.0, %v3726
        %v3728 = vpop.f32.mrf.mxu0
        %v3729 = vpop.f32.mrf.mxu0
        %v3730 = vadd.f32 0.0, %v3729
        %v3731 = vpop.f32.mrf.mxu0
        %3732 = vmatprep.mubr.bf16.mxu0 0
        %3733 = vmatmul.mubr.bf16.gmra.mxu0 %v3608
        %v3734 = vpop.f32.mrf.mxu0
        %v3735 = vadd.f32 0.0, %v3734
        %v3736 = vpop.f32.mrf.mxu0
        %v3737 = vpop.f32.mrf.mxu0
        %v3738 = vadd.f32 0.0, %v3737
        %v3739 = vpop.f32.mrf.mxu0
        %3740 = vmatprep.mubr.bf16.mxu0 0
        %3741 = vmatmul.mubr.bf16.gmra.mxu0 %v3611
        %v3742 = vpop.f32.mrf.mxu0
        %v3743 = vadd.f32 0.0, %v3742
        %v3744 = vpop.f32.mrf.mxu0
        %v3745 = vpop.f32.mrf.mxu0
        %v3746 = vadd.f32 0.0, %v3745
        %v3747 = vpop.f32.mrf.mxu0
        %3748 = vmatprep.mubr.bf16.mxu0 0
        %3749 = vmatmul.mubr.bf16.gmra.mxu0 %v3614
        %v3750 = vpop.f32.mrf.mxu0
        %v3751 = vadd.f32 0.0, %v3750
        %v3752 = vpop.f32.mrf.mxu0
        %v3753 = vpop.f32.mrf.mxu0
        %v3754 = vadd.f32 0.0, %v3753
        %v3755 = vpop.f32.mrf.mxu0
        %3756 = vmatprep.mubr.bf16.mxu0 0
        %3757 = vmatmul.mubr.bf16.gmra.mxu0 %v3617
        %v3758 = vpop.f32.mrf.mxu0
        %v3759 = vadd.f32 0.0, %v3758
        %v3760 = vpop.f32.mrf.mxu0
        %v3761 = vpop.f32.mrf.mxu0
        %v3762 = vadd.f32 0.0, %v3761
        %v3763 = vpop.f32.mrf.mxu0
        %3764 = vmatprep.mubr.bf16.mxu0 0
        %3765 = vmatmul.mubr.bf16.gmra.mxu0 %v3620
        %v3766 = vpop.f32.mrf.mxu0
        %v3767 = vadd.f32 0.0, %v3766
        %v3768 = vpop.f32.mrf.mxu0
        %v3769 = vpop.f32.mrf.mxu0
        %v3770 = vadd.f32 0.0, %v3769
        %v3771 = vpop.f32.mrf.mxu0
        %3772 = vmatprep.mubr.bf16.mxu0 0
        %3773 = vmatmul.mubr.bf16.gmra.mxu0 %v3623
        %v3774 = vpop.f32.mrf.mxu0
        %v3775 = vadd.f32 0.0, %v3774
        %v3776 = vpop.f32.mrf.mxu0
        %v3777 = vpop.f32.mrf.mxu0
        %v3778 = vadd.f32 0.0, %v3777
        %v3779 = vpop.f32.mrf.mxu0
        %3780 = vmatprep.mubr.bf16.mxu0 0
        %3781 = vmatmul.mubr.bf16.gmra.mxu0 %v3626
        %v3782 = vpop.f32.mrf.mxu0
        %v3783 = vadd.f32 0.0, %v3782
        %v3784 = vpop.f32.mrf.mxu0
        %v3785 = vpop.f32.mrf.mxu0
        %v3786 = vadd.f32 0.0, %v3785
        %v3787 = vpop.f32.mrf.mxu0
        %3788 = vdwg.mxu0
        %v3789 = vadd.f32 %v3483, %v3663
        %v3790 = vadd.f32 %v3484, %v3666
        %v3791 = vadd.f32 %v3485, %v3671
        %v3792 = vadd.f32 %v3486, %v3674
        %v3793 = vadd.f32 %v3487, %v3679
        %v3794 = vadd.f32 %v3488, %v3682
        %v3795 = vadd.f32 %v3489, %v3687
        %v3796 = vadd.f32 %v3490, %v3690
        %v3797 = vadd.f32 %v3491, %v3695
        %v3798 = vadd.f32 %v3492, %v3698
        %v3799 = vadd.f32 %v3493, %v3703
        %v3800 = vadd.f32 %v3494, %v3706
        %v3801 = vadd.f32 %v3495, %v3711
        %v3802 = vadd.f32 %v3496, %v3714
        %v3803 = vadd.f32 %v3497, %v3719
        %v3804 = vadd.f32 %v3498, %v3722
        %v3805 = vadd.f32 %v3499, %v3727
        %v3806 = vadd.f32 %v3500, %v3730
        %v3807 = vadd.f32 %v3501, %v3735
        %v3808 = vadd.f32 %v3502, %v3738
        %v3809 = vadd.f32 %v3503, %v3743
        %v3810 = vadd.f32 %v3504, %v3746
        %v3811 = vadd.f32 %v3505, %v3751
        %v3812 = vadd.f32 %v3506, %v3754
        %v3813 = vadd.f32 %v3507, %v3759
        %v3814 = vadd.f32 %v3508, %v3762
        %v3815 = vadd.f32 %v3509, %v3767
        %v3816 = vadd.f32 %v3510, %v3770
        %v3817 = vadd.f32 %v3511, %v3775
        %v3818 = vadd.f32 %v3512, %v3778
        %v3819 = vadd.f32 %v3513, %v3783
        %v3820 = vadd.f32 %v3514, %v3786
        %v3821 = vld [vmem:[%s6] sm:$0x1]
        %v3823 = vlaneseq
        %v3824 = vshrl.u32 %v3823, 7
        %v3825 = vsub.s32 0, %v3824
        %v3826 = vrot.slane %v3821, %v3825
        %v3828 = vmul.f32 %v3789, %v3826
        %v3829 = vmul.f32 %v3790, %v3826
        %v3830 = vmul.f32 %v3791, %v3826
        %v3831 = vmul.f32 %v3792, %v3826
        %v3832 = vmul.f32 %v3793, %v3826
        %v3833 = vmul.f32 %v3794, %v3826
        %v3834 = vmul.f32 %v3795, %v3826
        %v3835 = vmul.f32 %v3796, %v3826
        %v3836 = vmul.f32 %v3797, %v3826
        %v3837 = vmul.f32 %v3798, %v3826
        %v3838 = vmul.f32 %v3799, %v3826
        %v3839 = vmul.f32 %v3800, %v3826
        %v3840 = vmul.f32 %v3801, %v3826
        %v3841 = vmul.f32 %v3802, %v3826
        %v3842 = vmul.f32 %v3803, %v3826
        %v3843 = vmul.f32 %v3804, %v3826
        %v3844 = vmul.f32 %v3805, %v3826
        %v3845 = vmul.f32 %v3806, %v3826
        %v3846 = vmul.f32 %v3807, %v3826
        %v3847 = vmul.f32 %v3808, %v3826
        %v3848 = vmul.f32 %v3809, %v3826
        %v3849 = vmul.f32 %v3810, %v3826
        %v3850 = vmul.f32 %v3811, %v3826
        %v3851 = vmul.f32 %v3812, %v3826
        %v3852 = vmul.f32 %v3813, %v3826
        %v3853 = vmul.f32 %v3814, %v3826
        %v3854 = vmul.f32 %v3815, %v3826
        %v3855 = vmul.f32 %v3816, %v3826
        %v3856 = vmul.f32 %v3817, %v3826
        %v3857 = vmul.f32 %v3818, %v3826
        %v3858 = vmul.f32 %v3819, %v3826
        %v3859 = vmul.f32 %v3820, %v3826
        %v3860 = vld [vmem:[%s7] sm:$0x1]
        %v3862 = vlaneseq
        %v3863 = vshrl.u32 %v3862, 7
        %v3864 = vsub.s32 0, %v3863
        %v3865 = vrot.slane %v3860, %v3864
        %v3867 = vadd.f32 %v3828, %v3865
        %v3868 = vadd.f32 %v3829, %v3865
        %v3869 = vadd.f32 %v3830, %v3865
        %v3870 = vadd.f32 %v3831, %v3865
        %v3871 = vadd.f32 %v3832, %v3865
        %v3872 = vadd.f32 %v3833, %v3865
        %v3873 = vadd.f32 %v3834, %v3865
        %v3874 = vadd.f32 %v3835, %v3865
        %v3875 = vadd.f32 %v3836, %v3865
        %v3876 = vadd.f32 %v3837, %v3865
        %v3877 = vadd.f32 %v3838, %v3865
        %v3878 = vadd.f32 %v3839, %v3865
        %v3879 = vadd.f32 %v3840, %v3865
        %v3880 = vadd.f32 %v3841, %v3865
        %v3881 = vadd.f32 %v3842, %v3865
        %v3882 = vadd.f32 %v3843, %v3865
        %v3883 = vadd.f32 %v3844, %v3865
        %v3884 = vadd.f32 %v3845, %v3865
        %v3885 = vadd.f32 %v3846, %v3865
        %v3886 = vadd.f32 %v3847, %v3865
        %v3887 = vadd.f32 %v3848, %v3865
        %v3888 = vadd.f32 %v3849, %v3865
        %v3889 = vadd.f32 %v3850, %v3865
        %v3890 = vadd.f32 %v3851, %v3865
        %v3891 = vadd.f32 %v3852, %v3865
        %v3892 = vadd.f32 %v3853, %v3865
        %v3893 = vadd.f32 %v3854, %v3865
        %v3894 = vadd.f32 %v3855, %v3865
        %v3895 = vadd.f32 %v3856, %v3865
        %v3896 = vadd.f32 %v3857, %v3865
        %v3897 = vadd.f32 %v3858, %v3865
        %v3898 = vadd.f32 %v3859, %v3865
        %v3899 = vmax.f32 %v3867, 0.0
        %v3900 = vmax.f32 %v3868, 0.0
        %v3901 = vmax.f32 %v3869, 0.0
        %v3902 = vmax.f32 %v3870, 0.0
        %v3903 = vmax.f32 %v3871, 0.0
        %v3904 = vmax.f32 %v3872, 0.0
        %v3905 = vmax.f32 %v3873, 0.0
        %v3906 = vmax.f32 %v3874, 0.0
        %v3907 = vmax.f32 %v3875, 0.0
        %v3908 = vmax.f32 %v3876, 0.0
        %v3909 = vmax.f32 %v3877, 0.0
        %v3910 = vmax.f32 %v3878, 0.0
        %v3911 = vmax.f32 %v3879, 0.0
        %v3912 = vmax.f32 %v3880, 0.0
        %v3913 = vmax.f32 %v3881, 0.0
        %v3914 = vmax.f32 %v3882, 0.0
        %v3915 = vmax.f32 %v3883, 0.0
        %v3916 = vmax.f32 %v3884, 0.0
        %v3917 = vmax.f32 %v3885, 0.0
        %v3918 = vmax.f32 %v3886, 0.0
        %v3919 = vmax.f32 %v3887, 0.0
        %v3920 = vmax.f32 %v3888, 0.0
        %v3921 = vmax.f32 %v3889, 0.0
        %v3922 = vmax.f32 %v3890, 0.0
        %v3923 = vmax.f32 %v3891, 0.0
        %v3924 = vmax.f32 %v3892, 0.0
        %v3925 = vmax.f32 %v3893, 0.0
        %v3926 = vmax.f32 %v3894, 0.0
        %v3927 = vmax.f32 %v3895, 0.0
        %v3928 = vmax.f32 %v3896, 0.0
        %v3929 = vmax.f32 %v3897, 0.0
        %v3930 = vmax.f32 %v3898, 0.0
        %v3931 = vpack.c.bf16 %v3900, %v3899
        %v3932 = vpack.c.bf16 %v3902, %v3901
        %v3933 = vpack.c.bf16 %v3904, %v3903
        %v3934 = vpack.c.bf16 %v3906, %v3905
        %v3935 = vpack.c.bf16 %v3908, %v3907
        %v3936 = vpack.c.bf16 %v3910, %v3909
        %v3937 = vpack.c.bf16 %v3912, %v3911
        %v3938 = vpack.c.bf16 %v3914, %v3913
        %v3939 = vpack.c.bf16 %v3916, %v3915
        %v3940 = vpack.c.bf16 %v3918, %v3917
        %v3941 = vpack.c.bf16 %v3920, %v3919
        %v3942 = vpack.c.bf16 %v3922, %v3921
        %v3943 = vpack.c.bf16 %v3924, %v3923
        %v3944 = vpack.c.bf16 %v3926, %v3925
        %v3945 = vpack.c.bf16 %v3928, %v3927
        %v3946 = vpack.c.bf16 %v3930, %v3929
        %v3947 = vld [vmem:[%s8] sm:$0xf]
        %v3948 = vld [vmem:[%s8 + $0x4] sm:$0xf]
        %v3949 = vld [vmem:[%s8 + $0x8] sm:$0xf]
        %v3950 = vld [vmem:[%s8 + $0xc] sm:$0xf]
        %v3955 = vunpack.c.l.b16 %v3947
        %v3956 = vunpack.c.l.b16 %v3948
        %v3957 = vunpack.c.l.b16 %v3949
        %v3958 = vunpack.c.l.b16 %v3950
        %v3959 = vpack.c.b16 %v3956, %v3955
        %v3960 = vpack.c.b16 %v3958, %v3957
        %v3964 = vsel %vm723, %v3931, 0
        %v3967 = vsel %vm723, %v3932, 0
        %v3970 = vsel %vm723, %v3933, 0
        %v3973 = vsel %vm723, %v3934, 0
        %v3976 = vsel %vm723, %v3935, 0
        %v3979 = vsel %vm723, %v3936, 0
        %v3982 = vsel %vm723, %v3937, 0
        %v3985 = vsel %vm723, %v3938, 0
        %v3988 = vsel %vm723, %v3939, 0
        %v3991 = vsel %vm723, %v3940, 0
        %v3994 = vsel %vm723, %v3941, 0
        %v3997 = vsel %vm723, %v3942, 0
        %v4000 = vsel %vm723, %v3943, 0
        %v4003 = vsel %vm723, %v3944, 0
        %v4006 = vsel %vm723, %v3945, 0
        %v4009 = vsel %vm723, %v3946, 0
        %4011 = vmatprep.subr.bf16.mxu0 0
        %4012 = vmatpush1.bf16.msra.mxu0 0
        %4013 = vmatprep.subr.bf16.mxu0 0
        %4014 = vmatpush1.bf16.msra.mxu0 0
        %4015 = vmatprep.subr.bf16.mxu0 0
        %4016 = vmatpush1.bf16.msra.mxu0 0
        %4017 = vmatprep.subr.bf16.mxu0 0
        %4018 = vmatpush1.bf16.msra.mxu0 0
        %4019 = vmatprep.subr.bf16.mxu0 0
        %4020 = vmatpush1.bf16.msra.mxu0 0
        %4021 = vmatprep.subr.bf16.mxu0 0
        %4022 = vmatpush1.bf16.msra.mxu0 0
        %4023 = vmatprep.subr.bf16.mxu0 0
        %4024 = vmatpush1.bf16.msra.mxu0 %v3960
        %4025 = vmatprep.subr.bf16.mxu0 0
        %4026 = vmatpush1.bf16.msra.mxu0 %v3959
        %4027 = vmatprep.subr.bf16.mxu0 0
        %4028 = vmatpush2.bf16.msra.mxu0 0
        %4029 = vmatprep.subr.bf16.mxu0 0
        %4030 = vmatpush2.bf16.msra.mxu0 0
        %4031 = vmatprep.subr.bf16.mxu0 0
        %4032 = vmatpush2.bf16.msra.mxu0 0
        %4033 = vmatprep.subr.bf16.mxu0 0
        %4034 = vmatpush2.bf16.msra.mxu0 0
        %4035 = vmatprep.subr.bf16.mxu0 0
        %4036 = vmatpush2.bf16.msra.mxu0 0
        %4037 = vmatprep.subr.bf16.mxu0 0
        %4038 = vmatpush2.bf16.msra.mxu0 0
        %4039 = vmatprep.subr.bf16.mxu0 0
        %4040 = vmatpush2.bf16.msra.mxu0 0
        %4041 = vmatprep.subr.bf16.mxu0 0
        %4042 = vmatpush2.bf16.msra.mxu0 0
        %4043 = vmatprep.mubr.bf16.mxu0 0
        %4044 = vmatmul.mubr.bf16.gmra.mxu0 %v3964
        %v4045 = vpop.f32.mrf.mxu0
        %v4046 = vadd.f32 0.0, %v4045
        %v4047 = vpop.f32.mrf.mxu0
        %v4048 = vpop.f32.mrf.mxu0
        %v4049 = vadd.f32 0.0, %v4048
        %v4050 = vpop.f32.mrf.mxu0
        %4051 = vmatprep.mubr.bf16.mxu0 0
        %4052 = vmatmul.mubr.bf16.gmra.mxu0 %v3967
        %v4053 = vpop.f32.mrf.mxu0
        %v4054 = vadd.f32 0.0, %v4053
        %v4055 = vpop.f32.mrf.mxu0
        %v4056 = vpop.f32.mrf.mxu0
        %v4057 = vadd.f32 0.0, %v4056
        %v4058 = vpop.f32.mrf.mxu0
        %4059 = vmatprep.mubr.bf16.mxu0 0
        %4060 = vmatmul.mubr.bf16.gmra.mxu0 %v3970
        %v4061 = vpop.f32.mrf.mxu0
        %v4062 = vadd.f32 0.0, %v4061
        %v4063 = vpop.f32.mrf.mxu0
        %v4064 = vpop.f32.mrf.mxu0
        %v4065 = vadd.f32 0.0, %v4064
        %v4066 = vpop.f32.mrf.mxu0
        %4067 = vmatprep.mubr.bf16.mxu0 0
        %4068 = vmatmul.mubr.bf16.gmra.mxu0 %v3973
        %v4069 = vpop.f32.mrf.mxu0
        %v4070 = vadd.f32 0.0, %v4069
        %v4071 = vpop.f32.mrf.mxu0
        %v4072 = vpop.f32.mrf.mxu0
        %v4073 = vadd.f32 0.0, %v4072
        %v4074 = vpop.f32.mrf.mxu0
        %4075 = vmatprep.mubr.bf16.mxu0 0
        %4076 = vmatmul.mubr.bf16.gmra.mxu0 %v3976
        %v4077 = vpop.f32.mrf.mxu0
        %v4078 = vadd.f32 0.0, %v4077
        %v4079 = vpop.f32.mrf.mxu0
        %v4080 = vpop.f32.mrf.mxu0
        %v4081 = vadd.f32 0.0, %v4080
        %v4082 = vpop.f32.mrf.mxu0
        %4083 = vmatprep.mubr.bf16.mxu0 0
        %4084 = vmatmul.mubr.bf16.gmra.mxu0 %v3979
        %v4085 = vpop.f32.mrf.mxu0
        %v4086 = vadd.f32 0.0, %v4085
        %v4087 = vpop.f32.mrf.mxu0
        %v4088 = vpop.f32.mrf.mxu0
        %v4089 = vadd.f32 0.0, %v4088
        %v4090 = vpop.f32.mrf.mxu0
        %4091 = vmatprep.mubr.bf16.mxu0 0
        %4092 = vmatmul.mubr.bf16.gmra.mxu0 %v3982
        %v4093 = vpop.f32.mrf.mxu0
        %v4094 = vadd.f32 0.0, %v4093
        %v4095 = vpop.f32.mrf.mxu0
        %v4096 = vpop.f32.mrf.mxu0
        %v4097 = vadd.f32 0.0, %v4096
        %v4098 = vpop.f32.mrf.mxu0
        %4099 = vmatprep.mubr.bf16.mxu0 0
        %4100 = vmatmul.mubr.bf16.gmra.mxu0 %v3985
        %v4101 = vpop.f32.mrf.mxu0
        %v4102 = vadd.f32 0.0, %v4101
        %v4103 = vpop.f32.mrf.mxu0
        %v4104 = vpop.f32.mrf.mxu0
        %v4105 = vadd.f32 0.0, %v4104
        %v4106 = vpop.f32.mrf.mxu0
        %4107 = vmatprep.mubr.bf16.mxu0 0
        %4108 = vmatmul.mubr.bf16.gmra.mxu0 %v3988
        %v4109 = vpop.f32.mrf.mxu0
        %v4110 = vadd.f32 0.0, %v4109
        %v4111 = vpop.f32.mrf.mxu0
        %v4112 = vpop.f32.mrf.mxu0
        %v4113 = vadd.f32 0.0, %v4112
        %v4114 = vpop.f32.mrf.mxu0
        %4115 = vmatprep.mubr.bf16.mxu0 0
        %4116 = vmatmul.mubr.bf16.gmra.mxu0 %v3991
        %v4117 = vpop.f32.mrf.mxu0
        %v4118 = vadd.f32 0.0, %v4117
        %v4119 = vpop.f32.mrf.mxu0
        %v4120 = vpop.f32.mrf.mxu0
        %v4121 = vadd.f32 0.0, %v4120
        %v4122 = vpop.f32.mrf.mxu0
        %4123 = vmatprep.mubr.bf16.mxu0 0
        %4124 = vmatmul.mubr.bf16.gmra.mxu0 %v3994
        %v4125 = vpop.f32.mrf.mxu0
        %v4126 = vadd.f32 0.0, %v4125
        %v4127 = vpop.f32.mrf.mxu0
        %v4128 = vpop.f32.mrf.mxu0
        %v4129 = vadd.f32 0.0, %v4128
        %v4130 = vpop.f32.mrf.mxu0
        %4131 = vmatprep.mubr.bf16.mxu0 0
        %4132 = vmatmul.mubr.bf16.gmra.mxu0 %v3997
        %v4133 = vpop.f32.mrf.mxu0
        %v4134 = vadd.f32 0.0, %v4133
        %v4135 = vpop.f32.mrf.mxu0
        %v4136 = vpop.f32.mrf.mxu0
        %v4137 = vadd.f32 0.0, %v4136
        %v4138 = vpop.f32.mrf.mxu0
        %4139 = vmatprep.mubr.bf16.mxu0 0
        %4140 = vmatmul.mubr.bf16.gmra.mxu0 %v4000
        %v4141 = vpop.f32.mrf.mxu0
        %v4142 = vadd.f32 0.0, %v4141
        %v4143 = vpop.f32.mrf.mxu0
        %v4144 = vpop.f32.mrf.mxu0
        %v4145 = vadd.f32 0.0, %v4144
        %v4146 = vpop.f32.mrf.mxu0
        %4147 = vmatprep.mubr.bf16.mxu0 0
        %4148 = vmatmul.mubr.bf16.gmra.mxu0 %v4003
        %v4149 = vpop.f32.mrf.mxu0
        %v4150 = vadd.f32 0.0, %v4149
        %v4151 = vpop.f32.mrf.mxu0
        %v4152 = vpop.f32.mrf.mxu0
        %v4153 = vadd.f32 0.0, %v4152
        %v4154 = vpop.f32.mrf.mxu0
        %4155 = vmatprep.mubr.bf16.mxu0 0
        %4156 = vmatmul.mubr.bf16.gmra.mxu0 %v4006
        %v4157 = vpop.f32.mrf.mxu0
        %v4158 = vadd.f32 0.0, %v4157
        %v4159 = vpop.f32.mrf.mxu0
        %v4160 = vpop.f32.mrf.mxu0
        %v4161 = vadd.f32 0.0, %v4160
        %v4162 = vpop.f32.mrf.mxu0
        %4163 = vmatprep.mubr.bf16.mxu0 0
        %4164 = vmatmul.mubr.bf16.gmra.mxu0 %v4009
        %v4165 = vpop.f32.mrf.mxu0
        %v4166 = vadd.f32 0.0, %v4165
        %v4167 = vpop.f32.mrf.mxu0
        %v4168 = vpop.f32.mrf.mxu0
        %v4169 = vadd.f32 0.0, %v4168
        %v4170 = vpop.f32.mrf.mxu0
        %4171 = vdwg.mxu0
        %v4172 = vld [vmem:[%s9] sm:$0x1]
        %v4174 = vlaneseq
        %v4175 = vshrl.u32 %v4174, 7
        %v4176 = vsub.s32 0, %v4175
        %v4177 = vrot.slane %v4172, %v4176
        %v4179 = vmul.f32 %v4046, %v4177
        %v4180 = vmul.f32 %v4049, %v4177
        %v4181 = vmul.f32 %v4054, %v4177
        %v4182 = vmul.f32 %v4057, %v4177
        %v4183 = vmul.f32 %v4062, %v4177
        %v4184 = vmul.f32 %v4065, %v4177
        %v4185 = vmul.f32 %v4070, %v4177
        %v4186 = vmul.f32 %v4073, %v4177
        %v4187 = vmul.f32 %v4078, %v4177
        %v4188 = vmul.f32 %v4081, %v4177
        %v4189 = vmul.f32 %v4086, %v4177
        %v4190 = vmul.f32 %v4089, %v4177
        %v4191 = vmul.f32 %v4094, %v4177
        %v4192 = vmul.f32 %v4097, %v4177
        %v4193 = vmul.f32 %v4102, %v4177
        %v4194 = vmul.f32 %v4105, %v4177
        %v4195 = vmul.f32 %v4110, %v4177
        %v4196 = vmul.f32 %v4113, %v4177
        %v4197 = vmul.f32 %v4118, %v4177
        %v4198 = vmul.f32 %v4121, %v4177
        %v4199 = vmul.f32 %v4126, %v4177
        %v4200 = vmul.f32 %v4129, %v4177
        %v4201 = vmul.f32 %v4134, %v4177
        %v4202 = vmul.f32 %v4137, %v4177
        %v4203 = vmul.f32 %v4142, %v4177
        %v4204 = vmul.f32 %v4145, %v4177
        %v4205 = vmul.f32 %v4150, %v4177
        %v4206 = vmul.f32 %v4153, %v4177
        %v4207 = vmul.f32 %v4158, %v4177
        %v4208 = vmul.f32 %v4161, %v4177
        %v4209 = vmul.f32 %v4166, %v4177
        %v4210 = vmul.f32 %v4169, %v4177
        %v4211 = vld [vmem:[%s10] sm:$0x1]
        %v4213 = vlaneseq
        %v4214 = vshrl.u32 %v4213, 7
        %v4215 = vsub.s32 0, %v4214
        %v4216 = vrot.slane %v4211, %v4215
        %v4218 = vadd.f32 %v4179, %v4216
        %v4219 = vadd.f32 %v4180, %v4216
        %v4220 = vadd.f32 %v4181, %v4216
        %v4221 = vadd.f32 %v4182, %v4216
        %v4222 = vadd.f32 %v4183, %v4216
        %v4223 = vadd.f32 %v4184, %v4216
        %v4224 = vadd.f32 %v4185, %v4216
        %v4225 = vadd.f32 %v4186, %v4216
        %v4226 = vadd.f32 %v4187, %v4216
        %v4227 = vadd.f32 %v4188, %v4216
        %v4228 = vadd.f32 %v4189, %v4216
        %v4229 = vadd.f32 %v4190, %v4216
        %v4230 = vadd.f32 %v4191, %v4216
        %v4231 = vadd.f32 %v4192, %v4216
        %v4232 = vadd.f32 %v4193, %v4216
        %v4233 = vadd.f32 %v4194, %v4216
        %v4234 = vadd.f32 %v4195, %v4216
        %v4235 = vadd.f32 %v4196, %v4216
        %v4236 = vadd.f32 %v4197, %v4216
        %v4237 = vadd.f32 %v4198, %v4216
        %v4238 = vadd.f32 %v4199, %v4216
        %v4239 = vadd.f32 %v4200, %v4216
        %v4240 = vadd.f32 %v4201, %v4216
        %v4241 = vadd.f32 %v4202, %v4216
        %v4242 = vadd.f32 %v4203, %v4216
        %v4243 = vadd.f32 %v4204, %v4216
        %v4244 = vadd.f32 %v4205, %v4216
        %v4245 = vadd.f32 %v4206, %v4216
        %v4246 = vadd.f32 %v4207, %v4216
        %v4247 = vadd.f32 %v4208, %v4216
        %v4248 = vadd.f32 %v4209, %v4216
        %v4249 = vadd.f32 %v4210, %v4216
        %4250 = vmatprep.subr.mxu0 0.0
        %4251 = vmatpush1.msra.mxu0 %v4233
        %4252 = vmatprep.subr.mxu0 0.0
        %4253 = vmatpush1.msra.mxu0 %v4232
        %4254 = vmatprep.subr.mxu0 0.0
        %4255 = vmatpush1.msra.mxu0 %v4231
        %4256 = vmatprep.subr.mxu0 0.0
        %4257 = vmatpush1.msra.mxu0 %v4230
        %4258 = vmatprep.subr.mxu0 0.0
        %4259 = vmatpush1.msra.mxu0 %v4229
        %4260 = vmatprep.subr.mxu0 0.0
        %4261 = vmatpush1.msra.mxu0 %v4228
        %4262 = vmatprep.subr.mxu0 0.0
        %4263 = vmatpush1.msra.mxu0 %v4227
        %4264 = vmatprep.subr.mxu0 0.0
        %4265 = vmatpush1.msra.mxu0 %v4226
        %4266 = vmatprep.subr.mxu0 0.0
        %4267 = vmatpush1.msra.mxu0 %v4225
        %4268 = vmatprep.subr.mxu0 0.0
        %4269 = vmatpush1.msra.mxu0 %v4224
        %4270 = vmatprep.subr.mxu0 0.0
        %4271 = vmatpush1.msra.mxu0 %v4223
        %4272 = vmatprep.subr.mxu0 0.0
        %4273 = vmatpush1.msra.mxu0 %v4222
        %4274 = vmatprep.subr.mxu0 0.0
        %4275 = vmatpush1.msra.mxu0 %v4221
        %4276 = vmatprep.subr.mxu0 0.0
        %4277 = vmatpush1.msra.mxu0 %v4220
        %4278 = vmatprep.subr.mxu0 0.0
        %4279 = vmatpush1.msra.mxu0 %v4219
        %4280 = vmatprep.subr.mxu0 0.0
        %4281 = vmatpush1.msra.mxu0 %v4218
        %4282 = vmatprep.subr.mxu0 0.0
        %4283 = vmatpush2.msra.mxu0 %v4249
        %4284 = vmatprep.subr.mxu0 0.0
        %4285 = vmatpush2.msra.mxu0 %v4248
        %4286 = vmatprep.subr.mxu0 0.0
        %4287 = vmatpush2.msra.mxu0 %v4247
        %4288 = vmatprep.subr.mxu0 0.0
        %4289 = vmatpush2.msra.mxu0 %v4246
        %4290 = vmatprep.subr.mxu0 0.0
        %4291 = vmatpush2.msra.mxu0 %v4245
        %4292 = vmatprep.subr.mxu0 0.0
        %4293 = vmatpush2.msra.mxu0 %v4244
        %4294 = vmatprep.subr.mxu0 0.0
        %4295 = vmatpush2.msra.mxu0 %v4243
        %4296 = vmatprep.subr.mxu0 0.0
        %4297 = vmatpush2.msra.mxu0 %v4242
        %4298 = vmatprep.subr.mxu0 0.0
        %4299 = vmatpush2.msra.mxu0 %v4241
        %4300 = vmatprep.subr.mxu0 0.0
        %4301 = vmatpush2.msra.mxu0 %v4240
        %4302 = vmatprep.subr.mxu0 0.0
        %4303 = vmatpush2.msra.mxu0 %v4239
        %4304 = vmatprep.subr.mxu0 0.0
        %4305 = vmatpush2.msra.mxu0 %v4238
        %4306 = vmatprep.subr.mxu0 0.0
        %4307 = vmatpush2.msra.mxu0 %v4237
        %4308 = vmatprep.subr.mxu0 0.0
        %4309 = vmatpush2.msra.mxu0 %v4236
        %4310 = vmatprep.subr.mxu0 0.0
        %4311 = vmatpush2.msra.mxu0 %v4235
        %4312 = vmatprep.subr.mxu0 0.0
        %4313 = vmatpush2.msra.mxu0 %v4234
        %4314 = vmatprep.mubr.f32.mxu0 0.00390625
        %4315 = vmatmul.mubr.f32.gmra.mxu0 0.00390625
        %v4316 = vpop.f32.mrf.mxu0
        %v4317 = vadd.f32 0.0, %v4316
        %v4318 = vpop.f32.mrf.mxu0
        %4319 = vdwg.mxu0
        %v4320 = vpack.c.bf16 %v4317, %v4317
        %v4321 = vld [vmem:[%s11] sm:$0xf]
        %v4322 = vld [vmem:[%s11 + $0x4] sm:$0xf]
        %v4323 = vld [vmem:[%s11 + $0x8] sm:$0xf]
        %v4324 = vld [vmem:[%s11 + $0xc] sm:$0xf]
        %v4325 = vld [vmem:[%s11 + $0x10] sm:$0xf]
        %v4326 = vld [vmem:[%s11 + $0x14] sm:$0xf]
        %v4327 = vld [vmem:[%s11 + $0x18] sm:$0xf]
        %v4328 = vld [vmem:[%s11 + $0x1c] sm:$0xf]
        %v4329 = vld [vmem:[%s11 + $0x20] sm:$0xf]
        %v4330 = vld [vmem:[%s11 + $0x24] sm:$0xf]
        %v4331 = vld [vmem:[%s11 + $0x28] sm:$0xf]
        %v4332 = vld [vmem:[%s11 + $0x2c] sm:$0xf]
        %v4333 = vld [vmem:[%s11 + $0x30] sm:$0xf]
        %v4334 = vld [vmem:[%s11 + $0x34] sm:$0xf]
        %v4335 = vld [vmem:[%s11 + $0x38] sm:$0xf]
        %v4336 = vld [vmem:[%s11 + $0x3c] sm:$0xf]
        %v4337 = vld [vmem:[%s12] sm:$0x1]
        %v4354 = vunpack.c.l.b16 %v4321
        %v4355 = vunpack.c.l.b16 %v4322
        %v4356 = vunpack.c.l.b16 %v4323
        %v4357 = vunpack.c.l.b16 %v4324
        %v4358 = vunpack.c.l.b16 %v4325
        %v4359 = vunpack.c.l.b16 %v4326
        %v4360 = vunpack.c.l.b16 %v4327
        %v4361 = vunpack.c.l.b16 %v4328
        %v4362 = vunpack.c.l.b16 %v4329
        %v4363 = vunpack.c.l.b16 %v4330
        %v4364 = vunpack.c.l.b16 %v4331
        %v4365 = vunpack.c.l.b16 %v4332
        %v4366 = vunpack.c.l.b16 %v4333
        %v4367 = vunpack.c.l.b16 %v4334
        %v4368 = vunpack.c.l.b16 %v4335
        %v4369 = vunpack.c.l.b16 %v4336
        %v4370 = vpack.c.b16 %v4355, %v4354
        %v4371 = vpack.c.b16 %v4357, %v4356
        %v4372 = vpack.c.b16 %v4359, %v4358
        %v4373 = vpack.c.b16 %v4361, %v4360
        %v4374 = vpack.c.b16 %v4363, %v4362
        %v4375 = vpack.c.b16 %v4365, %v4364
        %v4376 = vpack.c.b16 %v4367, %v4366
        %v4377 = vpack.c.b16 %v4369, %v4368
        %4386 = vmatprep.subr.bf16.mxu0 0
        %4387 = vmatpush1.bf16.msra.mxu0 %v4377
        %4388 = vmatprep.subr.bf16.mxu0 0
        %4389 = vmatpush1.bf16.msra.mxu0 %v4376
        %4390 = vmatprep.subr.bf16.mxu0 0
        %4391 = vmatpush1.bf16.msra.mxu0 %v4375
        %4392 = vmatprep.subr.bf16.mxu0 0
        %4393 = vmatpush1.bf16.msra.mxu0 %v4374
        %4394 = vmatprep.subr.bf16.mxu0 0
        %4395 = vmatpush1.bf16.msra.mxu0 %v4373
        %4396 = vmatprep.subr.bf16.mxu0 0
        %4397 = vmatpush1.bf16.msra.mxu0 %v4372
        %4398 = vmatprep.subr.bf16.mxu0 0
        %4399 = vmatpush1.bf16.msra.mxu0 %v4371
        %4400 = vmatprep.subr.bf16.mxu0 0
        %4401 = vmatpush1.bf16.msra.mxu0 %v4370
        %4402 = vmatprep.subr.bf16.mxu0 0
        %4403 = vmatpush2.bf16.msra.mxu0 0
        %4404 = vmatprep.subr.bf16.mxu0 0
        %4405 = vmatpush2.bf16.msra.mxu0 0
        %4406 = vmatprep.subr.bf16.mxu0 0
        %4407 = vmatpush2.bf16.msra.mxu0 0
        %4408 = vmatprep.subr.bf16.mxu0 0
        %4409 = vmatpush2.bf16.msra.mxu0 0
        %4410 = vmatprep.subr.bf16.mxu0 0
        %4411 = vmatpush2.bf16.msra.mxu0 0
        %4412 = vmatprep.subr.bf16.mxu0 0
        %4413 = vmatpush2.bf16.msra.mxu0 0
        %4414 = vmatprep.subr.bf16.mxu0 0
        %4415 = vmatpush2.bf16.msra.mxu0 0
        %4416 = vmatprep.subr.bf16.mxu0 0
        %4417 = vmatpush2.bf16.msra.mxu0 0
        %4418 = vmatprep.mubr.bf16.mxu0 0
        %4419 = vmatmul.mubr.bf16.gmra.mxu0 %v4320
        %v4420 = vpop.f32.mrf.mxu0
        %v4421 = vadd.f32 %v4337, %v4420
        %v4422 = vpop.f32.mrf.mxu0
        %v4423 = vpop.f32.mrf.mxu0
        %v4424 = vpop.f32.mrf.mxu0
        %4425 = vdwg.mxu0
        %v4426 = vmax.f32 %v4421, 0.0
        %v4427 = vpack.c.bf16 %v4426, %v4426
        %v4428 = vld [vmem:[%s13] sm:$0xf]
        %v4429 = vld [vmem:[%s14] sm:$0x1]
        %vm4430 = vcmask 64512
        %v4432 = vsel %vm4430, %v4427, 0
        %vm4434 = vcmask 1043456
        %v4436 = vsel %vm4434, %v4428, 0
        %4438 = vmatprep.subr.bf16.mxu0 0
        %4439 = vmatpush1.bf16.msra.mxu0 0
        %4440 = vmatprep.subr.bf16.mxu0 0
        %4441 = vmatpush1.bf16.msra.mxu0 0
        %4442 = vmatprep.subr.bf16.mxu0 0
        %4443 = vmatpush1.bf16.msra.mxu0 0
        %4444 = vmatprep.subr.bf16.mxu0 0
        %4445 = vmatpush1.bf16.msra.mxu0 0
        %4446 = vmatprep.subr.bf16.mxu0 0
        %4447 = vmatpush1.bf16.msra.mxu0 0
        %4448 = vmatprep.subr.bf16.mxu0 0
        %4449 = vmatpush1.bf16.msra.mxu0 0
        %4450 = vmatprep.subr.bf16.mxu0 0
        %4451 = vmatpush1.bf16.msra.mxu0 0
        %4452 = vmatprep.subr.bf16.mxu0 0
        %4453 = vmatpush1.bf16.msra.mxu0 %v4436
        %4454 = vmatprep.subr.bf16.mxu0 0
        %4455 = vmatpush2.bf16.msra.mxu0 0
        %4456 = vmatprep.subr.bf16.mxu0 0
        %4457 = vmatpush2.bf16.msra.mxu0 0
        %4458 = vmatprep.subr.bf16.mxu0 0
        %4459 = vmatpush2.bf16.msra.mxu0 0
        %4460 = vmatprep.subr.bf16.mxu0 0
        %4461 = vmatpush2.bf16.msra.mxu0 0
        %4462 = vmatprep.subr.bf16.mxu0 0
        %4463 = vmatpush2.bf16.msra.mxu0 0
        %4464 = vmatprep.subr.bf16.mxu0 0
        %4465 = vmatpush2.bf16.msra.mxu0 0
        %4466 = vmatprep.subr.bf16.mxu0 0
        %4467 = vmatpush2.bf16.msra.mxu0 0
        %4468 = vmatprep.subr.bf16.mxu0 0
        %4469 = vmatpush2.bf16.msra.mxu0 0
        %4470 = vmatprep.mubr.bf16.mxu0 0
        %4471 = vmatmul.mubr.bf16.gmra.mxu0 %v4432
        %v4472 = vpop.f32.mrf.mxu0
        %v4473 = vadd.f32 %v4429, %v4472
        %v4474 = vpop.f32.mrf.mxu0
        %v4475 = vpop.f32.mrf.mxu0
        %v4476 = vpop.f32.mrf.mxu0
        %4477 = vdwg.mxu0
        %v4478 = vxor.u32 %v4473, 2147483648
        %v4479 = vmul.f32 %v4478, 1.442695
        %v4480 = vpow.pop %v4479
        %v4481 = vadd.f32 %v4480, 1.0
        %v4482 = vrcp.pop %v4481
        %v4483 = vmul.f32 1.0, %v4482
        %v4484 = vld [vmem:[%s593] sm:$0xf]
        %v4485 = vld [vmem:[%s593 + $0x4] sm:$0xf]
        %v4486 = vld [vmem:[%s593 + $0x8] sm:$0xf]
        %v4487 = vld [vmem:[%s593 + $0xc] sm:$0xf]
        %v4488 = vld [vmem:[%s593 + $0x10] sm:$0xf]
        %v4489 = vld [vmem:[%s593 + $0x14] sm:$0xf]
        %v4490 = vld [vmem:[%s593 + $0x18] sm:$0xf]
        %v4491 = vld [vmem:[%s593 + $0x1c] sm:$0xf]
        %v4492 = vld [vmem:[%s593 + $0x20] sm:$0xf]
        %v4493 = vld [vmem:[%s593 + $0x24] sm:$0xf]
        %v4494 = vld [vmem:[%s593 + $0x28] sm:$0xf]
        %v4495 = vld [vmem:[%s593 + $0x2c] sm:$0xf]
        %v4496 = vld [vmem:[%s593 + $0x30] sm:$0xf]
        %v4497 = vld [vmem:[%s593 + $0x34] sm:$0xf]
        %v4498 = vld [vmem:[%s593 + $0x38] sm:$0xf]
        %v4499 = vld [vmem:[%s593 + $0x3c] sm:$0xf]
        %v4500 = vld [vmem:[%s593 + $0x40] sm:$0xf]
        %v4501 = vld [vmem:[%s593 + $0x44] sm:$0xf]
        %v4502 = vld [vmem:[%s593 + $0x48] sm:$0xf]
        %v4503 = vld [vmem:[%s593 + $0x4c] sm:$0xf]
        %v4504 = vld [vmem:[%s593 + $0x50] sm:$0xf]
        %v4505 = vld [vmem:[%s593 + $0x54] sm:$0xf]
        %v4506 = vld [vmem:[%s593 + $0x58] sm:$0xf]
        %v4507 = vld [vmem:[%s593 + $0x5c] sm:$0xf]
        %v4508 = vld [vmem:[%s593 + $0x60] sm:$0xf]
        %v4509 = vld [vmem:[%s593 + $0x64] sm:$0xf]
        %v4510 = vld [vmem:[%s593 + $0x68] sm:$0xf]
        %v4511 = vld [vmem:[%s593 + $0x6c] sm:$0xf]
        %v4512 = vld [vmem:[%s593 + $0x70] sm:$0xf]
        %v4513 = vld [vmem:[%s593 + $0x74] sm:$0xf]
        %v4514 = vld [vmem:[%s593 + $0x78] sm:$0xf]
        %v4515 = vld [vmem:[%s593 + $0x7c] sm:$0xf]
        %v4516 = vld [vmem:[%s15] sm:$0xf]
        %v4517 = vld [vmem:[%s15 + $0x4] sm:$0xf]
        %v4518 = vld [vmem:[%s15 + $0x8] sm:$0xf]
        %v4519 = vld [vmem:[%s15 + $0xc] sm:$0xf]
        %v4552 = vunpack.c.l.b16 %v4484
        %v4553 = vunpack.c.l.b16 %v4485
        %v4554 = vunpack.c.l.b16 %v4486
        %v4555 = vunpack.c.l.b16 %v4487
        %v4556 = vunpack.c.l.b16 %v4488
        %v4557 = vunpack.c.l.b16 %v4489
        %v4558 = vunpack.c.l.b16 %v4490
        %v4559 = vunpack.c.l.b16 %v4491
        %v4560 = vunpack.c.l.b16 %v4492
        %v4561 = vunpack.c.l.b16 %v4493
        %v4562 = vunpack.c.l.b16 %v4494
        %v4563 = vunpack.c.l.b16 %v4495
        %v4564 = vunpack.c.l.b16 %v4496
        %v4565 = vunpack.c.l.b16 %v4497
        %v4566 = vunpack.c.l.b16 %v4498
        %v4567 = vunpack.c.l.b16 %v4499
        %v4568 = vunpack.c.l.b16 %v4500
        %v4569 = vunpack.c.l.b16 %v4501
        %v4570 = vunpack.c.l.b16 %v4502
        %v4571 = vunpack.c.l.b16 %v4503
        %v4572 = vunpack.c.l.b16 %v4504
        %v4573 = vunpack.c.l.b16 %v4505
        %v4574 = vunpack.c.l.b16 %v4506
        %v4575 = vunpack.c.l.b16 %v4507
        %v4576 = vunpack.c.l.b16 %v4508
        %v4577 = vunpack.c.l.b16 %v4509
        %v4578 = vunpack.c.l.b16 %v4510
        %v4579 = vunpack.c.l.b16 %v4511
        %v4580 = vunpack.c.l.b16 %v4512
        %v4581 = vunpack.c.l.b16 %v4513
        %v4582 = vunpack.c.l.b16 %v4514
        %v4583 = vunpack.c.l.b16 %v4515
        %v4584 = vpack.c.b16 %v4553, %v4552
        %v4585 = vpack.c.b16 %v4555, %v4554
        %v4586 = vpack.c.b16 %v4557, %v4556
        %v4587 = vpack.c.b16 %v4559, %v4558
        %v4588 = vpack.c.b16 %v4561, %v4560
        %v4589 = vpack.c.b16 %v4563, %v4562
        %v4590 = vpack.c.b16 %v4565, %v4564
        %v4591 = vpack.c.b16 %v4567, %v4566
        %v4592 = vpack.c.b16 %v4569, %v4568
        %v4593 = vpack.c.b16 %v4571, %v4570
        %v4594 = vpack.c.b16 %v4573, %v4572
        %v4595 = vpack.c.b16 %v4575, %v4574
        %v4596 = vpack.c.b16 %v4577, %v4576
        %v4597 = vpack.c.b16 %v4579, %v4578
        %v4598 = vpack.c.b16 %v4581, %v4580
        %v4599 = vpack.c.b16 %v4583, %v4582
        %v4604 = vunpack.c.l.b16 %v4516
        %v4605 = vunpack.c.l.b16 %v4517
        %v4606 = vunpack.c.l.b16 %v4518
        %v4607 = vunpack.c.l.b16 %v4519
        %v4608 = vpack.c.b16 %v4605, %v4604
        %v4609 = vpack.c.b16 %v4607, %v4606
        %v4613 = vsel %vm723, %v4584, 0
        %v4616 = vsel %vm723, %v4585, 0
        %v4619 = vsel %vm723, %v4586, 0
        %v4622 = vsel %vm723, %v4587, 0
        %v4625 = vsel %vm723, %v4588, 0
        %v4628 = vsel %vm723, %v4589, 0
        %v4631 = vsel %vm723, %v4590, 0
        %v4634 = vsel %vm723, %v4591, 0
        %v4637 = vsel %vm723, %v4592, 0
        %v4640 = vsel %vm723, %v4593, 0
        %v4643 = vsel %vm723, %v4594, 0
        %v4646 = vsel %vm723, %v4595, 0
        %v4649 = vsel %vm723, %v4596, 0
        %v4652 = vsel %vm723, %v4597, 0
        %v4655 = vsel %vm723, %v4598, 0
        %v4658 = vsel %vm723, %v4599, 0
        %4660 = vmatprep.subr.bf16.mxu0 0
        %4661 = vmatpush1.bf16.msra.mxu0 0
        %4662 = vmatprep.subr.bf16.mxu0 0
        %4663 = vmatpush1.bf16.msra.mxu0 0
        %4664 = vmatprep.subr.bf16.mxu0 0
        %4665 = vmatpush1.bf16.msra.mxu0 0
        %4666 = vmatprep.subr.bf16.mxu0 0
        %4667 = vmatpush1.bf16.msra.mxu0 0
        %4668 = vmatprep.subr.bf16.mxu0 0
        %4669 = vmatpush1.bf16.msra.mxu0 0
        %4670 = vmatprep.subr.bf16.mxu0 0
        %4671 = vmatpush1.bf16.msra.mxu0 0
        %4672 = vmatprep.subr.bf16.mxu0 0
        %4673 = vmatpush1.bf16.msra.mxu0 %v4609
        %4674 = vmatprep.subr.bf16.mxu0 0
        %4675 = vmatpush1.bf16.msra.mxu0 %v4608
        %4676 = vmatprep.subr.bf16.mxu0 0
        %4677 = vmatpush2.bf16.msra.mxu0 0
        %4678 = vmatprep.subr.bf16.mxu0 0
        %4679 = vmatpush2.bf16.msra.mxu0 0
        %4680 = vmatprep.subr.bf16.mxu0 0
        %4681 = vmatpush2.bf16.msra.mxu0 0
        %4682 = vmatprep.subr.bf16.mxu0 0
        %4683 = vmatpush2.bf16.msra.mxu0 0
        %4684 = vmatprep.subr.bf16.mxu0 0
        %4685 = vmatpush2.bf16.msra.mxu0 0
        %4686 = vmatprep.subr.bf16.mxu0 0
        %4687 = vmatpush2.bf16.msra.mxu0 0
        %4688 = vmatprep.subr.bf16.mxu0 0
        %4689 = vmatpush2.bf16.msra.mxu0 0
        %4690 = vmatprep.subr.bf16.mxu0 0
        %4691 = vmatpush2.bf16.msra.mxu0 0
        %4692 = vmatprep.mubr.bf16.mxu0 0
        %4693 = vmatmul.mubr.bf16.gmra.mxu0 %v4613
        %v4694 = vpop.f32.mrf.mxu0
        %v4695 = vadd.f32 0.0, %v4694
        %v4696 = vpop.f32.mrf.mxu0
        %v4697 = vpop.f32.mrf.mxu0
        %v4698 = vadd.f32 0.0, %v4697
        %v4699 = vpop.f32.mrf.mxu0
        %4700 = vmatprep.mubr.bf16.mxu0 0
        %4701 = vmatmul.mubr.bf16.gmra.mxu0 %v4616
        %v4702 = vpop.f32.mrf.mxu0
        %v4703 = vadd.f32 0.0, %v4702
        %v4704 = vpop.f32.mrf.mxu0
        %v4705 = vpop.f32.mrf.mxu0
        %v4706 = vadd.f32 0.0, %v4705
        %v4707 = vpop.f32.mrf.mxu0
        %4708 = vmatprep.mubr.bf16.mxu0 0
        %4709 = vmatmul.mubr.bf16.gmra.mxu0 %v4619
        %v4710 = vpop.f32.mrf.mxu0
        %v4711 = vadd.f32 0.0, %v4710
        %v4712 = vpop.f32.mrf.mxu0
        %v4713 = vpop.f32.mrf.mxu0
        %v4714 = vadd.f32 0.0, %v4713
        %v4715 = vpop.f32.mrf.mxu0
        %4716 = vmatprep.mubr.bf16.mxu0 0
        %4717 = vmatmul.mubr.bf16.gmra.mxu0 %v4622
        %v4718 = vpop.f32.mrf.mxu0
        %v4719 = vadd.f32 0.0, %v4718
        %v4720 = vpop.f32.mrf.mxu0
        %v4721 = vpop.f32.mrf.mxu0
        %v4722 = vadd.f32 0.0, %v4721
        %v4723 = vpop.f32.mrf.mxu0
        %4724 = vmatprep.mubr.bf16.mxu0 0
        %4725 = vmatmul.mubr.bf16.gmra.mxu0 %v4625
        %v4726 = vpop.f32.mrf.mxu0
        %v4727 = vadd.f32 0.0, %v4726
        %v4728 = vpop.f32.mrf.mxu0
        %v4729 = vpop.f32.mrf.mxu0
        %v4730 = vadd.f32 0.0, %v4729
        %v4731 = vpop.f32.mrf.mxu0
        %4732 = vmatprep.mubr.bf16.mxu0 0
        %4733 = vmatmul.mubr.bf16.gmra.mxu0 %v4628
        %v4734 = vpop.f32.mrf.mxu0
        %v4735 = vadd.f32 0.0, %v4734
        %v4736 = vpop.f32.mrf.mxu0
        %v4737 = vpop.f32.mrf.mxu0
        %v4738 = vadd.f32 0.0, %v4737
        %v4739 = vpop.f32.mrf.mxu0
        %4740 = vmatprep.mubr.bf16.mxu0 0
        %4741 = vmatmul.mubr.bf16.gmra.mxu0 %v4631
        %v4742 = vpop.f32.mrf.mxu0
        %v4743 = vadd.f32 0.0, %v4742
        %v4744 = vpop.f32.mrf.mxu0
        %v4745 = vpop.f32.mrf.mxu0
        %v4746 = vadd.f32 0.0, %v4745
        %v4747 = vpop.f32.mrf.mxu0
        %4748 = vmatprep.mubr.bf16.mxu0 0
        %4749 = vmatmul.mubr.bf16.gmra.mxu0 %v4634
        %v4750 = vpop.f32.mrf.mxu0
        %v4751 = vadd.f32 0.0, %v4750
        %v4752 = vpop.f32.mrf.mxu0
        %v4753 = vpop.f32.mrf.mxu0
        %v4754 = vadd.f32 0.0, %v4753
        %v4755 = vpop.f32.mrf.mxu0
        %4756 = vmatprep.mubr.bf16.mxu0 0
        %4757 = vmatmul.mubr.bf16.gmra.mxu0 %v4637
        %v4758 = vpop.f32.mrf.mxu0
        %v4759 = vadd.f32 0.0, %v4758
        %v4760 = vpop.f32.mrf.mxu0
        %v4761 = vpop.f32.mrf.mxu0
        %v4762 = vadd.f32 0.0, %v4761
        %v4763 = vpop.f32.mrf.mxu0
        %4764 = vmatprep.mubr.bf16.mxu0 0
        %4765 = vmatmul.mubr.bf16.gmra.mxu0 %v4640
        %v4766 = vpop.f32.mrf.mxu0
        %v4767 = vadd.f32 0.0, %v4766
        %v4768 = vpop.f32.mrf.mxu0
        %v4769 = vpop.f32.mrf.mxu0
        %v4770 = vadd.f32 0.0, %v4769
        %v4771 = vpop.f32.mrf.mxu0
        %4772 = vmatprep.mubr.bf16.mxu0 0
        %4773 = vmatmul.mubr.bf16.gmra.mxu0 %v4643
        %v4774 = vpop.f32.mrf.mxu0
        %v4775 = vadd.f32 0.0, %v4774
        %v4776 = vpop.f32.mrf.mxu0
        %v4777 = vpop.f32.mrf.mxu0
        %v4778 = vadd.f32 0.0, %v4777
        %v4779 = vpop.f32.mrf.mxu0
        %4780 = vmatprep.mubr.bf16.mxu0 0
        %4781 = vmatmul.mubr.bf16.gmra.mxu0 %v4646
        %v4782 = vpop.f32.mrf.mxu0
        %v4783 = vadd.f32 0.0, %v4782
        %v4784 = vpop.f32.mrf.mxu0
        %v4785 = vpop.f32.mrf.mxu0
        %v4786 = vadd.f32 0.0, %v4785
        %v4787 = vpop.f32.mrf.mxu0
        %4788 = vmatprep.mubr.bf16.mxu0 0
        %4789 = vmatmul.mubr.bf16.gmra.mxu0 %v4649
        %v4790 = vpop.f32.mrf.mxu0
        %v4791 = vadd.f32 0.0, %v4790
        %v4792 = vpop.f32.mrf.mxu0
        %v4793 = vpop.f32.mrf.mxu0
        %v4794 = vadd.f32 0.0, %v4793
        %v4795 = vpop.f32.mrf.mxu0
        %4796 = vmatprep.mubr.bf16.mxu0 0
        %4797 = vmatmul.mubr.bf16.gmra.mxu0 %v4652
        %v4798 = vpop.f32.mrf.mxu0
        %v4799 = vadd.f32 0.0, %v4798
        %v4800 = vpop.f32.mrf.mxu0
        %v4801 = vpop.f32.mrf.mxu0
        %v4802 = vadd.f32 0.0, %v4801
        %v4803 = vpop.f32.mrf.mxu0
        %4804 = vmatprep.mubr.bf16.mxu0 0
        %4805 = vmatmul.mubr.bf16.gmra.mxu0 %v4655
        %v4806 = vpop.f32.mrf.mxu0
        %v4807 = vadd.f32 0.0, %v4806
        %v4808 = vpop.f32.mrf.mxu0
        %v4809 = vpop.f32.mrf.mxu0
        %v4810 = vadd.f32 0.0, %v4809
        %v4811 = vpop.f32.mrf.mxu0
        %4812 = vmatprep.mubr.bf16.mxu0 0
        %4813 = vmatmul.mubr.bf16.gmra.mxu0 %v4658
        %v4814 = vpop.f32.mrf.mxu0
        %v4815 = vadd.f32 0.0, %v4814
        %v4816 = vpop.f32.mrf.mxu0
        %v4817 = vpop.f32.mrf.mxu0
        %v4818 = vadd.f32 0.0, %v4817
        %v4819 = vpop.f32.mrf.mxu0
        %4820 = vdwg.mxu0
        %v4821 = vld [vmem:[%s16] sm:$0x1]
        %v4823 = vlaneseq
        %v4824 = vshrl.u32 %v4823, 7
        %v4825 = vsub.s32 0, %v4824
        %v4826 = vrot.slane %v4821, %v4825
        %v4828 = vmul.f32 %v4695, %v4826
        %v4829 = vmul.f32 %v4698, %v4826
        %v4830 = vmul.f32 %v4703, %v4826
        %v4831 = vmul.f32 %v4706, %v4826
        %v4832 = vmul.f32 %v4711, %v4826
        %v4833 = vmul.f32 %v4714, %v4826
        %v4834 = vmul.f32 %v4719, %v4826
        %v4835 = vmul.f32 %v4722, %v4826
        %v4836 = vmul.f32 %v4727, %v4826
        %v4837 = vmul.f32 %v4730, %v4826
        %v4838 = vmul.f32 %v4735, %v4826
        %v4839 = vmul.f32 %v4738, %v4826
        %v4840 = vmul.f32 %v4743, %v4826
        %v4841 = vmul.f32 %v4746, %v4826
        %v4842 = vmul.f32 %v4751, %v4826
        %v4843 = vmul.f32 %v4754, %v4826
        %v4844 = vmul.f32 %v4759, %v4826
        %v4845 = vmul.f32 %v4762, %v4826
        %v4846 = vmul.f32 %v4767, %v4826
        %v4847 = vmul.f32 %v4770, %v4826
        %v4848 = vmul.f32 %v4775, %v4826
        %v4849 = vmul.f32 %v4778, %v4826
        %v4850 = vmul.f32 %v4783, %v4826
        %v4851 = vmul.f32 %v4786, %v4826
        %v4852 = vmul.f32 %v4791, %v4826
        %v4853 = vmul.f32 %v4794, %v4826
        %v4854 = vmul.f32 %v4799, %v4826
        %v4855 = vmul.f32 %v4802, %v4826
        %v4856 = vmul.f32 %v4807, %v4826
        %v4857 = vmul.f32 %v4810, %v4826
        %v4858 = vmul.f32 %v4815, %v4826
        %v4859 = vmul.f32 %v4818, %v4826
        %v4860 = vld [vmem:[%s17] sm:$0x1]
        %v4862 = vlaneseq
        %v4863 = vshrl.u32 %v4862, 7
        %v4864 = vsub.s32 0, %v4863
        %v4865 = vrot.slane %v4860, %v4864
        %v4867 = vadd.f32 %v4828, %v4865
        %v4868 = vadd.f32 %v4829, %v4865
        %v4869 = vadd.f32 %v4830, %v4865
        %v4870 = vadd.f32 %v4831, %v4865
        %v4871 = vadd.f32 %v4832, %v4865
        %v4872 = vadd.f32 %v4833, %v4865
        %v4873 = vadd.f32 %v4834, %v4865
        %v4874 = vadd.f32 %v4835, %v4865
        %v4875 = vadd.f32 %v4836, %v4865
        %v4876 = vadd.f32 %v4837, %v4865
        %v4877 = vadd.f32 %v4838, %v4865
        %v4878 = vadd.f32 %v4839, %v4865
        %v4879 = vadd.f32 %v4840, %v4865
        %v4880 = vadd.f32 %v4841, %v4865
        %v4881 = vadd.f32 %v4842, %v4865
        %v4882 = vadd.f32 %v4843, %v4865
        %v4883 = vadd.f32 %v4844, %v4865
        %v4884 = vadd.f32 %v4845, %v4865
        %v4885 = vadd.f32 %v4846, %v4865
        %v4886 = vadd.f32 %v4847, %v4865
        %v4887 = vadd.f32 %v4848, %v4865
        %v4888 = vadd.f32 %v4849, %v4865
        %v4889 = vadd.f32 %v4850, %v4865
        %v4890 = vadd.f32 %v4851, %v4865
        %v4891 = vadd.f32 %v4852, %v4865
        %v4892 = vadd.f32 %v4853, %v4865
        %v4893 = vadd.f32 %v4854, %v4865
        %v4894 = vadd.f32 %v4855, %v4865
        %v4895 = vadd.f32 %v4856, %v4865
        %v4896 = vadd.f32 %v4857, %v4865
        %v4897 = vadd.f32 %v4858, %v4865
        %v4898 = vadd.f32 %v4859, %v4865
        %v4899 = vlaneseq
        %v4900 = vshrl.u32 %v4899, 7
        %v4901 = vsub.s32 0, %v4900
        %v4902 = vrot.slane %v4483, %v4901
        %v4903 = vmul.f32 %v4218, %v4902
        %v4904 = vmul.f32 %v4219, %v4902
        %v4905 = vmul.f32 %v4220, %v4902
        %v4906 = vmul.f32 %v4221, %v4902
        %v4907 = vmul.f32 %v4222, %v4902
        %v4908 = vmul.f32 %v4223, %v4902
        %v4909 = vmul.f32 %v4224, %v4902
        %v4910 = vmul.f32 %v4225, %v4902
        %v4911 = vmul.f32 %v4226, %v4902
        %v4912 = vmul.f32 %v4227, %v4902
        %v4913 = vmul.f32 %v4228, %v4902
        %v4914 = vmul.f32 %v4229, %v4902
        %v4915 = vmul.f32 %v4230, %v4902
        %v4916 = vmul.f32 %v4231, %v4902
        %v4917 = vmul.f32 %v4232, %v4902
        %v4918 = vmul.f32 %v4233, %v4902
        %v4919 = vmul.f32 %v4234, %v4902
        %v4920 = vmul.f32 %v4235, %v4902
        %v4921 = vmul.f32 %v4236, %v4902
        %v4922 = vmul.f32 %v4237, %v4902
        %v4923 = vmul.f32 %v4238, %v4902
        %v4924 = vmul.f32 %v4239, %v4902
        %v4925 = vmul.f32 %v4240, %v4902
        %v4926 = vmul.f32 %v4241, %v4902
        %v4927 = vmul.f32 %v4242, %v4902
        %v4928 = vmul.f32 %v4243, %v4902
        %v4929 = vmul.f32 %v4244, %v4902
        %v4930 = vmul.f32 %v4245, %v4902
        %v4931 = vmul.f32 %v4246, %v4902
        %v4932 = vmul.f32 %v4247, %v4902
        %v4933 = vmul.f32 %v4248, %v4902
        %v4934 = vmul.f32 %v4249, %v4902
        %v4935 = vadd.f32 %v4903, %v4867
        %v4936 = vadd.f32 %v4904, %v4868
        %v4937 = vadd.f32 %v4905, %v4869
        %v4938 = vadd.f32 %v4906, %v4870
        %v4939 = vadd.f32 %v4907, %v4871
        %v4940 = vadd.f32 %v4908, %v4872
        %v4941 = vadd.f32 %v4909, %v4873
        %v4942 = vadd.f32 %v4910, %v4874
        %v4943 = vadd.f32 %v4911, %v4875
        %v4944 = vadd.f32 %v4912, %v4876
        %v4945 = vadd.f32 %v4913, %v4877
        %v4946 = vadd.f32 %v4914, %v4878
        %v4947 = vadd.f32 %v4915, %v4879
        %v4948 = vadd.f32 %v4916, %v4880
        %v4949 = vadd.f32 %v4917, %v4881
        %v4950 = vadd.f32 %v4918, %v4882
        %v4951 = vadd.f32 %v4919, %v4883
        %v4952 = vadd.f32 %v4920, %v4884
        %v4953 = vadd.f32 %v4921, %v4885
        %v4954 = vadd.f32 %v4922, %v4886
        %v4955 = vadd.f32 %v4923, %v4887
        %v4956 = vadd.f32 %v4924, %v4888
        %v4957 = vadd.f32 %v4925, %v4889
        %v4958 = vadd.f32 %v4926, %v4890
        %v4959 = vadd.f32 %v4927, %v4891
        %v4960 = vadd.f32 %v4928, %v4892
        %v4961 = vadd.f32 %v4929, %v4893
        %v4962 = vadd.f32 %v4930, %v4894
        %v4963 = vadd.f32 %v4931, %v4895
        %v4964 = vadd.f32 %v4932, %v4896
        %v4965 = vadd.f32 %v4933, %v4897
        %v4966 = vadd.f32 %v4934, %v4898
        %v4967 = vmax.f32 %v4935, 0.0
        %v4968 = vmax.f32 %v4936, 0.0
        %v4969 = vmax.f32 %v4937, 0.0
        %v4970 = vmax.f32 %v4938, 0.0
        %v4971 = vmax.f32 %v4939, 0.0
        %v4972 = vmax.f32 %v4940, 0.0
        %v4973 = vmax.f32 %v4941, 0.0
        %v4974 = vmax.f32 %v4942, 0.0
        %v4975 = vmax.f32 %v4943, 0.0
        %v4976 = vmax.f32 %v4944, 0.0
        %v4977 = vmax.f32 %v4945, 0.0
        %v4978 = vmax.f32 %v4946, 0.0
        %v4979 = vmax.f32 %v4947, 0.0
        %v4980 = vmax.f32 %v4948, 0.0
        %v4981 = vmax.f32 %v4949, 0.0
        %v4982 = vmax.f32 %v4950, 0.0
        %v4983 = vmax.f32 %v4951, 0.0
        %v4984 = vmax.f32 %v4952, 0.0
        %v4985 = vmax.f32 %v4953, 0.0
        %v4986 = vmax.f32 %v4954, 0.0
        %v4987 = vmax.f32 %v4955, 0.0
        %v4988 = vmax.f32 %v4956, 0.0
        %v4989 = vmax.f32 %v4957, 0.0
        %v4990 = vmax.f32 %v4958, 0.0
        %v4991 = vmax.f32 %v4959, 0.0
        %v4992 = vmax.f32 %v4960, 0.0
        %v4993 = vmax.f32 %v4961, 0.0
        %v4994 = vmax.f32 %v4962, 0.0
        %v4995 = vmax.f32 %v4963, 0.0
        %v4996 = vmax.f32 %v4964, 0.0
        %v4997 = vmax.f32 %v4965, 0.0
        %v4998 = vmax.f32 %v4966, 0.0
        %4999 = vst [vmem:[%s583] sm:$0xff] %v4967
        %5000 = vst [vmem:[%s583 + $0x8] sm:$0xff] %v4968
        %5001 = vst [vmem:[%s583 + $0x10] sm:$0xff] %v4969
        %5002 = vst [vmem:[%s583 + $0x18] sm:$0xff] %v4970
        %5003 = vst [vmem:[%s583 + $0x20] sm:$0xff] %v4971
        %5004 = vst [vmem:[%s583 + $0x28] sm:$0xff] %v4972
        %5005 = vst [vmem:[%s583 + $0x30] sm:$0xff] %v4973
        %5006 = vst [vmem:[%s583 + $0x38] sm:$0xff] %v4974
        %5007 = vst [vmem:[%s583 + $0x40] sm:$0xff] %v4975
        %5008 = vst [vmem:[%s583 + $0x48] sm:$0xff] %v4976
        %5009 = vst [vmem:[%s583 + $0x50] sm:$0xff] %v4977
        %5010 = vst [vmem:[%s583 + $0x58] sm:$0xff] %v4978
        %5011 = vst [vmem:[%s583 + $0x60] sm:$0xff] %v4979
        %5012 = vst [vmem:[%s583 + $0x68] sm:$0xff] %v4980
        %5013 = vst [vmem:[%s583 + $0x70] sm:$0xff] %v4981
        %5014 = vst [vmem:[%s583 + $0x78] sm:$0xff] %v4982
        %5015 = vst [vmem:[%s583 + $0x80] sm:$0xff] %v4983
        %5016 = vst [vmem:[%s583 + $0x88] sm:$0xff] %v4984
        %5017 = vst [vmem:[%s583 + $0x90] sm:$0xff] %v4985
        %5018 = vst [vmem:[%s583 + $0x98] sm:$0xff] %v4986
        %5019 = vst [vmem:[%s583 + $0xa0] sm:$0xff] %v4987
        %5020 = vst [vmem:[%s583 + $0xa8] sm:$0xff] %v4988
        %5021 = vst [vmem:[%s583 + $0xb0] sm:$0xff] %v4989
        %5022 = vst [vmem:[%s583 + $0xb8] sm:$0xff] %v4990
        %5023 = vst [vmem:[%s583 + $0xc0] sm:$0xff] %v4991
        %5024 = vst [vmem:[%s583 + $0xc8] sm:$0xff] %v4992
        %5025 = vst [vmem:[%s583 + $0xd0] sm:$0xff] %v4993
        %5026 = vst [vmem:[%s583 + $0xd8] sm:$0xff] %v4994
        %5027 = vst [vmem:[%s583 + $0xe0] sm:$0xff] %v4995
        %5028 = vst [vmem:[%s583 + $0xe8] sm:$0xff] %v4996
        %5029 = vst [vmem:[%s583 + $0xf0] sm:$0xff] %v4997
        %5030 = vst [vmem:[%s583 + $0xf8] sm:$0xff] %v4998
        %s5031 = sand.u32 %s428, 1
        %s5032 = scalar_lea.sflag [#allocation4], %s5031
        %s5033 = sand.u32 %s428, 1
        %s5034 = smul.addr %s5033, 256
        %s5035 = scalar_lea.vmem [#allocation3], %s5034
        // Predicated region
        $region93: #{tpu_custom_call.1} parent=91 // pred_check
          %p5036 = pneg %p438
        $region94: #{tpu_custom_call.1} parent=91 // pred_check_branch
          %5038 = sbr.rel (%p5036) target = $region96
        $region95: #{tpu_custom_call.1} parent=91 // pred_region
          %s5040 = ssub.s32 4096, 4096
          %5041 = vsyncadd %s5032, %s5040
          %s5042 = smul.addr %s32, 32
          %s5043 = smul.addr %s5042, 128
          %s5044 = scalar_lea.hbm %s18, %s5043
          %s5045 = sshll.u32 %s5035, 4
          %s5046 = int_to_ptr.vmem [resolvable:$true] %s5045
          %5051 = dma.vmem_to_hbm [thread:$0]  %s5046, 4096, %s5044, %s5032, 128, 128, 8
        $region96: #{tpu_custom_call.1} parent=91 // pred_fallthru
          _
      $region92: #{tpu_custom_call.1} parent=5 // pred_fallthru
        _
      %p5052 = scmp.le.s32.totalorder 2, %s27
      // Predicated region
      $region97: #{tpu_custom_call.1} parent=5 // pred_check
        %p5053 = pneg %p5052
      $region98: #{tpu_custom_call.1} parent=5 // pred_check_branch
        %5055 = sbr.rel (%p5053) target = $region100
      $region99: #{tpu_custom_call.1} parent=5 // pred_region
        %s5056 = ssub.s32 %s27, 2
        // Predicated region
        $region101: #{tpu_custom_call.1} parent=99 // pred_check
          %p5057 = pneg %p444
        $region102: #{tpu_custom_call.1} parent=99 // pred_check_branch
          %5059 = sbr.rel (%p5057) target = $region104
        $region103: #{tpu_custom_call.1} parent=99 // pred_region
          %s5060 = sand.u32 %s429, 1
          %s5061 = scalar_lea.sflag [#allocation4], %s5060
          %s5062 = sand.u32 %s429, 1
          %s5063 = smul.addr %s5062, 256
          %s5064 = scalar_lea.vmem [#allocation3], %s5063
          %5065 = dma.done %s5061, 4096
        $region104: #{tpu_custom_call.1} parent=99 // pred_fallthru
          _
      $region100: #{tpu_custom_call.1} parent=5 // pred_fallthru
        _
    $region6: #{tpu_custom_call.1} parent=1 // loop_footer
      %s31 = sadd.s32 1, %s27
    $region7: #{tpu_custom_call.1} parent=1 // loop_footer_branch
      %26 = sbr.rel target = $region3
    $region8: #{tpu_custom_call.1} parent=1 // loop_exit
      _
    %5066 = vsyncpa [#allocation4], 1
    %s5067 = scalar_lea.sflag [#allocation4], 1
    %5068 = vsyncpa %s5067, 1

</llo_original>
